<compile_context>
chip_gen: v5e
topology: v5e:2x2
jax: 0.10.0
libtpu: 0.0.40
codegen_flags: <defaults>
</compile_context>

<pallas_src>
import functools

import jax
import jax.numpy as jnp
from jax import lax
from jax.experimental import pallas as pl
from jax.experimental.pallas import tpu as pltpu

EPS = 1e-3


def _bn_kernel(x_ref, gamma_ref, beta_ref, o_ref, *, eps, inv_count):
    # x_ref: (N, C_TILE, HW) fp32; gamma_ref/beta_ref: (1, C_TILE, 1)
    x = x_ref[...]

    # One-pass statistics: sum(x) and sum(x*x) per channel (reduce N and HW).
    s1 = jnp.sum(jnp.sum(x, axis=2, keepdims=True), axis=0, keepdims=True)
    s2 = jnp.sum(jnp.sum(x * x, axis=2, keepdims=True), axis=0, keepdims=True)

    mean = s1 * inv_count                                   # (1, C_TILE, 1)
    var = jnp.maximum(s2 * inv_count - mean * mean, 0.0)    # guard cancellation
    inv_std = lax.rsqrt(var + eps)

    # Fold affine into per-channel scale/shift -> 2 VPU ops/element.
    scale = inv_std * gamma_ref[...]
    shift = beta_ref[...] - mean * scale

    # Re-read x from VMEM (cheap) instead of keeping a centered tile live.
    o_ref[...] = x_ref[...] * scale + shift


def batchnorm2d_pallas(x_nchw, gamma, beta, *, eps=EPS):
    """Training-mode BatchNorm2d forward. x_nchw: (N, C, H, W) float32."""
    n, c, h, w = x_nchw.shape
    hw = h * w

    # Free reshapes only -- no transposes, layout stays NCHW-compatible.
    x3 = x_nchw.reshape(n, c, hw)
    gamma3 = gamma.reshape(1, c, 1)
    beta3 = beta.reshape(1, c, 1)

    # Two channel tiles (megacore-friendly on v7x) when the split keeps the
    # sublane dim a multiple of 8; otherwise a single full-channel tile.
    num_tiles = 2 if (c % 2 == 0 and (c // 2) % 8 == 0) else 1
    c_tile = c // num_tiles

    out3 = pl.pallas_call(
        functools.partial(_bn_kernel, eps=eps, inv_count=1.0 / (n * hw)),
        out_shape=jax.ShapeDtypeStruct((n, c, hw), x3.dtype),
        grid_spec=pltpu.PrefetchScalarGridSpec(
            num_scalar_prefetch=0,
            grid=(num_tiles,),
            in_specs=[
                pl.BlockSpec((n, c_tile, hw), lambda j: (0, j, 0)),
                pl.BlockSpec((1, c_tile, 1), lambda j: (0, j, 0)),
                pl.BlockSpec((1, c_tile, 1), lambda j: (0, j, 0)),
            ],
            out_specs=pl.BlockSpec((n, c_tile, hw), lambda j: (0, j, 0)),
        ),
        compiler_params=pltpu.CompilerParams(
            dimension_semantics=("parallel",),
        ),
    )(x3, gamma3, beta3)

    return out3.reshape(n, c, h, w)


def batchnorm2d_ref(x_nchw, gamma, beta, eps=EPS):
    mean = jnp.mean(x_nchw, axis=(0, 2, 3), keepdims=True)
    var = jnp.mean((x_nchw - mean) ** 2, axis=(0, 2, 3), keepdims=True)
    g = gamma.reshape(1, -1, 1, 1)
    b = beta.reshape(1, -1, 1, 1)
    return (x_nchw - mean) * lax.rsqrt(var + eps) * g + b


if __name__ == "__main__":
    key = jax.random.PRNGKey(0)
    kx, kg, kb = jax.random.split(key, 3)

    N, C, H, W = 1, 2304, 7, 7  # matches BatchNorm2d(2304) on x703
    x = jax.random.normal(kx, (N, C, H, W), dtype=jnp.float32)
    # deterministic synthetic affine params (PyTorch default is ones/zeros,
    # but nontrivial values exercise the affine path)
    gamma = 1.0 + 0.1 * jax.random.normal(kg, (C,), dtype=jnp.float32)
    beta = 0.1 * jax.random.normal(kb, (C,), dtype=jnp.float32)

    out = jax.block_until_ready(batchnorm2d_pallas(x, gamma, beta))

    ref = batchnorm2d_ref(x, gamma, beta)
    assert out.shape == (N, C, H, W)
    assert jnp.allclose(out, ref, atol=1e-4, rtol=1e-4)

    print("KERNEL_OK")
</pallas_src>

<mosaic_0001>
module attributes {stable_mosaic.version = 11 : i64} {
  func.func @_bn_kernel(%arg0: i32, %arg1: memref<1x1152x49xf32, #tpu.memory_space<vmem>>, %arg2: memref<1x1152x1xf32, #tpu.memory_space<vmem>>, %arg3: memref<1x1152x1xf32, #tpu.memory_space<vmem>>, %arg4: memref<1x1152x49xf32, #tpu.memory_space<vmem>>) attributes {dimension_semantics = [#tpu.dimension_semantics<parallel>], iteration_bounds = array<i64: 2>, scalar_prefetch = 0 : i64, scratch_operands = 0 : i64, tpu.core_type = #tpu.core_type<tc>, window_params = [{transform_indices = @transform_0, window_bounds = array<i64: 1, 1152, 49>}, {transform_indices = @transform_1, window_bounds = array<i64: 1, 1152, 1>}, {transform_indices = @transform_2, window_bounds = array<i64: 1, 1152, 1>}, {transform_indices = @transform_3, window_bounds = array<i64: 1, 1152, 49>}]} {
    %c0 = arith.constant 0 : index
    %c0_0 = arith.constant 0 : index
    %c0_1 = arith.constant 0 : index
    %0 = vector.load %arg1[%c0, %c0_0, %c0_1] : memref<1x1152x49xf32, #tpu.memory_space<vmem>>, vector<1x1152x49xf32>
    %cst = arith.constant dense<0.000000e+00> : vector<1x1152xf32>
    %1 = vector.multi_reduction <add>, %0, %cst [2] : vector<1x1152x49xf32> to vector<1x1152xf32>
    %2 = vector.shape_cast %1 : vector<1x1152xf32> to vector<1x1152x1xf32>
    %cst_2 = arith.constant dense<0.000000e+00> : vector<1152x1xf32>
    %3 = vector.multi_reduction <add>, %2, %cst_2 [0] : vector<1x1152x1xf32> to vector<1152x1xf32>
    %4 = vector.shape_cast %3 : vector<1152x1xf32> to vector<1x1152x1xf32>
    %5 = arith.mulf %0, %0 : vector<1x1152x49xf32>
    %cst_3 = arith.constant dense<0.000000e+00> : vector<1x1152xf32>
    %6 = vector.multi_reduction <add>, %5, %cst_3 [2] : vector<1x1152x49xf32> to vector<1x1152xf32>
    %7 = vector.shape_cast %6 : vector<1x1152xf32> to vector<1x1152x1xf32>
    %cst_4 = arith.constant dense<0.000000e+00> : vector<1152x1xf32>
    %8 = vector.multi_reduction <add>, %7, %cst_4 [0] : vector<1x1152x1xf32> to vector<1152x1xf32>
    %9 = vector.shape_cast %8 : vector<1152x1xf32> to vector<1x1152x1xf32>
    %cst_5 = arith.constant 0.0204081628 : f32
    %10 = vector.broadcast %cst_5 : f32 to vector<1x1152x1xf32>
    %11 = arith.mulf %4, %10 : vector<1x1152x1xf32>
    %cst_6 = arith.constant 0.0204081628 : f32
    %12 = vector.broadcast %cst_6 : f32 to vector<1x1152x1xf32>
    %13 = arith.mulf %9, %12 : vector<1x1152x1xf32>
    %14 = arith.mulf %11, %11 : vector<1x1152x1xf32>
    %15 = arith.subf %13, %14 : vector<1x1152x1xf32>
    %cst_7 = arith.constant 0.000000e+00 : f32
    %16 = vector.broadcast %cst_7 : f32 to vector<1x1152x1xf32>
    %17 = arith.maximumf %15, %16 : vector<1x1152x1xf32>
    %cst_8 = arith.constant 1.000000e-03 : f32
    %18 = vector.broadcast %cst_8 : f32 to vector<1x1152x1xf32>
    %19 = arith.addf %17, %18 : vector<1x1152x1xf32>
    %20 = math.rsqrt %19 : vector<1x1152x1xf32>
    %c0_9 = arith.constant 0 : index
    %c0_10 = arith.constant 0 : index
    %c0_11 = arith.constant 0 : index
    %21 = vector.load %arg2[%c0_9, %c0_10, %c0_11] : memref<1x1152x1xf32, #tpu.memory_space<vmem>>, vector<1x1152x1xf32>
    %22 = arith.mulf %20, %21 : vector<1x1152x1xf32>
    %c0_12 = arith.constant 0 : index
    %c0_13 = arith.constant 0 : index
    %c0_14 = arith.constant 0 : index
    %23 = vector.load %arg3[%c0_12, %c0_13, %c0_14] : memref<1x1152x1xf32, #tpu.memory_space<vmem>>, vector<1x1152x1xf32>
    %24 = arith.mulf %11, %22 : vector<1x1152x1xf32>
    %25 = arith.subf %23, %24 : vector<1x1152x1xf32>
    %c0_15 = arith.constant 0 : index
    %c0_16 = arith.constant 0 : index
    %c0_17 = arith.constant 0 : index
    %26 = vector.load %arg1[%c0_15, %c0_16, %c0_17] : memref<1x1152x49xf32, #tpu.memory_space<vmem>>, vector<1x1152x49xf32>
    %27 = vector.broadcast %22 : vector<1x1152x1xf32> to vector<1x1152x49xf32>
    %28 = arith.mulf %26, %27 : vector<1x1152x49xf32>
    %29 = vector.broadcast %25 : vector<1x1152x1xf32> to vector<1x1152x49xf32>
    %30 = arith.addf %28, %29 : vector<1x1152x49xf32>
    %c0_18 = arith.constant 0 : index
    %c0_19 = arith.constant 0 : index
    %c0_20 = arith.constant 0 : index
    %31 = vector.load %arg4[%c0_18, %c0_19, %c0_20] : memref<1x1152x49xf32, #tpu.memory_space<vmem>>, vector<1x1152x49xf32>
    tpu.vector_store %arg4[%c0_18, %c0_19, %c0_20], %30 {strides = array<i32>} : memref<1x1152x49xf32, #tpu.memory_space<vmem>>, vector<1x1152x49xf32>,
    return
  }
  func.func @transform_0(%arg0: i32) -> (i32, i32, i32) {
    %c0_i32 = arith.constant 0 : i32
    %c0_i32_0 = arith.constant 0 : i32
    %c0_i32_1 = arith.constant 0 : i32
    return %c0_i32, %arg0, %c0_i32_0 : i32, i32, i32
  }
  func.func @transform_1(%arg0: i32) -> (i32, i32, i32) {
    %c0_i32 = arith.constant 0 : i32
    %c0_i32_0 = arith.constant 0 : i32
    %c0_i32_1 = arith.constant 0 : i32
    return %c0_i32, %arg0, %c0_i32_0 : i32, i32, i32
  }
  func.func @transform_2(%arg0: i32) -> (i32, i32, i32) {
    %c0_i32 = arith.constant 0 : i32
    %c0_i32_0 = arith.constant 0 : i32
    %c0_i32_1 = arith.constant 0 : i32
    return %c0_i32, %arg0, %c0_i32_0 : i32, i32, i32
  }
  func.func @transform_3(%arg0: i32) -> (i32, i32, i32) {
    %c0_i32 = arith.constant 0 : i32
    %c0_i32_0 = arith.constant 0 : i32
    %c0_i32_1 = arith.constant 0 : i32
    return %c0_i32, %arg0, %c0_i32_0 : i32, i32, i32
  }
}

</mosaic_0001>

<llo_original>
// kernel: tpu_custom_call.1
$region0: #{tpu_custom_call.1}
  #allocation0 [shape = 'u32[]', space=smem, size = 0x4, offset = 0x4, fixed_abs, tag = 'smem constant byte address 0x4 - core index']
  #allocation1 [shape = 'u32[72,128]{1,0:T(1,128)}', space=vmem, size = 0x9000, scoped, tag = 'internal scratch']
  %s0 = inlined_call_operand.vmem [shape: f32[1,2304,49], index: 0, kind: input, shape index: {}]
  %s1 = inlined_call_operand.vmem [shape: f32[1,2304,1], index: 1, kind: input, shape index: {}]
  %s2 = inlined_call_operand.vmem [shape: f32[1,2304,1], index: 2, kind: input, shape index: {}]
  %s3 = inlined_call_operand.vmem [shape: f32[1,2304,49], index: 3, kind: output, shape index: {}]
  %s4 = sld [smem:[#allocation0]]
  $region45: #{tpu_custom_call.1} parent=0
    _
  %s6 = ssub.s32 1, %s4
  %s7 = scalar_select 0, %s6, %s4
  loop: start=0, step=1, limit=4
  $region2: #{tpu_custom_call.1} parent=0 // loop_pre_header
    _
  $region3: #{tpu_custom_call.1} parent=0 // loop_header
    %s9 = sphi 0, %s13
    %p10 = scmp.ge.s32.totalorder %s9, 4
    %s19 = sphi 0, %s21
    %s22 = sphi 0, %s19
    %s23 = sphi 0, %s22
    %s39 = sphi 0, %s23
    %s45 = sphi 0, %s47
    %s48 = sphi 0, %s45
    %s49 = sphi 0, %s48
    %s65 = sphi 0, %s49
    %s71 = sphi 0, %s73
    %s74 = sphi 0, %s71
    %s75 = sphi 0, %s74
    %s91 = sphi 0, %s75
    %s97 = sphi 0, %s99
    %s100 = sphi 0, %s97
    %s101 = sphi 0, %s100
    %s117 = sphi 0, %s101
  $region4: #{tpu_custom_call.1} parent=0 // loop_header_branch
    %12 = sbr.rel (%p10) target = $region8
  $region5: #{tpu_custom_call.1} parent=0 // loop_body
    %s14 = ssub.s32 %s9, 1
    %s15 = ssub.s32 %s9, 2
    %s16 = sadd.s32 %s9, 1
    %s17 = ssub.s32 %s9, %s16
    %p18 = scmp.eq.s32.totalorder %s17, 0
    %s20 = sadd.s32 %s19, 1
    %s21 = scalar_select %p18, %s19, %s20
    %p24 = pneg %p18
    %p25 = scmp.eq.s32.totalorder %s9, 1
    %p26 = por %p24, %p25
    %p27 = scmp.ne.s32.totalorder %s19, %s22
    %p28 = scmp.eq.s32.totalorder %s9, 0
    %p29 = por %p27, %p28
    %p30 = scmp.ne.s32.totalorder %s19, %s22
    %p31 = scmp.eq.s32.totalorder %s14, 1
    %p32 = por %p30, %p31
    %p33 = scmp.ne.s32.totalorder %s22, %s23
    %p34 = scmp.eq.s32.totalorder %s14, 0
    %p35 = por %p33, %p34
    %p36 = scmp.ne.s32.totalorder %s22, %s23
    %p37 = scmp.eq.s32.totalorder %s15, 1
    %p38 = por %p36, %p37
    %p40 = scmp.ne.s32.totalorder %s23, %s39
    %p41 = scmp.eq.s32.totalorder %s15, 0
    %p42 = por %p40, %p41
    %s43 = ssub.s32 %s9, %s16
    %p44 = scmp.eq.s32.totalorder %s43, 0
    %s46 = sadd.s32 %s45, 1
    %s47 = scalar_select %p44, %s45, %s46
    %p50 = pneg %p44
    %p51 = scmp.eq.s32.totalorder %s9, 1
    %p52 = por %p50, %p51
    %p53 = scmp.ne.s32.totalorder %s45, %s48
    %p54 = scmp.eq.s32.totalorder %s9, 0
    %p55 = por %p53, %p54
    %p56 = scmp.ne.s32.totalorder %s45, %s48
    %p57 = scmp.eq.s32.totalorder %s14, 1
    %p58 = por %p56, %p57
    %p59 = scmp.ne.s32.totalorder %s48, %s49
    %p60 = scmp.eq.s32.totalorder %s14, 0
    %p61 = por %p59, %p60
    %p62 = scmp.ne.s32.totalorder %s48, %s49
    %p63 = scmp.eq.s32.totalorder %s15, 1
    %p64 = por %p62, %p63
    %p66 = scmp.ne.s32.totalorder %s49, %s65
    %p67 = scmp.eq.s32.totalorder %s15, 0
    %p68 = por %p66, %p67
    %s69 = ssub.s32 %s9, %s16
    %p70 = scmp.eq.s32.totalorder %s69, 0
    %s72 = sadd.s32 %s71, 1
    %s73 = scalar_select %p70, %s71, %s72
    %p76 = pneg %p70
    %p77 = scmp.eq.s32.totalorder %s9, 1
    %p78 = por %p76, %p77
    %p79 = scmp.ne.s32.totalorder %s71, %s74
    %p80 = scmp.eq.s32.totalorder %s9, 0
    %p81 = por %p79, %p80
    %p82 = scmp.ne.s32.totalorder %s71, %s74
    %p83 = scmp.eq.s32.totalorder %s14, 1
    %p84 = por %p82, %p83
    %p85 = scmp.ne.s32.totalorder %s74, %s75
    %p86 = scmp.eq.s32.totalorder %s14, 0
    %p87 = por %p85, %p86
    %p88 = scmp.ne.s32.totalorder %s74, %s75
    %p89 = scmp.eq.s32.totalorder %s15, 1
    %p90 = por %p88, %p89
    %p92 = scmp.ne.s32.totalorder %s75, %s91
    %p93 = scmp.eq.s32.totalorder %s15, 0
    %p94 = por %p92, %p93
    %s95 = ssub.s32 %s9, %s16
    %p96 = scmp.eq.s32.totalorder %s95, 0
    %s98 = sadd.s32 %s97, 1
    %s99 = scalar_select %p96, %s97, %s98
    %p102 = pneg %p96
    %p103 = scmp.eq.s32.totalorder %s9, 1
    %p104 = por %p102, %p103
    %p105 = scmp.ne.s32.totalorder %s97, %s100
    %p106 = scmp.eq.s32.totalorder %s9, 0
    %p107 = por %p105, %p106
    %p108 = scmp.ne.s32.totalorder %s97, %s100
    %p109 = scmp.eq.s32.totalorder %s14, 1
    %p110 = por %p108, %p109
    %p111 = scmp.ne.s32.totalorder %s100, %s101
    %p112 = scmp.eq.s32.totalorder %s14, 0
    %p113 = por %p111, %p112
    %p114 = scmp.ne.s32.totalorder %s100, %s101
    %p115 = scmp.eq.s32.totalorder %s15, 1
    %p116 = por %p114, %p115
    %p118 = scmp.ne.s32.totalorder %s101, %s117
    %p119 = scmp.eq.s32.totalorder %s15, 0
    %p120 = por %p118, %p119
    %p121 = scmp.le.s32.totalorder 1, %s9
    %p122 = scmp.lt.s32.totalorder %s9, 3
    %p123 = pnand %p121, %p122
    %p124 = pneg %p123
    // Predicated region
    $region9: #{tpu_custom_call.1} parent=5 // pred_check
      _
    $region10: #{tpu_custom_call.1} parent=5 // pred_check_branch
      %126 = sbr.rel (%p123) target = $region12
    $region11: #{tpu_custom_call.1} parent=5 // pred_region
      %s127 = ssub.s32 %s9, 1
    $region12: #{tpu_custom_call.1} parent=5 // pred_fallthru
      _
    %p128 = scmp.lt.s32.totalorder %s9, 2
    // Predicated region
    $region13: #{tpu_custom_call.1} parent=5 // pred_check
      %p129 = pneg %p128
    $region14: #{tpu_custom_call.1} parent=5 // pred_check_branch
      %131 = sbr.rel (%p129) target = $region16
    $region15: #{tpu_custom_call.1} parent=5 // pred_region
      // Predicated region
      $region17: #{tpu_custom_call.1} parent=15 // pred_check
        %p132 = pneg %p29
      $region18: #{tpu_custom_call.1} parent=15 // pred_check_branch
        %134 = sbr.rel (%p132) target = $region20
      $region19: #{tpu_custom_call.1} parent=15 // pred_region
        %s135 = smul.u32 144, %s9
        %p136 = scmp.lt.s32.totalorder %s135, 287
        %s137 = scalar_select %p136, %s135, 287
        %s138 = smul.addr %s137, 8
        %s139 = scalar_lea.vmem %s0, %s138
        %s140 = smul.u32 144, %s9
      $region20: #{tpu_custom_call.1} parent=15 // pred_fallthru
        _
      // Predicated region
      $region21: #{tpu_custom_call.1} parent=15 // pred_check
        %p141 = pneg %p55
      $region22: #{tpu_custom_call.1} parent=15 // pred_check_branch
        %143 = sbr.rel (%p141) target = $region24
      $region23: #{tpu_custom_call.1} parent=15 // pred_region
        %s144 = smul.u32 144, %s9
        %p145 = scmp.lt.s32.totalorder %s144, 287
        %s146 = scalar_select %p145, %s144, 287
        %s147 = smul.addr %s146, 8
        %s148 = scalar_lea.vmem %s1, %s147
        %s149 = smul.u32 144, %s9
      $region24: #{tpu_custom_call.1} parent=15 // pred_fallthru
        _
      // Predicated region
      $region25: #{tpu_custom_call.1} parent=15 // pred_check
        %p150 = pneg %p81
      $region26: #{tpu_custom_call.1} parent=15 // pred_check_branch
        %152 = sbr.rel (%p150) target = $region28
      $region27: #{tpu_custom_call.1} parent=15 // pred_region
        %s153 = smul.u32 144, %s9
        %p154 = scmp.lt.s32.totalorder %s153, 287
        %s155 = scalar_select %p154, %s153, 287
        %s156 = smul.addr %s155, 8
        %s157 = scalar_lea.vmem %s2, %s156
        %s158 = smul.u32 144, %s9
      $region28: #{tpu_custom_call.1} parent=15 // pred_fallthru
        _
    $region16: #{tpu_custom_call.1} parent=5 // pred_fallthru
      _
    %p159 = scmp.le.s32.totalorder 1, %s9
    %p160 = scmp.lt.s32.totalorder %s9, 3
    %p161 = pnand %p159, %p160
    %p162 = pneg %p161
    // Predicated region
    $region29: #{tpu_custom_call.1} parent=5 // pred_check
      _
    $region30: #{tpu_custom_call.1} parent=5 // pred_check_branch
      %164 = sbr.rel (%p161) target = $region32
    $region31: #{tpu_custom_call.1} parent=5 // pred_region
      %s165 = ssub.s32 %s9, 1
      %s166 = smul.u32 144, %s14
      %p167 = scmp.lt.s32.totalorder %s166, 287
      %s168 = scalar_select %p167, %s166, 287
      %s169 = smul.addr %s168, 8
      %s170 = scalar_lea.vmem %s0, %s169
      %p171 = pneg %p35
      %p172 = pneg %p32
      %s173 = smul.u32 144, %s14
      %p174 = scmp.lt.s32.totalorder %s173, 287
      %s175 = scalar_select %p174, %s173, 287
      %s176 = smul.addr %s175, 8
      %s177 = scalar_lea.vmem %s1, %s176
      %p178 = pneg %p61
      %p179 = pneg %p58
      %s180 = smul.u32 144, %s14
      %p181 = scmp.lt.s32.totalorder %s180, 287
      %s182 = scalar_select %p181, %s180, 287
      %s183 = smul.addr %s182, 8
      %s184 = scalar_lea.vmem %s2, %s183
      %p185 = pneg %p87
      %p186 = pneg %p84
      %p187 = pneg %p113
      %p188 = pneg %p110
      %s189 = smul.u32 144, %s14
      %p190 = scmp.lt.s32.totalorder %s189, 287
      %s191 = scalar_select %p190, %s189, 287
      %s192 = smul.addr %s191, 8
      %s193 = scalar_lea.vmem %s3, %s192
      %s194 = smul.u32 144, %s14
      %p195 = scmp.lt.s32.totalorder %s194, 287
      %s196 = scalar_select %p195, %s194, 287
      %s197 = smul.addr %s196, 8
      %s198 = scalar_lea.vmem %s0, %s197
      %s199 = smul.u32 144, %s14
      %s200 = smul.u32 144, %s14
      %p201 = scmp.lt.s32.totalorder %s200, 287
      %s202 = scalar_select %p201, %s200, 287
      %s203 = smul.addr %s202, 8
      %s204 = scalar_lea.vmem %s1, %s203
      %s205 = smul.u32 144, %s14
      %s206 = smul.u32 144, %s14
      %p207 = scmp.lt.s32.totalorder %s206, 287
      %s208 = scalar_select %p207, %s206, 287
      %s209 = smul.addr %s208, 8
      %s210 = scalar_lea.vmem %s2, %s209
      %s211 = smul.u32 144, %s14
      %s212 = smul.u32 144, %s14
      %p213 = scmp.lt.s32.totalorder %s212, 287
      %s214 = scalar_select %p213, %s212, 287
      %s215 = smul.addr %s214, 8
      %s216 = scalar_lea.vmem %s3, %s215
      %s217 = smul.u32 144, %s14
      %v218 = vld [vmem:[%s198] sm:$0xff]
      %v219 = vld [vmem:[%s198 + $0x8] sm:$0xff]
      %v220 = vld [vmem:[%s198 + $0x10] sm:$0xff]
      %v221 = vld [vmem:[%s198 + $0x18] sm:$0xff]
      %v222 = vld [vmem:[%s198 + $0x20] sm:$0xff]
      %v223 = vld [vmem:[%s198 + $0x28] sm:$0xff]
      %v224 = vld [vmem:[%s198 + $0x30] sm:$0xff]
      %v225 = vld [vmem:[%s198 + $0x38] sm:$0xff]
      %v226 = vld [vmem:[%s198 + $0x40] sm:$0xff]
      %v227 = vld [vmem:[%s198 + $0x48] sm:$0xff]
      %v228 = vld [vmem:[%s198 + $0x50] sm:$0xff]
      %v229 = vld [vmem:[%s198 + $0x58] sm:$0xff]
      %v230 = vld [vmem:[%s198 + $0x60] sm:$0xff]
      %v231 = vld [vmem:[%s198 + $0x68] sm:$0xff]
      %v232 = vld [vmem:[%s198 + $0x70] sm:$0xff]
      %v233 = vld [vmem:[%s198 + $0x78] sm:$0xff]
      %v234 = vld [vmem:[%s198 + $0x80] sm:$0xff]
      %v235 = vld [vmem:[%s198 + $0x88] sm:$0xff]
      %v236 = vld [vmem:[%s198 + $0x90] sm:$0xff]
      %v237 = vld [vmem:[%s198 + $0x98] sm:$0xff]
      %v238 = vld [vmem:[%s198 + $0xa0] sm:$0xff]
      %v239 = vld [vmem:[%s198 + $0xa8] sm:$0xff]
      %v240 = vld [vmem:[%s198 + $0xb0] sm:$0xff]
      %v241 = vld [vmem:[%s198 + $0xb8] sm:$0xff]
      %v242 = vld [vmem:[%s198 + $0xc0] sm:$0xff]
      %v243 = vld [vmem:[%s198 + $0xc8] sm:$0xff]
      %v244 = vld [vmem:[%s198 + $0xd0] sm:$0xff]
      %v245 = vld [vmem:[%s198 + $0xd8] sm:$0xff]
      %v246 = vld [vmem:[%s198 + $0xe0] sm:$0xff]
      %v247 = vld [vmem:[%s198 + $0xe8] sm:$0xff]
      %v248 = vld [vmem:[%s198 + $0xf0] sm:$0xff]
      %v249 = vld [vmem:[%s198 + $0xf8] sm:$0xff]
      %v250 = vld [vmem:[%s198 + $0x100] sm:$0xff]
      %v251 = vld [vmem:[%s198 + $0x108] sm:$0xff]
      %v252 = vld [vmem:[%s198 + $0x110] sm:$0xff]
      %v253 = vld [vmem:[%s198 + $0x118] sm:$0xff]
      %v254 = vld [vmem:[%s198 + $0x120] sm:$0xff]
      %v255 = vld [vmem:[%s198 + $0x128] sm:$0xff]
      %v256 = vld [vmem:[%s198 + $0x130] sm:$0xff]
      %v257 = vld [vmem:[%s198 + $0x138] sm:$0xff]
      %v258 = vld [vmem:[%s198 + $0x140] sm:$0xff]
      %v259 = vld [vmem:[%s198 + $0x148] sm:$0xff]
      %v260 = vld [vmem:[%s198 + $0x150] sm:$0xff]
      %v261 = vld [vmem:[%s198 + $0x158] sm:$0xff]
      %v262 = vld [vmem:[%s198 + $0x160] sm:$0xff]
      %v263 = vld [vmem:[%s198 + $0x168] sm:$0xff]
      %v264 = vld [vmem:[%s198 + $0x170] sm:$0xff]
      %v265 = vld [vmem:[%s198 + $0x178] sm:$0xff]
      %v266 = vld [vmem:[%s198 + $0x180] sm:$0xff]
      %v267 = vld [vmem:[%s198 + $0x188] sm:$0xff]
      %v268 = vld [vmem:[%s198 + $0x190] sm:$0xff]
      %v269 = vld [vmem:[%s198 + $0x198] sm:$0xff]
      %v270 = vld [vmem:[%s198 + $0x1a0] sm:$0xff]
      %v271 = vld [vmem:[%s198 + $0x1a8] sm:$0xff]
      %v272 = vld [vmem:[%s198 + $0x1b0] sm:$0xff]
      %v273 = vld [vmem:[%s198 + $0x1b8] sm:$0xff]
      %v274 = vld [vmem:[%s198 + $0x1c0] sm:$0xff]
      %v275 = vld [vmem:[%s198 + $0x1c8] sm:$0xff]
      %v276 = vld [vmem:[%s198 + $0x1d0] sm:$0xff]
      %v277 = vld [vmem:[%s198 + $0x1d8] sm:$0xff]
      %v278 = vld [vmem:[%s198 + $0x1e0] sm:$0xff]
      %v279 = vld [vmem:[%s198 + $0x1e8] sm:$0xff]
      %v280 = vld [vmem:[%s198 + $0x1f0] sm:$0xff]
      %v281 = vld [vmem:[%s198 + $0x1f8] sm:$0xff]
      %v282 = vld [vmem:[%s198 + $0x200] sm:$0xff]
      %v283 = vld [vmem:[%s198 + $0x208] sm:$0xff]
      %v284 = vld [vmem:[%s198 + $0x210] sm:$0xff]
      %v285 = vld [vmem:[%s198 + $0x218] sm:$0xff]
      %v286 = vld [vmem:[%s198 + $0x220] sm:$0xff]
      %v287 = vld [vmem:[%s198 + $0x228] sm:$0xff]
      %v288 = vld [vmem:[%s198 + $0x230] sm:$0xff]
      %v289 = vld [vmem:[%s198 + $0x238] sm:$0xff]
      %v290 = vld [vmem:[%s198 + $0x240] sm:$0xff]
      %v291 = vld [vmem:[%s198 + $0x248] sm:$0xff]
      %v292 = vld [vmem:[%s198 + $0x250] sm:$0xff]
      %v293 = vld [vmem:[%s198 + $0x258] sm:$0xff]
      %v294 = vld [vmem:[%s198 + $0x260] sm:$0xff]
      %v295 = vld [vmem:[%s198 + $0x268] sm:$0xff]
      %v296 = vld [vmem:[%s198 + $0x270] sm:$0xff]
      %v297 = vld [vmem:[%s198 + $0x278] sm:$0xff]
      %v298 = vld [vmem:[%s198 + $0x280] sm:$0xff]
      %v299 = vld [vmem:[%s198 + $0x288] sm:$0xff]
      %v300 = vld [vmem:[%s198 + $0x290] sm:$0xff]
      %v301 = vld [vmem:[%s198 + $0x298] sm:$0xff]
      %v302 = vld [vmem:[%s198 + $0x2a0] sm:$0xff]
      %v303 = vld [vmem:[%s198 + $0x2a8] sm:$0xff]
      %v304 = vld [vmem:[%s198 + $0x2b0] sm:$0xff]
      %v305 = vld [vmem:[%s198 + $0x2b8] sm:$0xff]
      %v306 = vld [vmem:[%s198 + $0x2c0] sm:$0xff]
      %v307 = vld [vmem:[%s198 + $0x2c8] sm:$0xff]
      %v308 = vld [vmem:[%s198 + $0x2d0] sm:$0xff]
      %v309 = vld [vmem:[%s198 + $0x2d8] sm:$0xff]
      %v310 = vld [vmem:[%s198 + $0x2e0] sm:$0xff]
      %v311 = vld [vmem:[%s198 + $0x2e8] sm:$0xff]
      %v312 = vld [vmem:[%s198 + $0x2f0] sm:$0xff]
      %v313 = vld [vmem:[%s198 + $0x2f8] sm:$0xff]
      %v314 = vld [vmem:[%s198 + $0x300] sm:$0xff]
      %v315 = vld [vmem:[%s198 + $0x308] sm:$0xff]
      %v316 = vld [vmem:[%s198 + $0x310] sm:$0xff]
      %v317 = vld [vmem:[%s198 + $0x318] sm:$0xff]
      %v318 = vld [vmem:[%s198 + $0x320] sm:$0xff]
      %v319 = vld [vmem:[%s198 + $0x328] sm:$0xff]
      %v320 = vld [vmem:[%s198 + $0x330] sm:$0xff]
      %v321 = vld [vmem:[%s198 + $0x338] sm:$0xff]
      %v322 = vld [vmem:[%s198 + $0x340] sm:$0xff]
      %v323 = vld [vmem:[%s198 + $0x348] sm:$0xff]
      %v324 = vld [vmem:[%s198 + $0x350] sm:$0xff]
      %v325 = vld [vmem:[%s198 + $0x358] sm:$0xff]
      %v326 = vld [vmem:[%s198 + $0x360] sm:$0xff]
      %v327 = vld [vmem:[%s198 + $0x368] sm:$0xff]
      %v328 = vld [vmem:[%s198 + $0x370] sm:$0xff]
      %v329 = vld [vmem:[%s198 + $0x378] sm:$0xff]
      %v330 = vld [vmem:[%s198 + $0x380] sm:$0xff]
      %v331 = vld [vmem:[%s198 + $0x388] sm:$0xff]
      %v332 = vld [vmem:[%s198 + $0x390] sm:$0xff]
      %v333 = vld [vmem:[%s198 + $0x398] sm:$0xff]
      %v334 = vld [vmem:[%s198 + $0x3a0] sm:$0xff]
      %v335 = vld [vmem:[%s198 + $0x3a8] sm:$0xff]
      %v336 = vld [vmem:[%s198 + $0x3b0] sm:$0xff]
      %v337 = vld [vmem:[%s198 + $0x3b8] sm:$0xff]
      %v338 = vld [vmem:[%s198 + $0x3c0] sm:$0xff]
      %v339 = vld [vmem:[%s198 + $0x3c8] sm:$0xff]
      %v340 = vld [vmem:[%s198 + $0x3d0] sm:$0xff]
      %v341 = vld [vmem:[%s198 + $0x3d8] sm:$0xff]
      %v342 = vld [vmem:[%s198 + $0x3e0] sm:$0xff]
      %v343 = vld [vmem:[%s198 + $0x3e8] sm:$0xff]
      %v344 = vld [vmem:[%s198 + $0x3f0] sm:$0xff]
      %v345 = vld [vmem:[%s198 + $0x3f8] sm:$0xff]
      %v346 = vld [vmem:[%s198 + $0x400] sm:$0xff]
      %v347 = vld [vmem:[%s198 + $0x408] sm:$0xff]
      %v348 = vld [vmem:[%s198 + $0x410] sm:$0xff]
      %v349 = vld [vmem:[%s198 + $0x418] sm:$0xff]
      %v350 = vld [vmem:[%s198 + $0x420] sm:$0xff]
      %v351 = vld [vmem:[%s198 + $0x428] sm:$0xff]
      %v352 = vld [vmem:[%s198 + $0x430] sm:$0xff]
      %v353 = vld [vmem:[%s198 + $0x438] sm:$0xff]
      %v354 = vld [vmem:[%s198 + $0x440] sm:$0xff]
      %v355 = vld [vmem:[%s198 + $0x448] sm:$0xff]
      %v356 = vld [vmem:[%s198 + $0x450] sm:$0xff]
      %v357 = vld [vmem:[%s198 + $0x458] sm:$0xff]
      %v358 = vld [vmem:[%s198 + $0x460] sm:$0xff]
      %v359 = vld [vmem:[%s198 + $0x468] sm:$0xff]
      %v360 = vld [vmem:[%s198 + $0x470] sm:$0xff]
      %v361 = vld [vmem:[%s198 + $0x478] sm:$0xff]
      %vm362 = vcmask 400384
      %v363 = vsel %vm362, %v218, 0.0
      %364 = vadd.xlane.f32.xlu0 %v363
      %v365 = vpop.xlane.xlu0 %364
      %v366 = vsel %vm362, %v219, 0.0
      %367 = vadd.xlane.f32.xlu0 %v366
      %v368 = vpop.xlane.xlu0 %367
      %v369 = vsel %vm362, %v220, 0.0
      %370 = vadd.xlane.f32.xlu0 %v369
      %v371 = vpop.xlane.xlu0 %370
      %v372 = vsel %vm362, %v221, 0.0
      %373 = vadd.xlane.f32.xlu0 %v372
      %v374 = vpop.xlane.xlu0 %373
      %v375 = vsel %vm362, %v222, 0.0
      %376 = vadd.xlane.f32.xlu0 %v375
      %v377 = vpop.xlane.xlu0 %376
      %v378 = vsel %vm362, %v223, 0.0
      %379 = vadd.xlane.f32.xlu0 %v378
      %v380 = vpop.xlane.xlu0 %379
      %v381 = vsel %vm362, %v224, 0.0
      %382 = vadd.xlane.f32.xlu0 %v381
      %v383 = vpop.xlane.xlu0 %382
      %v384 = vsel %vm362, %v225, 0.0
      %385 = vadd.xlane.f32.xlu0 %v384
      %v386 = vpop.xlane.xlu0 %385
      %v387 = vsel %vm362, %v226, 0.0
      %388 = vadd.xlane.f32.xlu0 %v387
      %v389 = vpop.xlane.xlu0 %388
      %v390 = vsel %vm362, %v227, 0.0
      %391 = vadd.xlane.f32.xlu0 %v390
      %v392 = vpop.xlane.xlu0 %391
      %v393 = vsel %vm362, %v228, 0.0
      %394 = vadd.xlane.f32.xlu0 %v393
      %v395 = vpop.xlane.xlu0 %394
      %v396 = vsel %vm362, %v229, 0.0
      %397 = vadd.xlane.f32.xlu0 %v396
      %v398 = vpop.xlane.xlu0 %397
      %v399 = vsel %vm362, %v230, 0.0
      %400 = vadd.xlane.f32.xlu0 %v399
      %v401 = vpop.xlane.xlu0 %400
      %v402 = vsel %vm362, %v231, 0.0
      %403 = vadd.xlane.f32.xlu0 %v402
      %v404 = vpop.xlane.xlu0 %403
      %v405 = vsel %vm362, %v232, 0.0
      %406 = vadd.xlane.f32.xlu0 %v405
      %v407 = vpop.xlane.xlu0 %406
      %v408 = vsel %vm362, %v233, 0.0
      %409 = vadd.xlane.f32.xlu0 %v408
      %v410 = vpop.xlane.xlu0 %409
      %v411 = vsel %vm362, %v234, 0.0
      %412 = vadd.xlane.f32.xlu0 %v411
      %v413 = vpop.xlane.xlu0 %412
      %v414 = vsel %vm362, %v235, 0.0
      %415 = vadd.xlane.f32.xlu0 %v414
      %v416 = vpop.xlane.xlu0 %415
      %v417 = vsel %vm362, %v236, 0.0
      %418 = vadd.xlane.f32.xlu0 %v417
      %v419 = vpop.xlane.xlu0 %418
      %v420 = vsel %vm362, %v237, 0.0
      %421 = vadd.xlane.f32.xlu0 %v420
      %v422 = vpop.xlane.xlu0 %421
      %v423 = vsel %vm362, %v238, 0.0
      %424 = vadd.xlane.f32.xlu0 %v423
      %v425 = vpop.xlane.xlu0 %424
      %v426 = vsel %vm362, %v239, 0.0
      %427 = vadd.xlane.f32.xlu0 %v426
      %v428 = vpop.xlane.xlu0 %427
      %v429 = vsel %vm362, %v240, 0.0
      %430 = vadd.xlane.f32.xlu0 %v429
      %v431 = vpop.xlane.xlu0 %430
      %v432 = vsel %vm362, %v241, 0.0
      %433 = vadd.xlane.f32.xlu0 %v432
      %v434 = vpop.xlane.xlu0 %433
      %v435 = vsel %vm362, %v242, 0.0
      %436 = vadd.xlane.f32.xlu0 %v435
      %v437 = vpop.xlane.xlu0 %436
      %v438 = vsel %vm362, %v243, 0.0
      %439 = vadd.xlane.f32.xlu0 %v438
      %v440 = vpop.xlane.xlu0 %439
      %v441 = vsel %vm362, %v244, 0.0
      %442 = vadd.xlane.f32.xlu0 %v441
      %v443 = vpop.xlane.xlu0 %442
      %v444 = vsel %vm362, %v245, 0.0
      %445 = vadd.xlane.f32.xlu0 %v444
      %v446 = vpop.xlane.xlu0 %445
      %v447 = vsel %vm362, %v246, 0.0
      %448 = vadd.xlane.f32.xlu0 %v447
      %v449 = vpop.xlane.xlu0 %448
      %v450 = vsel %vm362, %v247, 0.0
      %451 = vadd.xlane.f32.xlu0 %v450
      %v452 = vpop.xlane.xlu0 %451
      %v453 = vsel %vm362, %v248, 0.0
      %454 = vadd.xlane.f32.xlu0 %v453
      %v455 = vpop.xlane.xlu0 %454
      %v456 = vsel %vm362, %v249, 0.0
      %457 = vadd.xlane.f32.xlu0 %v456
      %v458 = vpop.xlane.xlu0 %457
      %v459 = vsel %vm362, %v250, 0.0
      %460 = vadd.xlane.f32.xlu0 %v459
      %v461 = vpop.xlane.xlu0 %460
      %v462 = vsel %vm362, %v251, 0.0
      %463 = vadd.xlane.f32.xlu0 %v462
      %v464 = vpop.xlane.xlu0 %463
      %v465 = vsel %vm362, %v252, 0.0
      %466 = vadd.xlane.f32.xlu0 %v465
      %v467 = vpop.xlane.xlu0 %466
      %v468 = vsel %vm362, %v253, 0.0
      %469 = vadd.xlane.f32.xlu0 %v468
      %v470 = vpop.xlane.xlu0 %469
      %v471 = vsel %vm362, %v254, 0.0
      %472 = vadd.xlane.f32.xlu0 %v471
      %v473 = vpop.xlane.xlu0 %472
      %v474 = vsel %vm362, %v255, 0.0
      %475 = vadd.xlane.f32.xlu0 %v474
      %v476 = vpop.xlane.xlu0 %475
      %v477 = vsel %vm362, %v256, 0.0
      %478 = vadd.xlane.f32.xlu0 %v477
      %v479 = vpop.xlane.xlu0 %478
      %v480 = vsel %vm362, %v257, 0.0
      %481 = vadd.xlane.f32.xlu0 %v480
      %v482 = vpop.xlane.xlu0 %481
      %v483 = vsel %vm362, %v258, 0.0
      %484 = vadd.xlane.f32.xlu0 %v483
      %v485 = vpop.xlane.xlu0 %484
      %v486 = vsel %vm362, %v259, 0.0
      %487 = vadd.xlane.f32.xlu0 %v486
      %v488 = vpop.xlane.xlu0 %487
      %v489 = vsel %vm362, %v260, 0.0
      %490 = vadd.xlane.f32.xlu0 %v489
      %v491 = vpop.xlane.xlu0 %490
      %v492 = vsel %vm362, %v261, 0.0
      %493 = vadd.xlane.f32.xlu0 %v492
      %v494 = vpop.xlane.xlu0 %493
      %v495 = vsel %vm362, %v262, 0.0
      %496 = vadd.xlane.f32.xlu0 %v495
      %v497 = vpop.xlane.xlu0 %496
      %v498 = vsel %vm362, %v263, 0.0
      %499 = vadd.xlane.f32.xlu0 %v498
      %v500 = vpop.xlane.xlu0 %499
      %v501 = vsel %vm362, %v264, 0.0
      %502 = vadd.xlane.f32.xlu0 %v501
      %v503 = vpop.xlane.xlu0 %502
      %v504 = vsel %vm362, %v265, 0.0
      %505 = vadd.xlane.f32.xlu0 %v504
      %v506 = vpop.xlane.xlu0 %505
      %v507 = vsel %vm362, %v266, 0.0
      %508 = vadd.xlane.f32.xlu0 %v507
      %v509 = vpop.xlane.xlu0 %508
      %v510 = vsel %vm362, %v267, 0.0
      %511 = vadd.xlane.f32.xlu0 %v510
      %v512 = vpop.xlane.xlu0 %511
      %v513 = vsel %vm362, %v268, 0.0
      %514 = vadd.xlane.f32.xlu0 %v513
      %v515 = vpop.xlane.xlu0 %514
      %v516 = vsel %vm362, %v269, 0.0
      %517 = vadd.xlane.f32.xlu0 %v516
      %v518 = vpop.xlane.xlu0 %517
      %v519 = vsel %vm362, %v270, 0.0
      %520 = vadd.xlane.f32.xlu0 %v519
      %v521 = vpop.xlane.xlu0 %520
      %v522 = vsel %vm362, %v271, 0.0
      %523 = vadd.xlane.f32.xlu0 %v522
      %v524 = vpop.xlane.xlu0 %523
      %v525 = vsel %vm362, %v272, 0.0
      %526 = vadd.xlane.f32.xlu0 %v525
      %v527 = vpop.xlane.xlu0 %526
      %v528 = vsel %vm362, %v273, 0.0
      %529 = vadd.xlane.f32.xlu0 %v528
      %v530 = vpop.xlane.xlu0 %529
      %v531 = vsel %vm362, %v274, 0.0
      %532 = vadd.xlane.f32.xlu0 %v531
      %v533 = vpop.xlane.xlu0 %532
      %v534 = vsel %vm362, %v275, 0.0
      %535 = vadd.xlane.f32.xlu0 %v534
      %v536 = vpop.xlane.xlu0 %535
      %v537 = vsel %vm362, %v276, 0.0
      %538 = vadd.xlane.f32.xlu0 %v537
      %v539 = vpop.xlane.xlu0 %538
      %v540 = vsel %vm362, %v277, 0.0
      %541 = vadd.xlane.f32.xlu0 %v540
      %v542 = vpop.xlane.xlu0 %541
      %v543 = vsel %vm362, %v278, 0.0
      %544 = vadd.xlane.f32.xlu0 %v543
      %v545 = vpop.xlane.xlu0 %544
      %v546 = vsel %vm362, %v279, 0.0
      %547 = vadd.xlane.f32.xlu0 %v546
      %v548 = vpop.xlane.xlu0 %547
      %v549 = vsel %vm362, %v280, 0.0
      %550 = vadd.xlane.f32.xlu0 %v549
      %v551 = vpop.xlane.xlu0 %550
      %v552 = vsel %vm362, %v281, 0.0
      %553 = vadd.xlane.f32.xlu0 %v552
      %v554 = vpop.xlane.xlu0 %553
      %v555 = vsel %vm362, %v282, 0.0
      %556 = vadd.xlane.f32.xlu0 %v555
      %v557 = vpop.xlane.xlu0 %556
      %v558 = vsel %vm362, %v283, 0.0
      %559 = vadd.xlane.f32.xlu0 %v558
      %v560 = vpop.xlane.xlu0 %559
      %v561 = vsel %vm362, %v284, 0.0
      %562 = vadd.xlane.f32.xlu0 %v561
      %v563 = vpop.xlane.xlu0 %562
      %v564 = vsel %vm362, %v285, 0.0
      %565 = vadd.xlane.f32.xlu0 %v564
      %v566 = vpop.xlane.xlu0 %565
      %v567 = vsel %vm362, %v286, 0.0
      %568 = vadd.xlane.f32.xlu0 %v567
      %v569 = vpop.xlane.xlu0 %568
      %v570 = vsel %vm362, %v287, 0.0
      %571 = vadd.xlane.f32.xlu0 %v570
      %v572 = vpop.xlane.xlu0 %571
      %v573 = vsel %vm362, %v288, 0.0
      %574 = vadd.xlane.f32.xlu0 %v573
      %v575 = vpop.xlane.xlu0 %574
      %v576 = vsel %vm362, %v289, 0.0
      %577 = vadd.xlane.f32.xlu0 %v576
      %v578 = vpop.xlane.xlu0 %577
      %v579 = vsel %vm362, %v290, 0.0
      %580 = vadd.xlane.f32.xlu0 %v579
      %v581 = vpop.xlane.xlu0 %580
      %v582 = vsel %vm362, %v291, 0.0
      %583 = vadd.xlane.f32.xlu0 %v582
      %v584 = vpop.xlane.xlu0 %583
      %v585 = vsel %vm362, %v292, 0.0
      %586 = vadd.xlane.f32.xlu0 %v585
      %v587 = vpop.xlane.xlu0 %586
      %v588 = vsel %vm362, %v293, 0.0
      %589 = vadd.xlane.f32.xlu0 %v588
      %v590 = vpop.xlane.xlu0 %589
      %v591 = vsel %vm362, %v294, 0.0
      %592 = vadd.xlane.f32.xlu0 %v591
      %v593 = vpop.xlane.xlu0 %592
      %v594 = vsel %vm362, %v295, 0.0
      %595 = vadd.xlane.f32.xlu0 %v594
      %v596 = vpop.xlane.xlu0 %595
      %v597 = vsel %vm362, %v296, 0.0
      %598 = vadd.xlane.f32.xlu0 %v597
      %v599 = vpop.xlane.xlu0 %598
      %v600 = vsel %vm362, %v297, 0.0
      %601 = vadd.xlane.f32.xlu0 %v600
      %v602 = vpop.xlane.xlu0 %601
      %v603 = vsel %vm362, %v298, 0.0
      %604 = vadd.xlane.f32.xlu0 %v603
      %v605 = vpop.xlane.xlu0 %604
      %v606 = vsel %vm362, %v299, 0.0
      %607 = vadd.xlane.f32.xlu0 %v606
      %v608 = vpop.xlane.xlu0 %607
      %v609 = vsel %vm362, %v300, 0.0
      %610 = vadd.xlane.f32.xlu0 %v609
      %v611 = vpop.xlane.xlu0 %610
      %v612 = vsel %vm362, %v301, 0.0
      %613 = vadd.xlane.f32.xlu0 %v612
      %v614 = vpop.xlane.xlu0 %613
      %v615 = vsel %vm362, %v302, 0.0
      %616 = vadd.xlane.f32.xlu0 %v615
      %v617 = vpop.xlane.xlu0 %616
      %v618 = vsel %vm362, %v303, 0.0
      %619 = vadd.xlane.f32.xlu0 %v618
      %v620 = vpop.xlane.xlu0 %619
      %v621 = vsel %vm362, %v304, 0.0
      %622 = vadd.xlane.f32.xlu0 %v621
      %v623 = vpop.xlane.xlu0 %622
      %v624 = vsel %vm362, %v305, 0.0
      %625 = vadd.xlane.f32.xlu0 %v624
      %v626 = vpop.xlane.xlu0 %625
      %v627 = vsel %vm362, %v306, 0.0
      %628 = vadd.xlane.f32.xlu0 %v627
      %v629 = vpop.xlane.xlu0 %628
      %v630 = vsel %vm362, %v307, 0.0
      %631 = vadd.xlane.f32.xlu0 %v630
      %v632 = vpop.xlane.xlu0 %631
      %v633 = vsel %vm362, %v308, 0.0
      %634 = vadd.xlane.f32.xlu0 %v633
      %v635 = vpop.xlane.xlu0 %634
      %v636 = vsel %vm362, %v309, 0.0
      %637 = vadd.xlane.f32.xlu0 %v636
      %v638 = vpop.xlane.xlu0 %637
      %v639 = vsel %vm362, %v310, 0.0
      %640 = vadd.xlane.f32.xlu0 %v639
      %v641 = vpop.xlane.xlu0 %640
      %v642 = vsel %vm362, %v311, 0.0
      %643 = vadd.xlane.f32.xlu0 %v642
      %v644 = vpop.xlane.xlu0 %643
      %v645 = vsel %vm362, %v312, 0.0
      %646 = vadd.xlane.f32.xlu0 %v645
      %v647 = vpop.xlane.xlu0 %646
      %v648 = vsel %vm362, %v313, 0.0
      %649 = vadd.xlane.f32.xlu0 %v648
      %v650 = vpop.xlane.xlu0 %649
      %v651 = vsel %vm362, %v314, 0.0
      %652 = vadd.xlane.f32.xlu0 %v651
      %v653 = vpop.xlane.xlu0 %652
      %v654 = vsel %vm362, %v315, 0.0
      %655 = vadd.xlane.f32.xlu0 %v654
      %v656 = vpop.xlane.xlu0 %655
      %v657 = vsel %vm362, %v316, 0.0
      %658 = vadd.xlane.f32.xlu0 %v657
      %v659 = vpop.xlane.xlu0 %658
      %v660 = vsel %vm362, %v317, 0.0
      %661 = vadd.xlane.f32.xlu0 %v660
      %v662 = vpop.xlane.xlu0 %661
      %v663 = vsel %vm362, %v318, 0.0
      %664 = vadd.xlane.f32.xlu0 %v663
      %v665 = vpop.xlane.xlu0 %664
      %v666 = vsel %vm362, %v319, 0.0
      %667 = vadd.xlane.f32.xlu0 %v666
      %v668 = vpop.xlane.xlu0 %667
      %v669 = vsel %vm362, %v320, 0.0
      %670 = vadd.xlane.f32.xlu0 %v669
      %v671 = vpop.xlane.xlu0 %670
      %v672 = vsel %vm362, %v321, 0.0
      %673 = vadd.xlane.f32.xlu0 %v672
      %v674 = vpop.xlane.xlu0 %673
      %v675 = vsel %vm362, %v322, 0.0
      %676 = vadd.xlane.f32.xlu0 %v675
      %v677 = vpop.xlane.xlu0 %676
      %v678 = vsel %vm362, %v323, 0.0
      %679 = vadd.xlane.f32.xlu0 %v678
      %v680 = vpop.xlane.xlu0 %679
      %v681 = vsel %vm362, %v324, 0.0
      %682 = vadd.xlane.f32.xlu0 %v681
      %v683 = vpop.xlane.xlu0 %682
      %v684 = vsel %vm362, %v325, 0.0
      %685 = vadd.xlane.f32.xlu0 %v684
      %v686 = vpop.xlane.xlu0 %685
      %v687 = vsel %vm362, %v326, 0.0
      %688 = vadd.xlane.f32.xlu0 %v687
      %v689 = vpop.xlane.xlu0 %688
      %v690 = vsel %vm362, %v327, 0.0
      %691 = vadd.xlane.f32.xlu0 %v690
      %v692 = vpop.xlane.xlu0 %691
      %v693 = vsel %vm362, %v328, 0.0
      %694 = vadd.xlane.f32.xlu0 %v693
      %v695 = vpop.xlane.xlu0 %694
      %v696 = vsel %vm362, %v329, 0.0
      %697 = vadd.xlane.f32.xlu0 %v696
      %v698 = vpop.xlane.xlu0 %697
      %v699 = vsel %vm362, %v330, 0.0
      %700 = vadd.xlane.f32.xlu0 %v699
      %v701 = vpop.xlane.xlu0 %700
      %v702 = vsel %vm362, %v331, 0.0
      %703 = vadd.xlane.f32.xlu0 %v702
      %v704 = vpop.xlane.xlu0 %703
      %v705 = vsel %vm362, %v332, 0.0
      %706 = vadd.xlane.f32.xlu0 %v705
      %v707 = vpop.xlane.xlu0 %706
      %v708 = vsel %vm362, %v333, 0.0
      %709 = vadd.xlane.f32.xlu0 %v708
      %v710 = vpop.xlane.xlu0 %709
      %v711 = vsel %vm362, %v334, 0.0
      %712 = vadd.xlane.f32.xlu0 %v711
      %v713 = vpop.xlane.xlu0 %712
      %v714 = vsel %vm362, %v335, 0.0
      %715 = vadd.xlane.f32.xlu0 %v714
      %v716 = vpop.xlane.xlu0 %715
      %v717 = vsel %vm362, %v336, 0.0
      %718 = vadd.xlane.f32.xlu0 %v717
      %v719 = vpop.xlane.xlu0 %718
      %v720 = vsel %vm362, %v337, 0.0
      %721 = vadd.xlane.f32.xlu0 %v720
      %v722 = vpop.xlane.xlu0 %721
      %v723 = vsel %vm362, %v338, 0.0
      %724 = vadd.xlane.f32.xlu0 %v723
      %v725 = vpop.xlane.xlu0 %724
      %v726 = vsel %vm362, %v339, 0.0
      %727 = vadd.xlane.f32.xlu0 %v726
      %v728 = vpop.xlane.xlu0 %727
      %v729 = vsel %vm362, %v340, 0.0
      %730 = vadd.xlane.f32.xlu0 %v729
      %v731 = vpop.xlane.xlu0 %730
      %v732 = vsel %vm362, %v341, 0.0
      %733 = vadd.xlane.f32.xlu0 %v732
      %v734 = vpop.xlane.xlu0 %733
      %v735 = vsel %vm362, %v342, 0.0
      %736 = vadd.xlane.f32.xlu0 %v735
      %v737 = vpop.xlane.xlu0 %736
      %v738 = vsel %vm362, %v343, 0.0
      %739 = vadd.xlane.f32.xlu0 %v738
      %v740 = vpop.xlane.xlu0 %739
      %v741 = vsel %vm362, %v344, 0.0
      %742 = vadd.xlane.f32.xlu0 %v741
      %v743 = vpop.xlane.xlu0 %742
      %v744 = vsel %vm362, %v345, 0.0
      %745 = vadd.xlane.f32.xlu0 %v744
      %v746 = vpop.xlane.xlu0 %745
      %v747 = vsel %vm362, %v346, 0.0
      %748 = vadd.xlane.f32.xlu0 %v747
      %v749 = vpop.xlane.xlu0 %748
      %v750 = vsel %vm362, %v347, 0.0
      %751 = vadd.xlane.f32.xlu0 %v750
      %v752 = vpop.xlane.xlu0 %751
      %v753 = vsel %vm362, %v348, 0.0
      %754 = vadd.xlane.f32.xlu0 %v753
      %v755 = vpop.xlane.xlu0 %754
      %v756 = vsel %vm362, %v349, 0.0
      %757 = vadd.xlane.f32.xlu0 %v756
      %v758 = vpop.xlane.xlu0 %757
      %v759 = vsel %vm362, %v350, 0.0
      %760 = vadd.xlane.f32.xlu0 %v759
      %v761 = vpop.xlane.xlu0 %760
      %v762 = vsel %vm362, %v351, 0.0
      %763 = vadd.xlane.f32.xlu0 %v762
      %v764 = vpop.xlane.xlu0 %763
      %v765 = vsel %vm362, %v352, 0.0
      %766 = vadd.xlane.f32.xlu0 %v765
      %v767 = vpop.xlane.xlu0 %766
      %v768 = vsel %vm362, %v353, 0.0
      %769 = vadd.xlane.f32.xlu0 %v768
      %v770 = vpop.xlane.xlu0 %769
      %v771 = vsel %vm362, %v354, 0.0
      %772 = vadd.xlane.f32.xlu0 %v771
      %v773 = vpop.xlane.xlu0 %772
      %v774 = vsel %vm362, %v355, 0.0
      %775 = vadd.xlane.f32.xlu0 %v774
      %v776 = vpop.xlane.xlu0 %775
      %v777 = vsel %vm362, %v356, 0.0
      %778 = vadd.xlane.f32.xlu0 %v777
      %v779 = vpop.xlane.xlu0 %778
      %v780 = vsel %vm362, %v357, 0.0
      %781 = vadd.xlane.f32.xlu0 %v780
      %v782 = vpop.xlane.xlu0 %781
      %v783 = vsel %vm362, %v358, 0.0
      %784 = vadd.xlane.f32.xlu0 %v783
      %v785 = vpop.xlane.xlu0 %784
      %v786 = vsel %vm362, %v359, 0.0
      %787 = vadd.xlane.f32.xlu0 %v786
      %v788 = vpop.xlane.xlu0 %787
      %v789 = vsel %vm362, %v360, 0.0
      %790 = vadd.xlane.f32.xlu0 %v789
      %v791 = vpop.xlane.xlu0 %790
      %v792 = vsel %vm362, %v361, 0.0
      %793 = vadd.xlane.f32.xlu0 %v792
      %v794 = vpop.xlane.xlu0 %793
      %v795 = vadd.f32 %v365, 0.0
      %v796 = vadd.f32 %v368, 0.0
      %v797 = vadd.f32 %v371, 0.0
      %v798 = vadd.f32 %v374, 0.0
      %v799 = vadd.f32 %v377, 0.0
      %v800 = vadd.f32 %v380, 0.0
      %v801 = vadd.f32 %v383, 0.0
      %v802 = vadd.f32 %v386, 0.0
      %v803 = vadd.f32 %v389, 0.0
      %v804 = vadd.f32 %v392, 0.0
      %v805 = vadd.f32 %v395, 0.0
      %v806 = vadd.f32 %v398, 0.0
      %v807 = vadd.f32 %v401, 0.0
      %v808 = vadd.f32 %v404, 0.0
      %v809 = vadd.f32 %v407, 0.0
      %v810 = vadd.f32 %v410, 0.0
      %v811 = vadd.f32 %v413, 0.0
      %v812 = vadd.f32 %v416, 0.0
      %v813 = vadd.f32 %v419, 0.0
      %v814 = vadd.f32 %v422, 0.0
      %v815 = vadd.f32 %v425, 0.0
      %v816 = vadd.f32 %v428, 0.0
      %v817 = vadd.f32 %v431, 0.0
      %v818 = vadd.f32 %v434, 0.0
      %v819 = vadd.f32 %v437, 0.0
      %v820 = vadd.f32 %v440, 0.0
      %v821 = vadd.f32 %v443, 0.0
      %v822 = vadd.f32 %v446, 0.0
      %v823 = vadd.f32 %v449, 0.0
      %v824 = vadd.f32 %v452, 0.0
      %v825 = vadd.f32 %v455, 0.0
      %v826 = vadd.f32 %v458, 0.0
      %v827 = vadd.f32 %v461, 0.0
      %v828 = vadd.f32 %v464, 0.0
      %v829 = vadd.f32 %v467, 0.0
      %v830 = vadd.f32 %v470, 0.0
      %v831 = vadd.f32 %v473, 0.0
      %v832 = vadd.f32 %v476, 0.0
      %v833 = vadd.f32 %v479, 0.0
      %v834 = vadd.f32 %v482, 0.0
      %v835 = vadd.f32 %v485, 0.0
      %v836 = vadd.f32 %v488, 0.0
      %v837 = vadd.f32 %v491, 0.0
      %v838 = vadd.f32 %v494, 0.0
      %v839 = vadd.f32 %v497, 0.0
      %v840 = vadd.f32 %v500, 0.0
      %v841 = vadd.f32 %v503, 0.0
      %v842 = vadd.f32 %v506, 0.0
      %v843 = vadd.f32 %v509, 0.0
      %v844 = vadd.f32 %v512, 0.0
      %v845 = vadd.f32 %v515, 0.0
      %v846 = vadd.f32 %v518, 0.0
      %v847 = vadd.f32 %v521, 0.0
      %v848 = vadd.f32 %v524, 0.0
      %v849 = vadd.f32 %v527, 0.0
      %v850 = vadd.f32 %v530, 0.0
      %v851 = vadd.f32 %v533, 0.0
      %v852 = vadd.f32 %v536, 0.0
      %v853 = vadd.f32 %v539, 0.0
      %v854 = vadd.f32 %v542, 0.0
      %v855 = vadd.f32 %v545, 0.0
      %v856 = vadd.f32 %v548, 0.0
      %v857 = vadd.f32 %v551, 0.0
      %v858 = vadd.f32 %v554, 0.0
      %v859 = vadd.f32 %v557, 0.0
      %v860 = vadd.f32 %v560, 0.0
      %v861 = vadd.f32 %v563, 0.0
      %v862 = vadd.f32 %v566, 0.0
      %v863 = vadd.f32 %v569, 0.0
      %v864 = vadd.f32 %v572, 0.0
      %v865 = vadd.f32 %v575, 0.0
      %v866 = vadd.f32 %v578, 0.0
      %v867 = vadd.f32 %v581, 0.0
      %v868 = vadd.f32 %v584, 0.0
      %v869 = vadd.f32 %v587, 0.0
      %v870 = vadd.f32 %v590, 0.0
      %v871 = vadd.f32 %v593, 0.0
      %v872 = vadd.f32 %v596, 0.0
      %v873 = vadd.f32 %v599, 0.0
      %v874 = vadd.f32 %v602, 0.0
      %v875 = vadd.f32 %v605, 0.0
      %v876 = vadd.f32 %v608, 0.0
      %v877 = vadd.f32 %v611, 0.0
      %v878 = vadd.f32 %v614, 0.0
      %v879 = vadd.f32 %v617, 0.0
      %v880 = vadd.f32 %v620, 0.0
      %v881 = vadd.f32 %v623, 0.0
      %v882 = vadd.f32 %v626, 0.0
      %v883 = vadd.f32 %v629, 0.0
      %v884 = vadd.f32 %v632, 0.0
      %v885 = vadd.f32 %v635, 0.0
      %v886 = vadd.f32 %v638, 0.0
      %v887 = vadd.f32 %v641, 0.0
      %v888 = vadd.f32 %v644, 0.0
      %v889 = vadd.f32 %v647, 0.0
      %v890 = vadd.f32 %v650, 0.0
      %v891 = vadd.f32 %v653, 0.0
      %v892 = vadd.f32 %v656, 0.0
      %v893 = vadd.f32 %v659, 0.0
      %v894 = vadd.f32 %v662, 0.0
      %v895 = vadd.f32 %v665, 0.0
      %v896 = vadd.f32 %v668, 0.0
      %v897 = vadd.f32 %v671, 0.0
      %v898 = vadd.f32 %v674, 0.0
      %v899 = vadd.f32 %v677, 0.0
      %v900 = vadd.f32 %v680, 0.0
      %v901 = vadd.f32 %v683, 0.0
      %v902 = vadd.f32 %v686, 0.0
      %v903 = vadd.f32 %v689, 0.0
      %v904 = vadd.f32 %v692, 0.0
      %v905 = vadd.f32 %v695, 0.0
      %v906 = vadd.f32 %v698, 0.0
      %v907 = vadd.f32 %v701, 0.0
      %v908 = vadd.f32 %v704, 0.0
      %v909 = vadd.f32 %v707, 0.0
      %v910 = vadd.f32 %v710, 0.0
      %v911 = vadd.f32 %v713, 0.0
      %v912 = vadd.f32 %v716, 0.0
      %v913 = vadd.f32 %v719, 0.0
      %v914 = vadd.f32 %v722, 0.0
      %v915 = vadd.f32 %v725, 0.0
      %v916 = vadd.f32 %v728, 0.0
      %v917 = vadd.f32 %v731, 0.0
      %v918 = vadd.f32 %v734, 0.0
      %v919 = vadd.f32 %v737, 0.0
      %v920 = vadd.f32 %v740, 0.0
      %v921 = vadd.f32 %v743, 0.0
      %v922 = vadd.f32 %v746, 0.0
      %v923 = vadd.f32 %v749, 0.0
      %v924 = vadd.f32 %v752, 0.0
      %v925 = vadd.f32 %v755, 0.0
      %v926 = vadd.f32 %v758, 0.0
      %v927 = vadd.f32 %v761, 0.0
      %v928 = vadd.f32 %v764, 0.0
      %v929 = vadd.f32 %v767, 0.0
      %v930 = vadd.f32 %v770, 0.0
      %v931 = vadd.f32 %v773, 0.0
      %v932 = vadd.f32 %v776, 0.0
      %v933 = vadd.f32 %v779, 0.0
      %v934 = vadd.f32 %v782, 0.0
      %v935 = vadd.f32 %v785, 0.0
      %v936 = vadd.f32 %v788, 0.0
      %v937 = vadd.f32 %v791, 0.0
      %v938 = vadd.f32 %v794, 0.0
      %v939 = vmul.f32 %v218, %v218
      %v940 = vmul.f32 %v219, %v219
      %v941 = vmul.f32 %v220, %v220
      %v942 = vmul.f32 %v221, %v221
      %v943 = vmul.f32 %v222, %v222
      %v944 = vmul.f32 %v223, %v223
      %v945 = vmul.f32 %v224, %v224
      %v946 = vmul.f32 %v225, %v225
      %v947 = vmul.f32 %v226, %v226
      %v948 = vmul.f32 %v227, %v227
      %v949 = vmul.f32 %v228, %v228
      %v950 = vmul.f32 %v229, %v229
      %v951 = vmul.f32 %v230, %v230
      %v952 = vmul.f32 %v231, %v231
      %v953 = vmul.f32 %v232, %v232
      %v954 = vmul.f32 %v233, %v233
      %v955 = vmul.f32 %v234, %v234
      %v956 = vmul.f32 %v235, %v235
      %v957 = vmul.f32 %v236, %v236
      %v958 = vmul.f32 %v237, %v237
      %v959 = vmul.f32 %v238, %v238
      %v960 = vmul.f32 %v239, %v239
      %v961 = vmul.f32 %v240, %v240
      %v962 = vmul.f32 %v241, %v241
      %v963 = vmul.f32 %v242, %v242
      %v964 = vmul.f32 %v243, %v243
      %v965 = vmul.f32 %v244, %v244
      %v966 = vmul.f32 %v245, %v245
      %v967 = vmul.f32 %v246, %v246
      %v968 = vmul.f32 %v247, %v247
      %v969 = vmul.f32 %v248, %v248
      %v970 = vmul.f32 %v249, %v249
      %v971 = vmul.f32 %v250, %v250
      %v972 = vmul.f32 %v251, %v251
      %v973 = vmul.f32 %v252, %v252
      %v974 = vmul.f32 %v253, %v253
      %v975 = vmul.f32 %v254, %v254
      %v976 = vmul.f32 %v255, %v255
      %v977 = vmul.f32 %v256, %v256
      %v978 = vmul.f32 %v257, %v257
      %v979 = vmul.f32 %v258, %v258
      %v980 = vmul.f32 %v259, %v259
      %v981 = vmul.f32 %v260, %v260
      %v982 = vmul.f32 %v261, %v261
      %v983 = vmul.f32 %v262, %v262
      %v984 = vmul.f32 %v263, %v263
      %v985 = vmul.f32 %v264, %v264
      %v986 = vmul.f32 %v265, %v265
      %v987 = vmul.f32 %v266, %v266
      %v988 = vmul.f32 %v267, %v267
      %v989 = vmul.f32 %v268, %v268
      %v990 = vmul.f32 %v269, %v269
      %v991 = vmul.f32 %v270, %v270
      %v992 = vmul.f32 %v271, %v271
      %v993 = vmul.f32 %v272, %v272
      %v994 = vmul.f32 %v273, %v273
      %v995 = vmul.f32 %v274, %v274
      %v996 = vmul.f32 %v275, %v275
      %v997 = vmul.f32 %v276, %v276
      %v998 = vmul.f32 %v277, %v277
      %v999 = vmul.f32 %v278, %v278
      %v1000 = vmul.f32 %v279, %v279
      %v1001 = vmul.f32 %v280, %v280
      %v1002 = vmul.f32 %v281, %v281
      %v1003 = vmul.f32 %v282, %v282
      %v1004 = vmul.f32 %v283, %v283
      %v1005 = vmul.f32 %v284, %v284
      %v1006 = vmul.f32 %v285, %v285
      %v1007 = vmul.f32 %v286, %v286
      %v1008 = vmul.f32 %v287, %v287
      %v1009 = vmul.f32 %v288, %v288
      %v1010 = vmul.f32 %v289, %v289
      %v1011 = vmul.f32 %v290, %v290
      %v1012 = vmul.f32 %v291, %v291
      %v1013 = vmul.f32 %v292, %v292
      %v1014 = vmul.f32 %v293, %v293
      %v1015 = vmul.f32 %v294, %v294
      %v1016 = vmul.f32 %v295, %v295
      %v1017 = vmul.f32 %v296, %v296
      %v1018 = vmul.f32 %v297, %v297
      %v1019 = vmul.f32 %v298, %v298
      %v1020 = vmul.f32 %v299, %v299
      %v1021 = vmul.f32 %v300, %v300
      %v1022 = vmul.f32 %v301, %v301
      %v1023 = vmul.f32 %v302, %v302
      %v1024 = vmul.f32 %v303, %v303
      %v1025 = vmul.f32 %v304, %v304
      %v1026 = vmul.f32 %v305, %v305
      %v1027 = vmul.f32 %v306, %v306
      %v1028 = vmul.f32 %v307, %v307
      %v1029 = vmul.f32 %v308, %v308
      %v1030 = vmul.f32 %v309, %v309
      %v1031 = vmul.f32 %v310, %v310
      %v1032 = vmul.f32 %v311, %v311
      %v1033 = vmul.f32 %v312, %v312
      %v1034 = vmul.f32 %v313, %v313
      %v1035 = vmul.f32 %v314, %v314
      %v1036 = vmul.f32 %v315, %v315
      %v1037 = vmul.f32 %v316, %v316
      %v1038 = vmul.f32 %v317, %v317
      %v1039 = vmul.f32 %v318, %v318
      %v1040 = vmul.f32 %v319, %v319
      %v1041 = vmul.f32 %v320, %v320
      %v1042 = vmul.f32 %v321, %v321
      %v1043 = vmul.f32 %v322, %v322
      %v1044 = vmul.f32 %v323, %v323
      %v1045 = vmul.f32 %v324, %v324
      %v1046 = vmul.f32 %v325, %v325
      %v1047 = vmul.f32 %v326, %v326
      %v1048 = vmul.f32 %v327, %v327
      %v1049 = vmul.f32 %v328, %v328
      %v1050 = vmul.f32 %v329, %v329
      %v1051 = vmul.f32 %v330, %v330
      %v1052 = vmul.f32 %v331, %v331
      %v1053 = vmul.f32 %v332, %v332
      %v1054 = vmul.f32 %v333, %v333
      %v1055 = vmul.f32 %v334, %v334
      %v1056 = vmul.f32 %v335, %v335
      %v1057 = vmul.f32 %v336, %v336
      %v1058 = vmul.f32 %v337, %v337
      %v1059 = vmul.f32 %v338, %v338
      %v1060 = vmul.f32 %v339, %v339
      %v1061 = vmul.f32 %v340, %v340
      %v1062 = vmul.f32 %v341, %v341
      %v1063 = vmul.f32 %v342, %v342
      %v1064 = vmul.f32 %v343, %v343
      %v1065 = vmul.f32 %v344, %v344
      %v1066 = vmul.f32 %v345, %v345
      %v1067 = vmul.f32 %v346, %v346
      %v1068 = vmul.f32 %v347, %v347
      %v1069 = vmul.f32 %v348, %v348
      %v1070 = vmul.f32 %v349, %v349
      %v1071 = vmul.f32 %v350, %v350
      %v1072 = vmul.f32 %v351, %v351
      %v1073 = vmul.f32 %v352, %v352
      %v1074 = vmul.f32 %v353, %v353
      %v1075 = vmul.f32 %v354, %v354
      %v1076 = vmul.f32 %v355, %v355
      %v1077 = vmul.f32 %v356, %v356
      %v1078 = vmul.f32 %v357, %v357
      %v1079 = vmul.f32 %v358, %v358
      %v1080 = vmul.f32 %v359, %v359
      %v1081 = vmul.f32 %v360, %v360
      %v1082 = vmul.f32 %v361, %v361
      %v1083 = vsel %vm362, %v939, 0.0
      %1084 = vadd.xlane.f32.xlu0 %v1083
      %v1085 = vpop.xlane.xlu0 %1084
      %v1086 = vsel %vm362, %v940, 0.0
      %1087 = vadd.xlane.f32.xlu0 %v1086
      %v1088 = vpop.xlane.xlu0 %1087
      %v1089 = vsel %vm362, %v941, 0.0
      %1090 = vadd.xlane.f32.xlu0 %v1089
      %v1091 = vpop.xlane.xlu0 %1090
      %v1092 = vsel %vm362, %v942, 0.0
      %1093 = vadd.xlane.f32.xlu0 %v1092
      %v1094 = vpop.xlane.xlu0 %1093
      %v1095 = vsel %vm362, %v943, 0.0
      %1096 = vadd.xlane.f32.xlu0 %v1095
      %v1097 = vpop.xlane.xlu0 %1096
      %v1098 = vsel %vm362, %v944, 0.0
      %1099 = vadd.xlane.f32.xlu0 %v1098
      %v1100 = vpop.xlane.xlu0 %1099
      %v1101 = vsel %vm362, %v945, 0.0
      %1102 = vadd.xlane.f32.xlu0 %v1101
      %v1103 = vpop.xlane.xlu0 %1102
      %v1104 = vsel %vm362, %v946, 0.0
      %1105 = vadd.xlane.f32.xlu0 %v1104
      %v1106 = vpop.xlane.xlu0 %1105
      %v1107 = vsel %vm362, %v947, 0.0
      %1108 = vadd.xlane.f32.xlu0 %v1107
      %v1109 = vpop.xlane.xlu0 %1108
      %v1110 = vsel %vm362, %v948, 0.0
      %1111 = vadd.xlane.f32.xlu0 %v1110
      %v1112 = vpop.xlane.xlu0 %1111
      %v1113 = vsel %vm362, %v949, 0.0
      %1114 = vadd.xlane.f32.xlu0 %v1113
      %v1115 = vpop.xlane.xlu0 %1114
      %v1116 = vsel %vm362, %v950, 0.0
      %1117 = vadd.xlane.f32.xlu0 %v1116
      %v1118 = vpop.xlane.xlu0 %1117
      %v1119 = vsel %vm362, %v951, 0.0
      %1120 = vadd.xlane.f32.xlu0 %v1119
      %v1121 = vpop.xlane.xlu0 %1120
      %v1122 = vsel %vm362, %v952, 0.0
      %1123 = vadd.xlane.f32.xlu0 %v1122
      %v1124 = vpop.xlane.xlu0 %1123
      %v1125 = vsel %vm362, %v953, 0.0
      %1126 = vadd.xlane.f32.xlu0 %v1125
      %v1127 = vpop.xlane.xlu0 %1126
      %v1128 = vsel %vm362, %v954, 0.0
      %1129 = vadd.xlane.f32.xlu0 %v1128
      %v1130 = vpop.xlane.xlu0 %1129
      %v1131 = vsel %vm362, %v955, 0.0
      %1132 = vadd.xlane.f32.xlu0 %v1131
      %v1133 = vpop.xlane.xlu0 %1132
      %v1134 = vsel %vm362, %v956, 0.0
      %1135 = vadd.xlane.f32.xlu0 %v1134
      %v1136 = vpop.xlane.xlu0 %1135
      %v1137 = vsel %vm362, %v957, 0.0
      %1138 = vadd.xlane.f32.xlu0 %v1137
      %v1139 = vpop.xlane.xlu0 %1138
      %v1140 = vsel %vm362, %v958, 0.0
      %1141 = vadd.xlane.f32.xlu0 %v1140
      %v1142 = vpop.xlane.xlu0 %1141
      %v1143 = vsel %vm362, %v959, 0.0
      %1144 = vadd.xlane.f32.xlu0 %v1143
      %v1145 = vpop.xlane.xlu0 %1144
      %v1146 = vsel %vm362, %v960, 0.0
      %1147 = vadd.xlane.f32.xlu0 %v1146
      %v1148 = vpop.xlane.xlu0 %1147
      %v1149 = vsel %vm362, %v961, 0.0
      %1150 = vadd.xlane.f32.xlu0 %v1149
      %v1151 = vpop.xlane.xlu0 %1150
      %v1152 = vsel %vm362, %v962, 0.0
      %1153 = vadd.xlane.f32.xlu0 %v1152
      %v1154 = vpop.xlane.xlu0 %1153
      %v1155 = vsel %vm362, %v963, 0.0
      %1156 = vadd.xlane.f32.xlu0 %v1155
      %v1157 = vpop.xlane.xlu0 %1156
      %v1158 = vsel %vm362, %v964, 0.0
      %1159 = vadd.xlane.f32.xlu0 %v1158
      %v1160 = vpop.xlane.xlu0 %1159
      %v1161 = vsel %vm362, %v965, 0.0
      %1162 = vadd.xlane.f32.xlu0 %v1161
      %v1163 = vpop.xlane.xlu0 %1162
      %v1164 = vsel %vm362, %v966, 0.0
      %1165 = vadd.xlane.f32.xlu0 %v1164
      %v1166 = vpop.xlane.xlu0 %1165
      %v1167 = vsel %vm362, %v967, 0.0
      %1168 = vadd.xlane.f32.xlu0 %v1167
      %v1169 = vpop.xlane.xlu0 %1168
      %v1170 = vsel %vm362, %v968, 0.0
      %1171 = vadd.xlane.f32.xlu0 %v1170
      %v1172 = vpop.xlane.xlu0 %1171
      %v1173 = vsel %vm362, %v969, 0.0
      %1174 = vadd.xlane.f32.xlu0 %v1173
      %v1175 = vpop.xlane.xlu0 %1174
      %v1176 = vsel %vm362, %v970, 0.0
      %1177 = vadd.xlane.f32.xlu0 %v1176
      %v1178 = vpop.xlane.xlu0 %1177
      %v1179 = vsel %vm362, %v971, 0.0
      %1180 = vadd.xlane.f32.xlu0 %v1179
      %v1181 = vpop.xlane.xlu0 %1180
      %v1182 = vsel %vm362, %v972, 0.0
      %1183 = vadd.xlane.f32.xlu0 %v1182
      %v1184 = vpop.xlane.xlu0 %1183
      %v1185 = vsel %vm362, %v973, 0.0
      %1186 = vadd.xlane.f32.xlu0 %v1185
      %v1187 = vpop.xlane.xlu0 %1186
      %v1188 = vsel %vm362, %v974, 0.0
      %1189 = vadd.xlane.f32.xlu0 %v1188
      %v1190 = vpop.xlane.xlu0 %1189
      %v1191 = vsel %vm362, %v975, 0.0
      %1192 = vadd.xlane.f32.xlu0 %v1191
      %v1193 = vpop.xlane.xlu0 %1192
      %v1194 = vsel %vm362, %v976, 0.0
      %1195 = vadd.xlane.f32.xlu0 %v1194
      %v1196 = vpop.xlane.xlu0 %1195
      %v1197 = vsel %vm362, %v977, 0.0
      %1198 = vadd.xlane.f32.xlu0 %v1197
      %v1199 = vpop.xlane.xlu0 %1198
      %v1200 = vsel %vm362, %v978, 0.0
      %1201 = vadd.xlane.f32.xlu0 %v1200
      %v1202 = vpop.xlane.xlu0 %1201
      %v1203 = vsel %vm362, %v979, 0.0
      %1204 = vadd.xlane.f32.xlu0 %v1203
      %v1205 = vpop.xlane.xlu0 %1204
      %v1206 = vsel %vm362, %v980, 0.0
      %1207 = vadd.xlane.f32.xlu0 %v1206
      %v1208 = vpop.xlane.xlu0 %1207
      %v1209 = vsel %vm362, %v981, 0.0
      %1210 = vadd.xlane.f32.xlu0 %v1209
      %v1211 = vpop.xlane.xlu0 %1210
      %v1212 = vsel %vm362, %v982, 0.0
      %1213 = vadd.xlane.f32.xlu0 %v1212
      %v1214 = vpop.xlane.xlu0 %1213
      %v1215 = vsel %vm362, %v983, 0.0
      %1216 = vadd.xlane.f32.xlu0 %v1215
      %v1217 = vpop.xlane.xlu0 %1216
      %v1218 = vsel %vm362, %v984, 0.0
      %1219 = vadd.xlane.f32.xlu0 %v1218
      %v1220 = vpop.xlane.xlu0 %1219
      %v1221 = vsel %vm362, %v985, 0.0
      %1222 = vadd.xlane.f32.xlu0 %v1221
      %v1223 = vpop.xlane.xlu0 %1222
      %v1224 = vsel %vm362, %v986, 0.0
      %1225 = vadd.xlane.f32.xlu0 %v1224
      %v1226 = vpop.xlane.xlu0 %1225
      %v1227 = vsel %vm362, %v987, 0.0
      %1228 = vadd.xlane.f32.xlu0 %v1227
      %v1229 = vpop.xlane.xlu0 %1228
      %v1230 = vsel %vm362, %v988, 0.0
      %1231 = vadd.xlane.f32.xlu0 %v1230
      %v1232 = vpop.xlane.xlu0 %1231
      %v1233 = vsel %vm362, %v989, 0.0
      %1234 = vadd.xlane.f32.xlu0 %v1233
      %v1235 = vpop.xlane.xlu0 %1234
      %v1236 = vsel %vm362, %v990, 0.0
      %1237 = vadd.xlane.f32.xlu0 %v1236
      %v1238 = vpop.xlane.xlu0 %1237
      %v1239 = vsel %vm362, %v991, 0.0
      %1240 = vadd.xlane.f32.xlu0 %v1239
      %v1241 = vpop.xlane.xlu0 %1240
      %v1242 = vsel %vm362, %v992, 0.0
      %1243 = vadd.xlane.f32.xlu0 %v1242
      %v1244 = vpop.xlane.xlu0 %1243
      %v1245 = vsel %vm362, %v993, 0.0
      %1246 = vadd.xlane.f32.xlu0 %v1245
      %v1247 = vpop.xlane.xlu0 %1246
      %v1248 = vsel %vm362, %v994, 0.0
      %1249 = vadd.xlane.f32.xlu0 %v1248
      %v1250 = vpop.xlane.xlu0 %1249
      %v1251 = vsel %vm362, %v995, 0.0
      %1252 = vadd.xlane.f32.xlu0 %v1251
      %v1253 = vpop.xlane.xlu0 %1252
      %v1254 = vsel %vm362, %v996, 0.0
      %1255 = vadd.xlane.f32.xlu0 %v1254
      %v1256 = vpop.xlane.xlu0 %1255
      %v1257 = vsel %vm362, %v997, 0.0
      %1258 = vadd.xlane.f32.xlu0 %v1257
      %v1259 = vpop.xlane.xlu0 %1258
      %v1260 = vsel %vm362, %v998, 0.0
      %1261 = vadd.xlane.f32.xlu0 %v1260
      %v1262 = vpop.xlane.xlu0 %1261
      %v1263 = vsel %vm362, %v999, 0.0
      %1264 = vadd.xlane.f32.xlu0 %v1263
      %v1265 = vpop.xlane.xlu0 %1264
      %v1266 = vsel %vm362, %v1000, 0.0
      %1267 = vadd.xlane.f32.xlu0 %v1266
      %v1268 = vpop.xlane.xlu0 %1267
      %v1269 = vsel %vm362, %v1001, 0.0
      %1270 = vadd.xlane.f32.xlu0 %v1269
      %v1271 = vpop.xlane.xlu0 %1270
      %v1272 = vsel %vm362, %v1002, 0.0
      %1273 = vadd.xlane.f32.xlu0 %v1272
      %v1274 = vpop.xlane.xlu0 %1273
      %v1275 = vsel %vm362, %v1003, 0.0
      %1276 = vadd.xlane.f32.xlu0 %v1275
      %v1277 = vpop.xlane.xlu0 %1276
      %v1278 = vsel %vm362, %v1004, 0.0
      %1279 = vadd.xlane.f32.xlu0 %v1278
      %v1280 = vpop.xlane.xlu0 %1279
      %v1281 = vsel %vm362, %v1005, 0.0
      %1282 = vadd.xlane.f32.xlu0 %v1281
      %v1283 = vpop.xlane.xlu0 %1282
      %v1284 = vsel %vm362, %v1006, 0.0
      %1285 = vadd.xlane.f32.xlu0 %v1284
      %v1286 = vpop.xlane.xlu0 %1285
      %v1287 = vsel %vm362, %v1007, 0.0
      %1288 = vadd.xlane.f32.xlu0 %v1287
      %v1289 = vpop.xlane.xlu0 %1288
      %v1290 = vsel %vm362, %v1008, 0.0
      %1291 = vadd.xlane.f32.xlu0 %v1290
      %v1292 = vpop.xlane.xlu0 %1291
      %v1293 = vsel %vm362, %v1009, 0.0
      %1294 = vadd.xlane.f32.xlu0 %v1293
      %v1295 = vpop.xlane.xlu0 %1294
      %v1296 = vsel %vm362, %v1010, 0.0
      %1297 = vadd.xlane.f32.xlu0 %v1296
      %v1298 = vpop.xlane.xlu0 %1297
      %v1299 = vsel %vm362, %v1011, 0.0
      %1300 = vadd.xlane.f32.xlu0 %v1299
      %v1301 = vpop.xlane.xlu0 %1300
      %v1302 = vsel %vm362, %v1012, 0.0
      %1303 = vadd.xlane.f32.xlu0 %v1302
      %v1304 = vpop.xlane.xlu0 %1303
      %v1305 = vsel %vm362, %v1013, 0.0
      %1306 = vadd.xlane.f32.xlu0 %v1305
      %v1307 = vpop.xlane.xlu0 %1306
      %v1308 = vsel %vm362, %v1014, 0.0
      %1309 = vadd.xlane.f32.xlu0 %v1308
      %v1310 = vpop.xlane.xlu0 %1309
      %v1311 = vsel %vm362, %v1015, 0.0
      %1312 = vadd.xlane.f32.xlu0 %v1311
      %v1313 = vpop.xlane.xlu0 %1312
      %v1314 = vsel %vm362, %v1016, 0.0
      %1315 = vadd.xlane.f32.xlu0 %v1314
      %v1316 = vpop.xlane.xlu0 %1315
      %v1317 = vsel %vm362, %v1017, 0.0
      %1318 = vadd.xlane.f32.xlu0 %v1317
      %v1319 = vpop.xlane.xlu0 %1318
      %v1320 = vsel %vm362, %v1018, 0.0
      %1321 = vadd.xlane.f32.xlu0 %v1320
      %v1322 = vpop.xlane.xlu0 %1321
      %v1323 = vsel %vm362, %v1019, 0.0
      %1324 = vadd.xlane.f32.xlu0 %v1323
      %v1325 = vpop.xlane.xlu0 %1324
      %v1326 = vsel %vm362, %v1020, 0.0
      %1327 = vadd.xlane.f32.xlu0 %v1326
      %v1328 = vpop.xlane.xlu0 %1327
      %v1329 = vsel %vm362, %v1021, 0.0
      %1330 = vadd.xlane.f32.xlu0 %v1329
      %v1331 = vpop.xlane.xlu0 %1330
      %v1332 = vsel %vm362, %v1022, 0.0
      %1333 = vadd.xlane.f32.xlu0 %v1332
      %v1334 = vpop.xlane.xlu0 %1333
      %v1335 = vsel %vm362, %v1023, 0.0
      %1336 = vadd.xlane.f32.xlu0 %v1335
      %v1337 = vpop.xlane.xlu0 %1336
      %v1338 = vsel %vm362, %v1024, 0.0
      %1339 = vadd.xlane.f32.xlu0 %v1338
      %v1340 = vpop.xlane.xlu0 %1339
      %v1341 = vsel %vm362, %v1025, 0.0
      %1342 = vadd.xlane.f32.xlu0 %v1341
      %v1343 = vpop.xlane.xlu0 %1342
      %v1344 = vsel %vm362, %v1026, 0.0
      %1345 = vadd.xlane.f32.xlu0 %v1344
      %v1346 = vpop.xlane.xlu0 %1345
      %v1347 = vsel %vm362, %v1027, 0.0
      %1348 = vadd.xlane.f32.xlu0 %v1347
      %v1349 = vpop.xlane.xlu0 %1348
      %v1350 = vsel %vm362, %v1028, 0.0
      %1351 = vadd.xlane.f32.xlu0 %v1350
      %v1352 = vpop.xlane.xlu0 %1351
      %v1353 = vsel %vm362, %v1029, 0.0
      %1354 = vadd.xlane.f32.xlu0 %v1353
      %v1355 = vpop.xlane.xlu0 %1354
      %v1356 = vsel %vm362, %v1030, 0.0
      %1357 = vadd.xlane.f32.xlu0 %v1356
      %v1358 = vpop.xlane.xlu0 %1357
      %v1359 = vsel %vm362, %v1031, 0.0
      %1360 = vadd.xlane.f32.xlu0 %v1359
      %v1361 = vpop.xlane.xlu0 %1360
      %v1362 = vsel %vm362, %v1032, 0.0
      %1363 = vadd.xlane.f32.xlu0 %v1362
      %v1364 = vpop.xlane.xlu0 %1363
      %v1365 = vsel %vm362, %v1033, 0.0
      %1366 = vadd.xlane.f32.xlu0 %v1365
      %v1367 = vpop.xlane.xlu0 %1366
      %v1368 = vsel %vm362, %v1034, 0.0
      %1369 = vadd.xlane.f32.xlu0 %v1368
      %v1370 = vpop.xlane.xlu0 %1369
      %v1371 = vsel %vm362, %v1035, 0.0
      %1372 = vadd.xlane.f32.xlu0 %v1371
      %v1373 = vpop.xlane.xlu0 %1372
      %v1374 = vsel %vm362, %v1036, 0.0
      %1375 = vadd.xlane.f32.xlu0 %v1374
      %v1376 = vpop.xlane.xlu0 %1375
      %v1377 = vsel %vm362, %v1037, 0.0
      %1378 = vadd.xlane.f32.xlu0 %v1377
      %v1379 = vpop.xlane.xlu0 %1378
      %v1380 = vsel %vm362, %v1038, 0.0
      %1381 = vadd.xlane.f32.xlu0 %v1380
      %v1382 = vpop.xlane.xlu0 %1381
      %v1383 = vsel %vm362, %v1039, 0.0
      %1384 = vadd.xlane.f32.xlu0 %v1383
      %v1385 = vpop.xlane.xlu0 %1384
      %v1386 = vsel %vm362, %v1040, 0.0
      %1387 = vadd.xlane.f32.xlu0 %v1386
      %v1388 = vpop.xlane.xlu0 %1387
      %v1389 = vsel %vm362, %v1041, 0.0
      %1390 = vadd.xlane.f32.xlu0 %v1389
      %v1391 = vpop.xlane.xlu0 %1390
      %v1392 = vsel %vm362, %v1042, 0.0
      %1393 = vadd.xlane.f32.xlu0 %v1392
      %v1394 = vpop.xlane.xlu0 %1393
      %v1395 = vsel %vm362, %v1043, 0.0
      %1396 = vadd.xlane.f32.xlu0 %v1395
      %v1397 = vpop.xlane.xlu0 %1396
      %v1398 = vsel %vm362, %v1044, 0.0
      %1399 = vadd.xlane.f32.xlu0 %v1398
      %v1400 = vpop.xlane.xlu0 %1399
      %v1401 = vsel %vm362, %v1045, 0.0
      %1402 = vadd.xlane.f32.xlu0 %v1401
      %v1403 = vpop.xlane.xlu0 %1402
      %v1404 = vsel %vm362, %v1046, 0.0
      %1405 = vadd.xlane.f32.xlu0 %v1404
      %v1406 = vpop.xlane.xlu0 %1405
      %v1407 = vsel %vm362, %v1047, 0.0
      %1408 = vadd.xlane.f32.xlu0 %v1407
      %v1409 = vpop.xlane.xlu0 %1408
      %v1410 = vsel %vm362, %v1048, 0.0
      %1411 = vadd.xlane.f32.xlu0 %v1410
      %v1412 = vpop.xlane.xlu0 %1411
      %v1413 = vsel %vm362, %v1049, 0.0
      %1414 = vadd.xlane.f32.xlu0 %v1413
      %v1415 = vpop.xlane.xlu0 %1414
      %v1416 = vsel %vm362, %v1050, 0.0
      %1417 = vadd.xlane.f32.xlu0 %v1416
      %v1418 = vpop.xlane.xlu0 %1417
      %v1419 = vsel %vm362, %v1051, 0.0
      %1420 = vadd.xlane.f32.xlu0 %v1419
      %v1421 = vpop.xlane.xlu0 %1420
      %v1422 = vsel %vm362, %v1052, 0.0
      %1423 = vadd.xlane.f32.xlu0 %v1422
      %v1424 = vpop.xlane.xlu0 %1423
      %v1425 = vsel %vm362, %v1053, 0.0
      %1426 = vadd.xlane.f32.xlu0 %v1425
      %v1427 = vpop.xlane.xlu0 %1426
      %v1428 = vsel %vm362, %v1054, 0.0
      %1429 = vadd.xlane.f32.xlu0 %v1428
      %v1430 = vpop.xlane.xlu0 %1429
      %v1431 = vsel %vm362, %v1055, 0.0
      %1432 = vadd.xlane.f32.xlu0 %v1431
      %v1433 = vpop.xlane.xlu0 %1432
      %v1434 = vsel %vm362, %v1056, 0.0
      %1435 = vadd.xlane.f32.xlu0 %v1434
      %v1436 = vpop.xlane.xlu0 %1435
      %v1437 = vsel %vm362, %v1057, 0.0
      %1438 = vadd.xlane.f32.xlu0 %v1437
      %v1439 = vpop.xlane.xlu0 %1438
      %v1440 = vsel %vm362, %v1058, 0.0
      %1441 = vadd.xlane.f32.xlu0 %v1440
      %v1442 = vpop.xlane.xlu0 %1441
      %v1443 = vsel %vm362, %v1059, 0.0
      %1444 = vadd.xlane.f32.xlu0 %v1443
      %v1445 = vpop.xlane.xlu0 %1444
      %v1446 = vsel %vm362, %v1060, 0.0
      %1447 = vadd.xlane.f32.xlu0 %v1446
      %v1448 = vpop.xlane.xlu0 %1447
      %v1449 = vsel %vm362, %v1061, 0.0
      %1450 = vadd.xlane.f32.xlu0 %v1449
      %v1451 = vpop.xlane.xlu0 %1450
      %v1452 = vsel %vm362, %v1062, 0.0
      %1453 = vadd.xlane.f32.xlu0 %v1452
      %v1454 = vpop.xlane.xlu0 %1453
      %v1455 = vsel %vm362, %v1063, 0.0
      %1456 = vadd.xlane.f32.xlu0 %v1455
      %v1457 = vpop.xlane.xlu0 %1456
      %v1458 = vsel %vm362, %v1064, 0.0
      %1459 = vadd.xlane.f32.xlu0 %v1458
      %v1460 = vpop.xlane.xlu0 %1459
      %v1461 = vsel %vm362, %v1065, 0.0
      %1462 = vadd.xlane.f32.xlu0 %v1461
      %v1463 = vpop.xlane.xlu0 %1462
      %v1464 = vsel %vm362, %v1066, 0.0
      %1465 = vadd.xlane.f32.xlu0 %v1464
      %v1466 = vpop.xlane.xlu0 %1465
      %v1467 = vsel %vm362, %v1067, 0.0
      %1468 = vadd.xlane.f32.xlu0 %v1467
      %v1469 = vpop.xlane.xlu0 %1468
      %v1470 = vsel %vm362, %v1068, 0.0
      %1471 = vadd.xlane.f32.xlu0 %v1470
      %v1472 = vpop.xlane.xlu0 %1471
      %v1473 = vsel %vm362, %v1069, 0.0
      %1474 = vadd.xlane.f32.xlu0 %v1473
      %v1475 = vpop.xlane.xlu0 %1474
      %v1476 = vsel %vm362, %v1070, 0.0
      %1477 = vadd.xlane.f32.xlu0 %v1476
      %v1478 = vpop.xlane.xlu0 %1477
      %v1479 = vsel %vm362, %v1071, 0.0
      %1480 = vadd.xlane.f32.xlu0 %v1479
      %v1481 = vpop.xlane.xlu0 %1480
      %v1482 = vsel %vm362, %v1072, 0.0
      %1483 = vadd.xlane.f32.xlu0 %v1482
      %v1484 = vpop.xlane.xlu0 %1483
      %v1485 = vsel %vm362, %v1073, 0.0
      %1486 = vadd.xlane.f32.xlu0 %v1485
      %v1487 = vpop.xlane.xlu0 %1486
      %v1488 = vsel %vm362, %v1074, 0.0
      %1489 = vadd.xlane.f32.xlu0 %v1488
      %v1490 = vpop.xlane.xlu0 %1489
      %v1491 = vsel %vm362, %v1075, 0.0
      %1492 = vadd.xlane.f32.xlu0 %v1491
      %v1493 = vpop.xlane.xlu0 %1492
      %v1494 = vsel %vm362, %v1076, 0.0
      %1495 = vadd.xlane.f32.xlu0 %v1494
      %v1496 = vpop.xlane.xlu0 %1495
      %v1497 = vsel %vm362, %v1077, 0.0
      %1498 = vadd.xlane.f32.xlu0 %v1497
      %v1499 = vpop.xlane.xlu0 %1498
      %v1500 = vsel %vm362, %v1078, 0.0
      %1501 = vadd.xlane.f32.xlu0 %v1500
      %v1502 = vpop.xlane.xlu0 %1501
      %v1503 = vsel %vm362, %v1079, 0.0
      %1504 = vadd.xlane.f32.xlu0 %v1503
      %v1505 = vpop.xlane.xlu0 %1504
      %v1506 = vsel %vm362, %v1080, 0.0
      %1507 = vadd.xlane.f32.xlu0 %v1506
      %v1508 = vpop.xlane.xlu0 %1507
      %v1509 = vsel %vm362, %v1081, 0.0
      %1510 = vadd.xlane.f32.xlu0 %v1509
      %v1511 = vpop.xlane.xlu0 %1510
      %v1512 = vsel %vm362, %v1082, 0.0
      %1513 = vadd.xlane.f32.xlu0 %v1512
      %v1514 = vpop.xlane.xlu0 %1513
      %v1515 = vadd.f32 %v1085, 0.0
      %v1516 = vadd.f32 %v1088, 0.0
      %v1517 = vadd.f32 %v1091, 0.0
      %v1518 = vadd.f32 %v1094, 0.0
      %v1519 = vadd.f32 %v1097, 0.0
      %v1520 = vadd.f32 %v1100, 0.0
      %v1521 = vadd.f32 %v1103, 0.0
      %v1522 = vadd.f32 %v1106, 0.0
      %v1523 = vadd.f32 %v1109, 0.0
      %v1524 = vadd.f32 %v1112, 0.0
      %v1525 = vadd.f32 %v1115, 0.0
      %v1526 = vadd.f32 %v1118, 0.0
      %v1527 = vadd.f32 %v1121, 0.0
      %v1528 = vadd.f32 %v1124, 0.0
      %v1529 = vadd.f32 %v1127, 0.0
      %v1530 = vadd.f32 %v1130, 0.0
      %v1531 = vadd.f32 %v1133, 0.0
      %v1532 = vadd.f32 %v1136, 0.0
      %v1533 = vadd.f32 %v1139, 0.0
      %v1534 = vadd.f32 %v1142, 0.0
      %v1535 = vadd.f32 %v1145, 0.0
      %v1536 = vadd.f32 %v1148, 0.0
      %v1537 = vadd.f32 %v1151, 0.0
      %v1538 = vadd.f32 %v1154, 0.0
      %v1539 = vadd.f32 %v1157, 0.0
      %v1540 = vadd.f32 %v1160, 0.0
      %v1541 = vadd.f32 %v1163, 0.0
      %v1542 = vadd.f32 %v1166, 0.0
      %v1543 = vadd.f32 %v1169, 0.0
      %v1544 = vadd.f32 %v1172, 0.0
      %v1545 = vadd.f32 %v1175, 0.0
      %v1546 = vadd.f32 %v1178, 0.0
      %v1547 = vadd.f32 %v1181, 0.0
      %v1548 = vadd.f32 %v1184, 0.0
      %v1549 = vadd.f32 %v1187, 0.0
      %v1550 = vadd.f32 %v1190, 0.0
      %v1551 = vadd.f32 %v1193, 0.0
      %v1552 = vadd.f32 %v1196, 0.0
      %v1553 = vadd.f32 %v1199, 0.0
      %v1554 = vadd.f32 %v1202, 0.0
      %v1555 = vadd.f32 %v1205, 0.0
      %v1556 = vadd.f32 %v1208, 0.0
      %v1557 = vadd.f32 %v1211, 0.0
      %v1558 = vadd.f32 %v1214, 0.0
      %v1559 = vadd.f32 %v1217, 0.0
      %v1560 = vadd.f32 %v1220, 0.0
      %v1561 = vadd.f32 %v1223, 0.0
      %v1562 = vadd.f32 %v1226, 0.0
      %v1563 = vadd.f32 %v1229, 0.0
      %v1564 = vadd.f32 %v1232, 0.0
      %v1565 = vadd.f32 %v1235, 0.0
      %v1566 = vadd.f32 %v1238, 0.0
      %v1567 = vadd.f32 %v1241, 0.0
      %v1568 = vadd.f32 %v1244, 0.0
      %v1569 = vadd.f32 %v1247, 0.0
      %v1570 = vadd.f32 %v1250, 0.0
      %v1571 = vadd.f32 %v1253, 0.0
      %v1572 = vadd.f32 %v1256, 0.0
      %v1573 = vadd.f32 %v1259, 0.0
      %v1574 = vadd.f32 %v1262, 0.0
      %v1575 = vadd.f32 %v1265, 0.0
      %v1576 = vadd.f32 %v1268, 0.0
      %v1577 = vadd.f32 %v1271, 0.0
      %v1578 = vadd.f32 %v1274, 0.0
      %v1579 = vadd.f32 %v1277, 0.0
      %v1580 = vadd.f32 %v1280, 0.0
      %v1581 = vadd.f32 %v1283, 0.0
      %v1582 = vadd.f32 %v1286, 0.0
      %v1583 = vadd.f32 %v1289, 0.0
      %v1584 = vadd.f32 %v1292, 0.0
      %v1585 = vadd.f32 %v1295, 0.0
      %v1586 = vadd.f32 %v1298, 0.0
      %v1587 = vadd.f32 %v1301, 0.0
      %v1588 = vadd.f32 %v1304, 0.0
      %v1589 = vadd.f32 %v1307, 0.0
      %v1590 = vadd.f32 %v1310, 0.0
      %v1591 = vadd.f32 %v1313, 0.0
      %v1592 = vadd.f32 %v1316, 0.0
      %v1593 = vadd.f32 %v1319, 0.0
      %v1594 = vadd.f32 %v1322, 0.0
      %v1595 = vadd.f32 %v1325, 0.0
      %v1596 = vadd.f32 %v1328, 0.0
      %v1597 = vadd.f32 %v1331, 0.0
      %v1598 = vadd.f32 %v1334, 0.0
      %v1599 = vadd.f32 %v1337, 0.0
      %v1600 = vadd.f32 %v1340, 0.0
      %v1601 = vadd.f32 %v1343, 0.0
      %v1602 = vadd.f32 %v1346, 0.0
      %v1603 = vadd.f32 %v1349, 0.0
      %v1604 = vadd.f32 %v1352, 0.0
      %v1605 = vadd.f32 %v1355, 0.0
      %v1606 = vadd.f32 %v1358, 0.0
      %v1607 = vadd.f32 %v1361, 0.0
      %v1608 = vadd.f32 %v1364, 0.0
      %v1609 = vadd.f32 %v1367, 0.0
      %v1610 = vadd.f32 %v1370, 0.0
      %v1611 = vadd.f32 %v1373, 0.0
      %v1612 = vadd.f32 %v1376, 0.0
      %v1613 = vadd.f32 %v1379, 0.0
      %v1614 = vadd.f32 %v1382, 0.0
      %v1615 = vadd.f32 %v1385, 0.0
      %v1616 = vadd.f32 %v1388, 0.0
      %v1617 = vadd.f32 %v1391, 0.0
      %v1618 = vadd.f32 %v1394, 0.0
      %v1619 = vadd.f32 %v1397, 0.0
      %v1620 = vadd.f32 %v1400, 0.0
      %v1621 = vadd.f32 %v1403, 0.0
      %v1622 = vadd.f32 %v1406, 0.0
      %v1623 = vadd.f32 %v1409, 0.0
      %v1624 = vadd.f32 %v1412, 0.0
      %v1625 = vadd.f32 %v1415, 0.0
      %v1626 = vadd.f32 %v1418, 0.0
      %v1627 = vadd.f32 %v1421, 0.0
      %v1628 = vadd.f32 %v1424, 0.0
      %v1629 = vadd.f32 %v1427, 0.0
      %v1630 = vadd.f32 %v1430, 0.0
      %v1631 = vadd.f32 %v1433, 0.0
      %v1632 = vadd.f32 %v1436, 0.0
      %v1633 = vadd.f32 %v1439, 0.0
      %v1634 = vadd.f32 %v1442, 0.0
      %v1635 = vadd.f32 %v1445, 0.0
      %v1636 = vadd.f32 %v1448, 0.0
      %v1637 = vadd.f32 %v1451, 0.0
      %v1638 = vadd.f32 %v1454, 0.0
      %v1639 = vadd.f32 %v1457, 0.0
      %v1640 = vadd.f32 %v1460, 0.0
      %v1641 = vadd.f32 %v1463, 0.0
      %v1642 = vadd.f32 %v1466, 0.0
      %v1643 = vadd.f32 %v1469, 0.0
      %v1644 = vadd.f32 %v1472, 0.0
      %v1645 = vadd.f32 %v1475, 0.0
      %v1646 = vadd.f32 %v1478, 0.0
      %v1647 = vadd.f32 %v1481, 0.0
      %v1648 = vadd.f32 %v1484, 0.0
      %v1649 = vadd.f32 %v1487, 0.0
      %v1650 = vadd.f32 %v1490, 0.0
      %v1651 = vadd.f32 %v1493, 0.0
      %v1652 = vadd.f32 %v1496, 0.0
      %v1653 = vadd.f32 %v1499, 0.0
      %v1654 = vadd.f32 %v1502, 0.0
      %v1655 = vadd.f32 %v1505, 0.0
      %v1656 = vadd.f32 %v1508, 0.0
      %v1657 = vadd.f32 %v1511, 0.0
      %v1658 = vadd.f32 %v1514, 0.0
      %v1659 = vmul.f32 %v795, 0.020408163
      %v1660 = vmul.f32 %v796, 0.020408163
      %v1661 = vmul.f32 %v797, 0.020408163
      %v1662 = vmul.f32 %v798, 0.020408163
      %v1663 = vmul.f32 %v799, 0.020408163
      %v1664 = vmul.f32 %v800, 0.020408163
      %v1665 = vmul.f32 %v801, 0.020408163
      %v1666 = vmul.f32 %v802, 0.020408163
      %v1667 = vmul.f32 %v803, 0.020408163
      %v1668 = vmul.f32 %v804, 0.020408163
      %v1669 = vmul.f32 %v805, 0.020408163
      %v1670 = vmul.f32 %v806, 0.020408163
      %v1671 = vmul.f32 %v807, 0.020408163
      %v1672 = vmul.f32 %v808, 0.020408163
      %v1673 = vmul.f32 %v809, 0.020408163
      %v1674 = vmul.f32 %v810, 0.020408163
      %v1675 = vmul.f32 %v811, 0.020408163
      %v1676 = vmul.f32 %v812, 0.020408163
      %v1677 = vmul.f32 %v813, 0.020408163
      %v1678 = vmul.f32 %v814, 0.020408163
      %v1679 = vmul.f32 %v815, 0.020408163
      %v1680 = vmul.f32 %v816, 0.020408163
      %v1681 = vmul.f32 %v817, 0.020408163
      %v1682 = vmul.f32 %v818, 0.020408163
      %v1683 = vmul.f32 %v819, 0.020408163
      %v1684 = vmul.f32 %v820, 0.020408163
      %v1685 = vmul.f32 %v821, 0.020408163
      %v1686 = vmul.f32 %v822, 0.020408163
      %v1687 = vmul.f32 %v823, 0.020408163
      %v1688 = vmul.f32 %v824, 0.020408163
      %v1689 = vmul.f32 %v825, 0.020408163
      %v1690 = vmul.f32 %v826, 0.020408163
      %v1691 = vmul.f32 %v827, 0.020408163
      %v1692 = vmul.f32 %v828, 0.020408163
      %v1693 = vmul.f32 %v829, 0.020408163
      %v1694 = vmul.f32 %v830, 0.020408163
      %v1695 = vmul.f32 %v831, 0.020408163
      %v1696 = vmul.f32 %v832, 0.020408163
      %v1697 = vmul.f32 %v833, 0.020408163
      %v1698 = vmul.f32 %v834, 0.020408163
      %v1699 = vmul.f32 %v835, 0.020408163
      %v1700 = vmul.f32 %v836, 0.020408163
      %v1701 = vmul.f32 %v837, 0.020408163
      %v1702 = vmul.f32 %v838, 0.020408163
      %v1703 = vmul.f32 %v839, 0.020408163
      %v1704 = vmul.f32 %v840, 0.020408163
      %v1705 = vmul.f32 %v841, 0.020408163
      %v1706 = vmul.f32 %v842, 0.020408163
      %v1707 = vmul.f32 %v843, 0.020408163
      %v1708 = vmul.f32 %v844, 0.020408163
      %v1709 = vmul.f32 %v845, 0.020408163
      %v1710 = vmul.f32 %v846, 0.020408163
      %v1711 = vmul.f32 %v847, 0.020408163
      %v1712 = vmul.f32 %v848, 0.020408163
      %v1713 = vmul.f32 %v849, 0.020408163
      %v1714 = vmul.f32 %v850, 0.020408163
      %v1715 = vmul.f32 %v851, 0.020408163
      %v1716 = vmul.f32 %v852, 0.020408163
      %v1717 = vmul.f32 %v853, 0.020408163
      %v1718 = vmul.f32 %v854, 0.020408163
      %v1719 = vmul.f32 %v855, 0.020408163
      %v1720 = vmul.f32 %v856, 0.020408163
      %v1721 = vmul.f32 %v857, 0.020408163
      %v1722 = vmul.f32 %v858, 0.020408163
      %v1723 = vmul.f32 %v859, 0.020408163
      %v1724 = vmul.f32 %v860, 0.020408163
      %v1725 = vmul.f32 %v861, 0.020408163
      %v1726 = vmul.f32 %v862, 0.020408163
      %v1727 = vmul.f32 %v863, 0.020408163
      %v1728 = vmul.f32 %v864, 0.020408163
      %v1729 = vmul.f32 %v865, 0.020408163
      %v1730 = vmul.f32 %v866, 0.020408163
      %v1731 = vmul.f32 %v867, 0.020408163
      %v1732 = vmul.f32 %v868, 0.020408163
      %v1733 = vmul.f32 %v869, 0.020408163
      %v1734 = vmul.f32 %v870, 0.020408163
      %v1735 = vmul.f32 %v871, 0.020408163
      %v1736 = vmul.f32 %v872, 0.020408163
      %v1737 = vmul.f32 %v873, 0.020408163
      %v1738 = vmul.f32 %v874, 0.020408163
      %v1739 = vmul.f32 %v875, 0.020408163
      %v1740 = vmul.f32 %v876, 0.020408163
      %v1741 = vmul.f32 %v877, 0.020408163
      %v1742 = vmul.f32 %v878, 0.020408163
      %v1743 = vmul.f32 %v879, 0.020408163
      %v1744 = vmul.f32 %v880, 0.020408163
      %v1745 = vmul.f32 %v881, 0.020408163
      %v1746 = vmul.f32 %v882, 0.020408163
      %v1747 = vmul.f32 %v883, 0.020408163
      %v1748 = vmul.f32 %v884, 0.020408163
      %v1749 = vmul.f32 %v885, 0.020408163
      %v1750 = vmul.f32 %v886, 0.020408163
      %v1751 = vmul.f32 %v887, 0.020408163
      %v1752 = vmul.f32 %v888, 0.020408163
      %v1753 = vmul.f32 %v889, 0.020408163
      %v1754 = vmul.f32 %v890, 0.020408163
      %v1755 = vmul.f32 %v891, 0.020408163
      %v1756 = vmul.f32 %v892, 0.020408163
      %v1757 = vmul.f32 %v893, 0.020408163
      %v1758 = vmul.f32 %v894, 0.020408163
      %v1759 = vmul.f32 %v895, 0.020408163
      %v1760 = vmul.f32 %v896, 0.020408163
      %v1761 = vmul.f32 %v897, 0.020408163
      %v1762 = vmul.f32 %v898, 0.020408163
      %v1763 = vmul.f32 %v899, 0.020408163
      %v1764 = vmul.f32 %v900, 0.020408163
      %v1765 = vmul.f32 %v901, 0.020408163
      %v1766 = vmul.f32 %v902, 0.020408163
      %v1767 = vmul.f32 %v903, 0.020408163
      %v1768 = vmul.f32 %v904, 0.020408163
      %v1769 = vmul.f32 %v905, 0.020408163
      %v1770 = vmul.f32 %v906, 0.020408163
      %v1771 = vmul.f32 %v907, 0.020408163
      %v1772 = vmul.f32 %v908, 0.020408163
      %v1773 = vmul.f32 %v909, 0.020408163
      %v1774 = vmul.f32 %v910, 0.020408163
      %v1775 = vmul.f32 %v911, 0.020408163
      %v1776 = vmul.f32 %v912, 0.020408163
      %v1777 = vmul.f32 %v913, 0.020408163
      %v1778 = vmul.f32 %v914, 0.020408163
      %v1779 = vmul.f32 %v915, 0.020408163
      %v1780 = vmul.f32 %v916, 0.020408163
      %v1781 = vmul.f32 %v917, 0.020408163
      %v1782 = vmul.f32 %v918, 0.020408163
      %v1783 = vmul.f32 %v919, 0.020408163
      %v1784 = vmul.f32 %v920, 0.020408163
      %v1785 = vmul.f32 %v921, 0.020408163
      %v1786 = vmul.f32 %v922, 0.020408163
      %v1787 = vmul.f32 %v923, 0.020408163
      %v1788 = vmul.f32 %v924, 0.020408163
      %v1789 = vmul.f32 %v925, 0.020408163
      %v1790 = vmul.f32 %v926, 0.020408163
      %v1791 = vmul.f32 %v927, 0.020408163
      %v1792 = vmul.f32 %v928, 0.020408163
      %v1793 = vmul.f32 %v929, 0.020408163
      %v1794 = vmul.f32 %v930, 0.020408163
      %v1795 = vmul.f32 %v931, 0.020408163
      %v1796 = vmul.f32 %v932, 0.020408163
      %v1797 = vmul.f32 %v933, 0.020408163
      %v1798 = vmul.f32 %v934, 0.020408163
      %v1799 = vmul.f32 %v935, 0.020408163
      %v1800 = vmul.f32 %v936, 0.020408163
      %v1801 = vmul.f32 %v937, 0.020408163
      %v1802 = vmul.f32 %v938, 0.020408163
      %v1803 = vmul.f32 %v1515, 0.020408163
      %v1804 = vmul.f32 %v1516, 0.020408163
      %v1805 = vmul.f32 %v1517, 0.020408163
      %v1806 = vmul.f32 %v1518, 0.020408163
      %v1807 = vmul.f32 %v1519, 0.020408163
      %v1808 = vmul.f32 %v1520, 0.020408163
      %v1809 = vmul.f32 %v1521, 0.020408163
      %v1810 = vmul.f32 %v1522, 0.020408163
      %v1811 = vmul.f32 %v1523, 0.020408163
      %v1812 = vmul.f32 %v1524, 0.020408163
      %v1813 = vmul.f32 %v1525, 0.020408163
      %v1814 = vmul.f32 %v1526, 0.020408163
      %v1815 = vmul.f32 %v1527, 0.020408163
      %v1816 = vmul.f32 %v1528, 0.020408163
      %v1817 = vmul.f32 %v1529, 0.020408163
      %v1818 = vmul.f32 %v1530, 0.020408163
      %v1819 = vmul.f32 %v1531, 0.020408163
      %v1820 = vmul.f32 %v1532, 0.020408163
      %v1821 = vmul.f32 %v1533, 0.020408163
      %v1822 = vmul.f32 %v1534, 0.020408163
      %v1823 = vmul.f32 %v1535, 0.020408163
      %v1824 = vmul.f32 %v1536, 0.020408163
      %v1825 = vmul.f32 %v1537, 0.020408163
      %v1826 = vmul.f32 %v1538, 0.020408163
      %v1827 = vmul.f32 %v1539, 0.020408163
      %v1828 = vmul.f32 %v1540, 0.020408163
      %v1829 = vmul.f32 %v1541, 0.020408163
      %v1830 = vmul.f32 %v1542, 0.020408163
      %v1831 = vmul.f32 %v1543, 0.020408163
      %v1832 = vmul.f32 %v1544, 0.020408163
      %v1833 = vmul.f32 %v1545, 0.020408163
      %v1834 = vmul.f32 %v1546, 0.020408163
      %v1835 = vmul.f32 %v1547, 0.020408163
      %v1836 = vmul.f32 %v1548, 0.020408163
      %v1837 = vmul.f32 %v1549, 0.020408163
      %v1838 = vmul.f32 %v1550, 0.020408163
      %v1839 = vmul.f32 %v1551, 0.020408163
      %v1840 = vmul.f32 %v1552, 0.020408163
      %v1841 = vmul.f32 %v1553, 0.020408163
      %v1842 = vmul.f32 %v1554, 0.020408163
      %v1843 = vmul.f32 %v1555, 0.020408163
      %v1844 = vmul.f32 %v1556, 0.020408163
      %v1845 = vmul.f32 %v1557, 0.020408163
      %v1846 = vmul.f32 %v1558, 0.020408163
      %v1847 = vmul.f32 %v1559, 0.020408163
      %v1848 = vmul.f32 %v1560, 0.020408163
      %v1849 = vmul.f32 %v1561, 0.020408163
      %v1850 = vmul.f32 %v1562, 0.020408163
      %v1851 = vmul.f32 %v1563, 0.020408163
      %v1852 = vmul.f32 %v1564, 0.020408163
      %v1853 = vmul.f32 %v1565, 0.020408163
      %v1854 = vmul.f32 %v1566, 0.020408163
      %v1855 = vmul.f32 %v1567, 0.020408163
      %v1856 = vmul.f32 %v1568, 0.020408163
      %v1857 = vmul.f32 %v1569, 0.020408163
      %v1858 = vmul.f32 %v1570, 0.020408163
      %v1859 = vmul.f32 %v1571, 0.020408163
      %v1860 = vmul.f32 %v1572, 0.020408163
      %v1861 = vmul.f32 %v1573, 0.020408163
      %v1862 = vmul.f32 %v1574, 0.020408163
      %v1863 = vmul.f32 %v1575, 0.020408163
      %v1864 = vmul.f32 %v1576, 0.020408163
      %v1865 = vmul.f32 %v1577, 0.020408163
      %v1866 = vmul.f32 %v1578, 0.020408163
      %v1867 = vmul.f32 %v1579, 0.020408163
      %v1868 = vmul.f32 %v1580, 0.020408163
      %v1869 = vmul.f32 %v1581, 0.020408163
      %v1870 = vmul.f32 %v1582, 0.020408163
      %v1871 = vmul.f32 %v1583, 0.020408163
      %v1872 = vmul.f32 %v1584, 0.020408163
      %v1873 = vmul.f32 %v1585, 0.020408163
      %v1874 = vmul.f32 %v1586, 0.020408163
      %v1875 = vmul.f32 %v1587, 0.020408163
      %v1876 = vmul.f32 %v1588, 0.020408163
      %v1877 = vmul.f32 %v1589, 0.020408163
      %v1878 = vmul.f32 %v1590, 0.020408163
      %v1879 = vmul.f32 %v1591, 0.020408163
      %v1880 = vmul.f32 %v1592, 0.020408163
      %v1881 = vmul.f32 %v1593, 0.020408163
      %v1882 = vmul.f32 %v1594, 0.020408163
      %v1883 = vmul.f32 %v1595, 0.020408163
      %v1884 = vmul.f32 %v1596, 0.020408163
      %v1885 = vmul.f32 %v1597, 0.020408163
      %v1886 = vmul.f32 %v1598, 0.020408163
      %v1887 = vmul.f32 %v1599, 0.020408163
      %v1888 = vmul.f32 %v1600, 0.020408163
      %v1889 = vmul.f32 %v1601, 0.020408163
      %v1890 = vmul.f32 %v1602, 0.020408163
      %v1891 = vmul.f32 %v1603, 0.020408163
      %v1892 = vmul.f32 %v1604, 0.020408163
      %v1893 = vmul.f32 %v1605, 0.020408163
      %v1894 = vmul.f32 %v1606, 0.020408163
      %v1895 = vmul.f32 %v1607, 0.020408163
      %v1896 = vmul.f32 %v1608, 0.020408163
      %v1897 = vmul.f32 %v1609, 0.020408163
      %v1898 = vmul.f32 %v1610, 0.020408163
      %v1899 = vmul.f32 %v1611, 0.020408163
      %v1900 = vmul.f32 %v1612, 0.020408163
      %v1901 = vmul.f32 %v1613, 0.020408163
      %v1902 = vmul.f32 %v1614, 0.020408163
      %v1903 = vmul.f32 %v1615, 0.020408163
      %v1904 = vmul.f32 %v1616, 0.020408163
      %v1905 = vmul.f32 %v1617, 0.020408163
      %v1906 = vmul.f32 %v1618, 0.020408163
      %v1907 = vmul.f32 %v1619, 0.020408163
      %v1908 = vmul.f32 %v1620, 0.020408163
      %v1909 = vmul.f32 %v1621, 0.020408163
      %v1910 = vmul.f32 %v1622, 0.020408163
      %v1911 = vmul.f32 %v1623, 0.020408163
      %v1912 = vmul.f32 %v1624, 0.020408163
      %v1913 = vmul.f32 %v1625, 0.020408163
      %v1914 = vmul.f32 %v1626, 0.020408163
      %v1915 = vmul.f32 %v1627, 0.020408163
      %v1916 = vmul.f32 %v1628, 0.020408163
      %v1917 = vmul.f32 %v1629, 0.020408163
      %v1918 = vmul.f32 %v1630, 0.020408163
      %v1919 = vmul.f32 %v1631, 0.020408163
      %v1920 = vmul.f32 %v1632, 0.020408163
      %v1921 = vmul.f32 %v1633, 0.020408163
      %v1922 = vmul.f32 %v1634, 0.020408163
      %v1923 = vmul.f32 %v1635, 0.020408163
      %v1924 = vmul.f32 %v1636, 0.020408163
      %v1925 = vmul.f32 %v1637, 0.020408163
      %v1926 = vmul.f32 %v1638, 0.020408163
      %v1927 = vmul.f32 %v1639, 0.020408163
      %v1928 = vmul.f32 %v1640, 0.020408163
      %v1929 = vmul.f32 %v1641, 0.020408163
      %v1930 = vmul.f32 %v1642, 0.020408163
      %v1931 = vmul.f32 %v1643, 0.020408163
      %v1932 = vmul.f32 %v1644, 0.020408163
      %v1933 = vmul.f32 %v1645, 0.020408163
      %v1934 = vmul.f32 %v1646, 0.020408163
      %v1935 = vmul.f32 %v1647, 0.020408163
      %v1936 = vmul.f32 %v1648, 0.020408163
      %v1937 = vmul.f32 %v1649, 0.020408163
      %v1938 = vmul.f32 %v1650, 0.020408163
      %v1939 = vmul.f32 %v1651, 0.020408163
      %v1940 = vmul.f32 %v1652, 0.020408163
      %v1941 = vmul.f32 %v1653, 0.020408163
      %v1942 = vmul.f32 %v1654, 0.020408163
      %v1943 = vmul.f32 %v1655, 0.020408163
      %v1944 = vmul.f32 %v1656, 0.020408163
      %v1945 = vmul.f32 %v1657, 0.020408163
      %v1946 = vmul.f32 %v1658, 0.020408163
      %v1947 = vmul.f32 %v1659, %v1659
      %v1948 = vmul.f32 %v1660, %v1660
      %v1949 = vmul.f32 %v1661, %v1661
      %v1950 = vmul.f32 %v1662, %v1662
      %v1951 = vmul.f32 %v1663, %v1663
      %v1952 = vmul.f32 %v1664, %v1664
      %v1953 = vmul.f32 %v1665, %v1665
      %v1954 = vmul.f32 %v1666, %v1666
      %v1955 = vmul.f32 %v1667, %v1667
      %v1956 = vmul.f32 %v1668, %v1668
      %v1957 = vmul.f32 %v1669, %v1669
      %v1958 = vmul.f32 %v1670, %v1670
      %v1959 = vmul.f32 %v1671, %v1671
      %v1960 = vmul.f32 %v1672, %v1672
      %v1961 = vmul.f32 %v1673, %v1673
      %v1962 = vmul.f32 %v1674, %v1674
      %v1963 = vmul.f32 %v1675, %v1675
      %v1964 = vmul.f32 %v1676, %v1676
      %v1965 = vmul.f32 %v1677, %v1677
      %v1966 = vmul.f32 %v1678, %v1678
      %v1967 = vmul.f32 %v1679, %v1679
      %v1968 = vmul.f32 %v1680, %v1680
      %v1969 = vmul.f32 %v1681, %v1681
      %v1970 = vmul.f32 %v1682, %v1682
      %v1971 = vmul.f32 %v1683, %v1683
      %v1972 = vmul.f32 %v1684, %v1684
      %v1973 = vmul.f32 %v1685, %v1685
      %v1974 = vmul.f32 %v1686, %v1686
      %v1975 = vmul.f32 %v1687, %v1687
      %v1976 = vmul.f32 %v1688, %v1688
      %v1977 = vmul.f32 %v1689, %v1689
      %v1978 = vmul.f32 %v1690, %v1690
      %v1979 = vmul.f32 %v1691, %v1691
      %v1980 = vmul.f32 %v1692, %v1692
      %v1981 = vmul.f32 %v1693, %v1693
      %v1982 = vmul.f32 %v1694, %v1694
      %v1983 = vmul.f32 %v1695, %v1695
      %v1984 = vmul.f32 %v1696, %v1696
      %v1985 = vmul.f32 %v1697, %v1697
      %v1986 = vmul.f32 %v1698, %v1698
      %v1987 = vmul.f32 %v1699, %v1699
      %v1988 = vmul.f32 %v1700, %v1700
      %v1989 = vmul.f32 %v1701, %v1701
      %v1990 = vmul.f32 %v1702, %v1702
      %v1991 = vmul.f32 %v1703, %v1703
      %v1992 = vmul.f32 %v1704, %v1704
      %v1993 = vmul.f32 %v1705, %v1705
      %v1994 = vmul.f32 %v1706, %v1706
      %v1995 = vmul.f32 %v1707, %v1707
      %v1996 = vmul.f32 %v1708, %v1708
      %v1997 = vmul.f32 %v1709, %v1709
      %v1998 = vmul.f32 %v1710, %v1710
      %v1999 = vmul.f32 %v1711, %v1711
      %v2000 = vmul.f32 %v1712, %v1712
      %v2001 = vmul.f32 %v1713, %v1713
      %v2002 = vmul.f32 %v1714, %v1714
      %v2003 = vmul.f32 %v1715, %v1715
      %v2004 = vmul.f32 %v1716, %v1716
      %v2005 = vmul.f32 %v1717, %v1717
      %v2006 = vmul.f32 %v1718, %v1718
      %v2007 = vmul.f32 %v1719, %v1719
      %v2008 = vmul.f32 %v1720, %v1720
      %v2009 = vmul.f32 %v1721, %v1721
      %v2010 = vmul.f32 %v1722, %v1722
      %v2011 = vmul.f32 %v1723, %v1723
      %v2012 = vmul.f32 %v1724, %v1724
      %v2013 = vmul.f32 %v1725, %v1725
      %v2014 = vmul.f32 %v1726, %v1726
      %v2015 = vmul.f32 %v1727, %v1727
      %v2016 = vmul.f32 %v1728, %v1728
      %v2017 = vmul.f32 %v1729, %v1729
      %v2018 = vmul.f32 %v1730, %v1730
      %v2019 = vmul.f32 %v1731, %v1731
      %v2020 = vmul.f32 %v1732, %v1732
      %v2021 = vmul.f32 %v1733, %v1733
      %v2022 = vmul.f32 %v1734, %v1734
      %v2023 = vmul.f32 %v1735, %v1735
      %v2024 = vmul.f32 %v1736, %v1736
      %v2025 = vmul.f32 %v1737, %v1737
      %v2026 = vmul.f32 %v1738, %v1738
      %v2027 = vmul.f32 %v1739, %v1739
      %v2028 = vmul.f32 %v1740, %v1740
      %v2029 = vmul.f32 %v1741, %v1741
      %v2030 = vmul.f32 %v1742, %v1742
      %v2031 = vmul.f32 %v1743, %v1743
      %v2032 = vmul.f32 %v1744, %v1744
      %v2033 = vmul.f32 %v1745, %v1745
      %v2034 = vmul.f32 %v1746, %v1746
      %v2035 = vmul.f32 %v1747, %v1747
      %v2036 = vmul.f32 %v1748, %v1748
      %v2037 = vmul.f32 %v1749, %v1749
      %v2038 = vmul.f32 %v1750, %v1750
      %v2039 = vmul.f32 %v1751, %v1751
      %v2040 = vmul.f32 %v1752, %v1752
      %v2041 = vmul.f32 %v1753, %v1753
      %v2042 = vmul.f32 %v1754, %v1754
      %v2043 = vmul.f32 %v1755, %v1755
      %v2044 = vmul.f32 %v1756, %v1756
      %v2045 = vmul.f32 %v1757, %v1757
      %v2046 = vmul.f32 %v1758, %v1758
      %v2047 = vmul.f32 %v1759, %v1759
      %v2048 = vmul.f32 %v1760, %v1760
      %v2049 = vmul.f32 %v1761, %v1761
      %v2050 = vmul.f32 %v1762, %v1762
      %v2051 = vmul.f32 %v1763, %v1763
      %v2052 = vmul.f32 %v1764, %v1764
      %v2053 = vmul.f32 %v1765, %v1765
      %v2054 = vmul.f32 %v1766, %v1766
      %v2055 = vmul.f32 %v1767, %v1767
      %v2056 = vmul.f32 %v1768, %v1768
      %v2057 = vmul.f32 %v1769, %v1769
      %v2058 = vmul.f32 %v1770, %v1770
      %v2059 = vmul.f32 %v1771, %v1771
      %v2060 = vmul.f32 %v1772, %v1772
      %v2061 = vmul.f32 %v1773, %v1773
      %v2062 = vmul.f32 %v1774, %v1774
      %v2063 = vmul.f32 %v1775, %v1775
      %v2064 = vmul.f32 %v1776, %v1776
      %v2065 = vmul.f32 %v1777, %v1777
      %v2066 = vmul.f32 %v1778, %v1778
      %v2067 = vmul.f32 %v1779, %v1779
      %v2068 = vmul.f32 %v1780, %v1780
      %v2069 = vmul.f32 %v1781, %v1781
      %v2070 = vmul.f32 %v1782, %v1782
      %v2071 = vmul.f32 %v1783, %v1783
      %v2072 = vmul.f32 %v1784, %v1784
      %v2073 = vmul.f32 %v1785, %v1785
      %v2074 = vmul.f32 %v1786, %v1786
      %v2075 = vmul.f32 %v1787, %v1787
      %v2076 = vmul.f32 %v1788, %v1788
      %v2077 = vmul.f32 %v1789, %v1789
      %v2078 = vmul.f32 %v1790, %v1790
      %v2079 = vmul.f32 %v1791, %v1791
      %v2080 = vmul.f32 %v1792, %v1792
      %v2081 = vmul.f32 %v1793, %v1793
      %v2082 = vmul.f32 %v1794, %v1794
      %v2083 = vmul.f32 %v1795, %v1795
      %v2084 = vmul.f32 %v1796, %v1796
      %v2085 = vmul.f32 %v1797, %v1797
      %v2086 = vmul.f32 %v1798, %v1798
      %v2087 = vmul.f32 %v1799, %v1799
      %v2088 = vmul.f32 %v1800, %v1800
      %v2089 = vmul.f32 %v1801, %v1801
      %v2090 = vmul.f32 %v1802, %v1802
      %v2091 = vsub.f32 %v1803, %v1947
      %v2092 = vsub.f32 %v1804, %v1948
      %v2093 = vsub.f32 %v1805, %v1949
      %v2094 = vsub.f32 %v1806, %v1950
      %v2095 = vsub.f32 %v1807, %v1951
      %v2096 = vsub.f32 %v1808, %v1952
      %v2097 = vsub.f32 %v1809, %v1953
      %v2098 = vsub.f32 %v1810, %v1954
      %v2099 = vsub.f32 %v1811, %v1955
      %v2100 = vsub.f32 %v1812, %v1956
      %v2101 = vsub.f32 %v1813, %v1957
      %v2102 = vsub.f32 %v1814, %v1958
      %v2103 = vsub.f32 %v1815, %v1959
      %v2104 = vsub.f32 %v1816, %v1960
      %v2105 = vsub.f32 %v1817, %v1961
      %v2106 = vsub.f32 %v1818, %v1962
      %v2107 = vsub.f32 %v1819, %v1963
      %v2108 = vsub.f32 %v1820, %v1964
      %v2109 = vsub.f32 %v1821, %v1965
      %v2110 = vsub.f32 %v1822, %v1966
      %v2111 = vsub.f32 %v1823, %v1967
      %v2112 = vsub.f32 %v1824, %v1968
      %v2113 = vsub.f32 %v1825, %v1969
      %v2114 = vsub.f32 %v1826, %v1970
      %v2115 = vsub.f32 %v1827, %v1971
      %v2116 = vsub.f32 %v1828, %v1972
      %v2117 = vsub.f32 %v1829, %v1973
      %v2118 = vsub.f32 %v1830, %v1974
      %v2119 = vsub.f32 %v1831, %v1975
      %v2120 = vsub.f32 %v1832, %v1976
      %v2121 = vsub.f32 %v1833, %v1977
      %v2122 = vsub.f32 %v1834, %v1978
      %v2123 = vsub.f32 %v1835, %v1979
      %v2124 = vsub.f32 %v1836, %v1980
      %v2125 = vsub.f32 %v1837, %v1981
      %v2126 = vsub.f32 %v1838, %v1982
      %v2127 = vsub.f32 %v1839, %v1983
      %v2128 = vsub.f32 %v1840, %v1984
      %v2129 = vsub.f32 %v1841, %v1985
      %v2130 = vsub.f32 %v1842, %v1986
      %v2131 = vsub.f32 %v1843, %v1987
      %v2132 = vsub.f32 %v1844, %v1988
      %v2133 = vsub.f32 %v1845, %v1989
      %v2134 = vsub.f32 %v1846, %v1990
      %v2135 = vsub.f32 %v1847, %v1991
      %v2136 = vsub.f32 %v1848, %v1992
      %v2137 = vsub.f32 %v1849, %v1993
      %v2138 = vsub.f32 %v1850, %v1994
      %v2139 = vsub.f32 %v1851, %v1995
      %v2140 = vsub.f32 %v1852, %v1996
      %v2141 = vsub.f32 %v1853, %v1997
      %v2142 = vsub.f32 %v1854, %v1998
      %v2143 = vsub.f32 %v1855, %v1999
      %v2144 = vsub.f32 %v1856, %v2000
      %v2145 = vsub.f32 %v1857, %v2001
      %v2146 = vsub.f32 %v1858, %v2002
      %v2147 = vsub.f32 %v1859, %v2003
      %v2148 = vsub.f32 %v1860, %v2004
      %v2149 = vsub.f32 %v1861, %v2005
      %v2150 = vsub.f32 %v1862, %v2006
      %v2151 = vsub.f32 %v1863, %v2007
      %v2152 = vsub.f32 %v1864, %v2008
      %v2153 = vsub.f32 %v1865, %v2009
      %v2154 = vsub.f32 %v1866, %v2010
      %v2155 = vsub.f32 %v1867, %v2011
      %v2156 = vsub.f32 %v1868, %v2012
      %v2157 = vsub.f32 %v1869, %v2013
      %v2158 = vsub.f32 %v1870, %v2014
      %v2159 = vsub.f32 %v1871, %v2015
      %v2160 = vsub.f32 %v1872, %v2016
      %v2161 = vsub.f32 %v1873, %v2017
      %v2162 = vsub.f32 %v1874, %v2018
      %v2163 = vsub.f32 %v1875, %v2019
      %v2164 = vsub.f32 %v1876, %v2020
      %v2165 = vsub.f32 %v1877, %v2021
      %v2166 = vsub.f32 %v1878, %v2022
      %v2167 = vsub.f32 %v1879, %v2023
      %v2168 = vsub.f32 %v1880, %v2024
      %v2169 = vsub.f32 %v1881, %v2025
      %v2170 = vsub.f32 %v1882, %v2026
      %v2171 = vsub.f32 %v1883, %v2027
      %v2172 = vsub.f32 %v1884, %v2028
      %v2173 = vsub.f32 %v1885, %v2029
      %v2174 = vsub.f32 %v1886, %v2030
      %v2175 = vsub.f32 %v1887, %v2031
      %v2176 = vsub.f32 %v1888, %v2032
      %v2177 = vsub.f32 %v1889, %v2033
      %v2178 = vsub.f32 %v1890, %v2034
      %v2179 = vsub.f32 %v1891, %v2035
      %v2180 = vsub.f32 %v1892, %v2036
      %v2181 = vsub.f32 %v1893, %v2037
      %v2182 = vsub.f32 %v1894, %v2038
      %v2183 = vsub.f32 %v1895, %v2039
      %v2184 = vsub.f32 %v1896, %v2040
      %v2185 = vsub.f32 %v1897, %v2041
      %v2186 = vsub.f32 %v1898, %v2042
      %v2187 = vsub.f32 %v1899, %v2043
      %v2188 = vsub.f32 %v1900, %v2044
      %v2189 = vsub.f32 %v1901, %v2045
      %v2190 = vsub.f32 %v1902, %v2046
      %v2191 = vsub.f32 %v1903, %v2047
      %v2192 = vsub.f32 %v1904, %v2048
      %v2193 = vsub.f32 %v1905, %v2049
      %v2194 = vsub.f32 %v1906, %v2050
      %v2195 = vsub.f32 %v1907, %v2051
      %v2196 = vsub.f32 %v1908, %v2052
      %v2197 = vsub.f32 %v1909, %v2053
      %v2198 = vsub.f32 %v1910, %v2054
      %v2199 = vsub.f32 %v1911, %v2055
      %v2200 = vsub.f32 %v1912, %v2056
      %v2201 = vsub.f32 %v1913, %v2057
      %v2202 = vsub.f32 %v1914, %v2058
      %v2203 = vsub.f32 %v1915, %v2059
      %v2204 = vsub.f32 %v1916, %v2060
      %v2205 = vsub.f32 %v1917, %v2061
      %v2206 = vsub.f32 %v1918, %v2062
      %v2207 = vsub.f32 %v1919, %v2063
      %v2208 = vsub.f32 %v1920, %v2064
      %v2209 = vsub.f32 %v1921, %v2065
      %v2210 = vsub.f32 %v1922, %v2066
      %v2211 = vsub.f32 %v1923, %v2067
      %v2212 = vsub.f32 %v1924, %v2068
      %v2213 = vsub.f32 %v1925, %v2069
      %v2214 = vsub.f32 %v1926, %v2070
      %v2215 = vsub.f32 %v1927, %v2071
      %v2216 = vsub.f32 %v1928, %v2072
      %v2217 = vsub.f32 %v1929, %v2073
      %v2218 = vsub.f32 %v1930, %v2074
      %v2219 = vsub.f32 %v1931, %v2075
      %v2220 = vsub.f32 %v1932, %v2076
      %v2221 = vsub.f32 %v1933, %v2077
      %v2222 = vsub.f32 %v1934, %v2078
      %v2223 = vsub.f32 %v1935, %v2079
      %v2224 = vsub.f32 %v1936, %v2080
      %v2225 = vsub.f32 %v1937, %v2081
      %v2226 = vsub.f32 %v1938, %v2082
      %v2227 = vsub.f32 %v1939, %v2083
      %v2228 = vsub.f32 %v1940, %v2084
      %v2229 = vsub.f32 %v1941, %v2085
      %v2230 = vsub.f32 %v1942, %v2086
      %v2231 = vsub.f32 %v1943, %v2087
      %v2232 = vsub.f32 %v1944, %v2088
      %v2233 = vsub.f32 %v1945, %v2089
      %v2234 = vsub.f32 %v1946, %v2090
      %v2235 = vmax.f32 %v2091, 0.0
      %v2236 = vmax.f32 %v2092, 0.0
      %v2237 = vmax.f32 %v2093, 0.0
      %v2238 = vmax.f32 %v2094, 0.0
      %v2239 = vmax.f32 %v2095, 0.0
      %v2240 = vmax.f32 %v2096, 0.0
      %v2241 = vmax.f32 %v2097, 0.0
      %v2242 = vmax.f32 %v2098, 0.0
      %v2243 = vmax.f32 %v2099, 0.0
      %v2244 = vmax.f32 %v2100, 0.0
      %v2245 = vmax.f32 %v2101, 0.0
      %v2246 = vmax.f32 %v2102, 0.0
      %v2247 = vmax.f32 %v2103, 0.0
      %v2248 = vmax.f32 %v2104, 0.0
      %v2249 = vmax.f32 %v2105, 0.0
      %v2250 = vmax.f32 %v2106, 0.0
      %v2251 = vmax.f32 %v2107, 0.0
      %v2252 = vmax.f32 %v2108, 0.0
      %v2253 = vmax.f32 %v2109, 0.0
      %v2254 = vmax.f32 %v2110, 0.0
      %v2255 = vmax.f32 %v2111, 0.0
      %v2256 = vmax.f32 %v2112, 0.0
      %v2257 = vmax.f32 %v2113, 0.0
      %v2258 = vmax.f32 %v2114, 0.0
      %v2259 = vmax.f32 %v2115, 0.0
      %v2260 = vmax.f32 %v2116, 0.0
      %v2261 = vmax.f32 %v2117, 0.0
      %v2262 = vmax.f32 %v2118, 0.0
      %v2263 = vmax.f32 %v2119, 0.0
      %v2264 = vmax.f32 %v2120, 0.0
      %v2265 = vmax.f32 %v2121, 0.0
      %v2266 = vmax.f32 %v2122, 0.0
      %v2267 = vmax.f32 %v2123, 0.0
      %v2268 = vmax.f32 %v2124, 0.0
      %v2269 = vmax.f32 %v2125, 0.0
      %v2270 = vmax.f32 %v2126, 0.0
      %v2271 = vmax.f32 %v2127, 0.0
      %v2272 = vmax.f32 %v2128, 0.0
      %v2273 = vmax.f32 %v2129, 0.0
      %v2274 = vmax.f32 %v2130, 0.0
      %v2275 = vmax.f32 %v2131, 0.0
      %v2276 = vmax.f32 %v2132, 0.0
      %v2277 = vmax.f32 %v2133, 0.0
      %v2278 = vmax.f32 %v2134, 0.0
      %v2279 = vmax.f32 %v2135, 0.0
      %v2280 = vmax.f32 %v2136, 0.0
      %v2281 = vmax.f32 %v2137, 0.0
      %v2282 = vmax.f32 %v2138, 0.0
      %v2283 = vmax.f32 %v2139, 0.0
      %v2284 = vmax.f32 %v2140, 0.0
      %v2285 = vmax.f32 %v2141, 0.0
      %v2286 = vmax.f32 %v2142, 0.0
      %v2287 = vmax.f32 %v2143, 0.0
      %v2288 = vmax.f32 %v2144, 0.0
      %v2289 = vmax.f32 %v2145, 0.0
      %v2290 = vmax.f32 %v2146, 0.0
      %v2291 = vmax.f32 %v2147, 0.0
      %v2292 = vmax.f32 %v2148, 0.0
      %v2293 = vmax.f32 %v2149, 0.0
      %v2294 = vmax.f32 %v2150, 0.0
      %v2295 = vmax.f32 %v2151, 0.0
      %v2296 = vmax.f32 %v2152, 0.0
      %v2297 = vmax.f32 %v2153, 0.0
      %v2298 = vmax.f32 %v2154, 0.0
      %v2299 = vmax.f32 %v2155, 0.0
      %v2300 = vmax.f32 %v2156, 0.0
      %v2301 = vmax.f32 %v2157, 0.0
      %v2302 = vmax.f32 %v2158, 0.0
      %v2303 = vmax.f32 %v2159, 0.0
      %v2304 = vmax.f32 %v2160, 0.0
      %v2305 = vmax.f32 %v2161, 0.0
      %v2306 = vmax.f32 %v2162, 0.0
      %v2307 = vmax.f32 %v2163, 0.0
      %v2308 = vmax.f32 %v2164, 0.0
      %v2309 = vmax.f32 %v2165, 0.0
      %v2310 = vmax.f32 %v2166, 0.0
      %v2311 = vmax.f32 %v2167, 0.0
      %v2312 = vmax.f32 %v2168, 0.0
      %v2313 = vmax.f32 %v2169, 0.0
      %v2314 = vmax.f32 %v2170, 0.0
      %v2315 = vmax.f32 %v2171, 0.0
      %v2316 = vmax.f32 %v2172, 0.0
      %v2317 = vmax.f32 %v2173, 0.0
      %v2318 = vmax.f32 %v2174, 0.0
      %v2319 = vmax.f32 %v2175, 0.0
      %v2320 = vmax.f32 %v2176, 0.0
      %v2321 = vmax.f32 %v2177, 0.0
      %v2322 = vmax.f32 %v2178, 0.0
      %v2323 = vmax.f32 %v2179, 0.0
      %v2324 = vmax.f32 %v2180, 0.0
      %v2325 = vmax.f32 %v2181, 0.0
      %v2326 = vmax.f32 %v2182, 0.0
      %v2327 = vmax.f32 %v2183, 0.0
      %v2328 = vmax.f32 %v2184, 0.0
      %v2329 = vmax.f32 %v2185, 0.0
      %v2330 = vmax.f32 %v2186, 0.0
      %v2331 = vmax.f32 %v2187, 0.0
      %v2332 = vmax.f32 %v2188, 0.0
      %v2333 = vmax.f32 %v2189, 0.0
      %v2334 = vmax.f32 %v2190, 0.0
      %v2335 = vmax.f32 %v2191, 0.0
      %v2336 = vmax.f32 %v2192, 0.0
      %v2337 = vmax.f32 %v2193, 0.0
      %v2338 = vmax.f32 %v2194, 0.0
      %v2339 = vmax.f32 %v2195, 0.0
      %v2340 = vmax.f32 %v2196, 0.0
      %v2341 = vmax.f32 %v2197, 0.0
      %v2342 = vmax.f32 %v2198, 0.0
      %v2343 = vmax.f32 %v2199, 0.0
      %v2344 = vmax.f32 %v2200, 0.0
      %v2345 = vmax.f32 %v2201, 0.0
      %v2346 = vmax.f32 %v2202, 0.0
      %v2347 = vmax.f32 %v2203, 0.0
      %v2348 = vmax.f32 %v2204, 0.0
      %v2349 = vmax.f32 %v2205, 0.0
      %v2350 = vmax.f32 %v2206, 0.0
      %v2351 = vmax.f32 %v2207, 0.0
      %v2352 = vmax.f32 %v2208, 0.0
      %v2353 = vmax.f32 %v2209, 0.0
      %v2354 = vmax.f32 %v2210, 0.0
      %v2355 = vmax.f32 %v2211, 0.0
      %v2356 = vmax.f32 %v2212, 0.0
      %v2357 = vmax.f32 %v2213, 0.0
      %v2358 = vmax.f32 %v2214, 0.0
      %v2359 = vmax.f32 %v2215, 0.0
      %v2360 = vmax.f32 %v2216, 0.0
      %v2361 = vmax.f32 %v2217, 0.0
      %v2362 = vmax.f32 %v2218, 0.0
      %v2363 = vmax.f32 %v2219, 0.0
      %v2364 = vmax.f32 %v2220, 0.0
      %v2365 = vmax.f32 %v2221, 0.0
      %v2366 = vmax.f32 %v2222, 0.0
      %v2367 = vmax.f32 %v2223, 0.0
      %v2368 = vmax.f32 %v2224, 0.0
      %v2369 = vmax.f32 %v2225, 0.0
      %v2370 = vmax.f32 %v2226, 0.0
      %v2371 = vmax.f32 %v2227, 0.0
      %v2372 = vmax.f32 %v2228, 0.0
      %v2373 = vmax.f32 %v2229, 0.0
      %v2374 = vmax.f32 %v2230, 0.0
      %v2375 = vmax.f32 %v2231, 0.0
      %v2376 = vmax.f32 %v2232, 0.0
      %v2377 = vmax.f32 %v2233, 0.0
      %v2378 = vmax.f32 %v2234, 0.0
      %v2379 = vadd.f32 %v2235, 0.001
      %v2380 = vadd.f32 %v2236, 0.001
      %v2381 = vadd.f32 %v2237, 0.001
      %v2382 = vadd.f32 %v2238, 0.001
      %v2383 = vadd.f32 %v2239, 0.001
      %v2384 = vadd.f32 %v2240, 0.001
      %v2385 = vadd.f32 %v2241, 0.001
      %v2386 = vadd.f32 %v2242, 0.001
      %v2387 = vadd.f32 %v2243, 0.001
      %v2388 = vadd.f32 %v2244, 0.001
      %v2389 = vadd.f32 %v2245, 0.001
      %v2390 = vadd.f32 %v2246, 0.001
      %v2391 = vadd.f32 %v2247, 0.001
      %v2392 = vadd.f32 %v2248, 0.001
      %v2393 = vadd.f32 %v2249, 0.001
      %v2394 = vadd.f32 %v2250, 0.001
      %v2395 = vadd.f32 %v2251, 0.001
      %v2396 = vadd.f32 %v2252, 0.001
      %v2397 = vadd.f32 %v2253, 0.001
      %v2398 = vadd.f32 %v2254, 0.001
      %v2399 = vadd.f32 %v2255, 0.001
      %v2400 = vadd.f32 %v2256, 0.001
      %v2401 = vadd.f32 %v2257, 0.001
      %v2402 = vadd.f32 %v2258, 0.001
      %v2403 = vadd.f32 %v2259, 0.001
      %v2404 = vadd.f32 %v2260, 0.001
      %v2405 = vadd.f32 %v2261, 0.001
      %v2406 = vadd.f32 %v2262, 0.001
      %v2407 = vadd.f32 %v2263, 0.001
      %v2408 = vadd.f32 %v2264, 0.001
      %v2409 = vadd.f32 %v2265, 0.001
      %v2410 = vadd.f32 %v2266, 0.001
      %v2411 = vadd.f32 %v2267, 0.001
      %v2412 = vadd.f32 %v2268, 0.001
      %v2413 = vadd.f32 %v2269, 0.001
      %v2414 = vadd.f32 %v2270, 0.001
      %v2415 = vadd.f32 %v2271, 0.001
      %v2416 = vadd.f32 %v2272, 0.001
      %v2417 = vadd.f32 %v2273, 0.001
      %v2418 = vadd.f32 %v2274, 0.001
      %v2419 = vadd.f32 %v2275, 0.001
      %v2420 = vadd.f32 %v2276, 0.001
      %v2421 = vadd.f32 %v2277, 0.001
      %v2422 = vadd.f32 %v2278, 0.001
      %v2423 = vadd.f32 %v2279, 0.001
      %v2424 = vadd.f32 %v2280, 0.001
      %v2425 = vadd.f32 %v2281, 0.001
      %v2426 = vadd.f32 %v2282, 0.001
      %v2427 = vadd.f32 %v2283, 0.001
      %v2428 = vadd.f32 %v2284, 0.001
      %v2429 = vadd.f32 %v2285, 0.001
      %v2430 = vadd.f32 %v2286, 0.001
      %v2431 = vadd.f32 %v2287, 0.001
      %v2432 = vadd.f32 %v2288, 0.001
      %v2433 = vadd.f32 %v2289, 0.001
      %v2434 = vadd.f32 %v2290, 0.001
      %v2435 = vadd.f32 %v2291, 0.001
      %v2436 = vadd.f32 %v2292, 0.001
      %v2437 = vadd.f32 %v2293, 0.001
      %v2438 = vadd.f32 %v2294, 0.001
      %v2439 = vadd.f32 %v2295, 0.001
      %v2440 = vadd.f32 %v2296, 0.001
      %v2441 = vadd.f32 %v2297, 0.001
      %v2442 = vadd.f32 %v2298, 0.001
      %v2443 = vadd.f32 %v2299, 0.001
      %v2444 = vadd.f32 %v2300, 0.001
      %v2445 = vadd.f32 %v2301, 0.001
      %v2446 = vadd.f32 %v2302, 0.001
      %v2447 = vadd.f32 %v2303, 0.001
      %v2448 = vadd.f32 %v2304, 0.001
      %v2449 = vadd.f32 %v2305, 0.001
      %v2450 = vadd.f32 %v2306, 0.001
      %v2451 = vadd.f32 %v2307, 0.001
      %v2452 = vadd.f32 %v2308, 0.001
      %v2453 = vadd.f32 %v2309, 0.001
      %v2454 = vadd.f32 %v2310, 0.001
      %v2455 = vadd.f32 %v2311, 0.001
      %v2456 = vadd.f32 %v2312, 0.001
      %v2457 = vadd.f32 %v2313, 0.001
      %v2458 = vadd.f32 %v2314, 0.001
      %v2459 = vadd.f32 %v2315, 0.001
      %v2460 = vadd.f32 %v2316, 0.001
      %v2461 = vadd.f32 %v2317, 0.001
      %v2462 = vadd.f32 %v2318, 0.001
      %v2463 = vadd.f32 %v2319, 0.001
      %v2464 = vadd.f32 %v2320, 0.001
      %v2465 = vadd.f32 %v2321, 0.001
      %v2466 = vadd.f32 %v2322, 0.001
      %v2467 = vadd.f32 %v2323, 0.001
      %v2468 = vadd.f32 %v2324, 0.001
      %v2469 = vadd.f32 %v2325, 0.001
      %v2470 = vadd.f32 %v2326, 0.001
      %v2471 = vadd.f32 %v2327, 0.001
      %v2472 = vadd.f32 %v2328, 0.001
      %v2473 = vadd.f32 %v2329, 0.001
      %v2474 = vadd.f32 %v2330, 0.001
      %v2475 = vadd.f32 %v2331, 0.001
      %v2476 = vadd.f32 %v2332, 0.001
      %v2477 = vadd.f32 %v2333, 0.001
      %v2478 = vadd.f32 %v2334, 0.001
      %v2479 = vadd.f32 %v2335, 0.001
      %v2480 = vadd.f32 %v2336, 0.001
      %v2481 = vadd.f32 %v2337, 0.001
      %v2482 = vadd.f32 %v2338, 0.001
      %v2483 = vadd.f32 %v2339, 0.001
      %v2484 = vadd.f32 %v2340, 0.001
      %v2485 = vadd.f32 %v2341, 0.001
      %v2486 = vadd.f32 %v2342, 0.001
      %v2487 = vadd.f32 %v2343, 0.001
      %v2488 = vadd.f32 %v2344, 0.001
      %v2489 = vadd.f32 %v2345, 0.001
      %v2490 = vadd.f32 %v2346, 0.001
      %v2491 = vadd.f32 %v2347, 0.001
      %v2492 = vadd.f32 %v2348, 0.001
      %v2493 = vadd.f32 %v2349, 0.001
      %v2494 = vadd.f32 %v2350, 0.001
      %v2495 = vadd.f32 %v2351, 0.001
      %v2496 = vadd.f32 %v2352, 0.001
      %v2497 = vadd.f32 %v2353, 0.001
      %v2498 = vadd.f32 %v2354, 0.001
      %v2499 = vadd.f32 %v2355, 0.001
      %v2500 = vadd.f32 %v2356, 0.001
      %v2501 = vadd.f32 %v2357, 0.001
      %v2502 = vadd.f32 %v2358, 0.001
      %v2503 = vadd.f32 %v2359, 0.001
      %v2504 = vadd.f32 %v2360, 0.001
      %v2505 = vadd.f32 %v2361, 0.001
      %v2506 = vadd.f32 %v2362, 0.001
      %v2507 = vadd.f32 %v2363, 0.001
      %v2508 = vadd.f32 %v2364, 0.001
      %v2509 = vadd.f32 %v2365, 0.001
      %v2510 = vadd.f32 %v2366, 0.001
      %v2511 = vadd.f32 %v2367, 0.001
      %v2512 = vadd.f32 %v2368, 0.001
      %v2513 = vadd.f32 %v2369, 0.001
      %v2514 = vadd.f32 %v2370, 0.001
      %v2515 = vadd.f32 %v2371, 0.001
      %v2516 = vadd.f32 %v2372, 0.001
      %v2517 = vadd.f32 %v2373, 0.001
      %v2518 = vadd.f32 %v2374, 0.001
      %v2519 = vadd.f32 %v2375, 0.001
      %v2520 = vadd.f32 %v2376, 0.001
      %v2521 = vadd.f32 %v2377, 0.001
      %v2522 = vadd.f32 %v2378, 0.001
      %v2523 = vrsqrt.pop %v2379
      %v2524 = vmul.f32 %v2523, %v2379
      %v2525 = vmul.f32 %v2524, %v2523
      %v2526 = vmul.f32 0.5, %v2525
      %v2527 = vsub.f32 1.5, %v2526
      %v2528 = vmul.f32 %v2523, %v2527
      %vm2529 = vweird.f32 %v2379
      %vm2530 = vweird.f32 %v2523
      %vm2531 = vmor %vm2529, %vm2530
      %v2532 = vsel %vm2531, %v2523, %v2528
      %v2533 = vrsqrt.pop %v2380
      %v2534 = vmul.f32 %v2533, %v2380
      %v2535 = vmul.f32 %v2534, %v2533
      %v2536 = vmul.f32 0.5, %v2535
      %v2537 = vsub.f32 1.5, %v2536
      %v2538 = vmul.f32 %v2533, %v2537
      %vm2539 = vweird.f32 %v2380
      %vm2540 = vweird.f32 %v2533
      %vm2541 = vmor %vm2539, %vm2540
      %v2542 = vsel %vm2541, %v2533, %v2538
      %v2543 = vrsqrt.pop %v2381
      %v2544 = vmul.f32 %v2543, %v2381
      %v2545 = vmul.f32 %v2544, %v2543
      %v2546 = vmul.f32 0.5, %v2545
      %v2547 = vsub.f32 1.5, %v2546
      %v2548 = vmul.f32 %v2543, %v2547
      %vm2549 = vweird.f32 %v2381
      %vm2550 = vweird.f32 %v2543
      %vm2551 = vmor %vm2549, %vm2550
      %v2552 = vsel %vm2551, %v2543, %v2548
      %v2553 = vrsqrt.pop %v2382
      %v2554 = vmul.f32 %v2553, %v2382
      %v2555 = vmul.f32 %v2554, %v2553
      %v2556 = vmul.f32 0.5, %v2555
      %v2557 = vsub.f32 1.5, %v2556
      %v2558 = vmul.f32 %v2553, %v2557
      %vm2559 = vweird.f32 %v2382
      %vm2560 = vweird.f32 %v2553
      %vm2561 = vmor %vm2559, %vm2560
      %v2562 = vsel %vm2561, %v2553, %v2558
      %v2563 = vrsqrt.pop %v2383
      %v2564 = vmul.f32 %v2563, %v2383
      %v2565 = vmul.f32 %v2564, %v2563
      %v2566 = vmul.f32 0.5, %v2565
      %v2567 = vsub.f32 1.5, %v2566
      %v2568 = vmul.f32 %v2563, %v2567
      %vm2569 = vweird.f32 %v2383
      %vm2570 = vweird.f32 %v2563
      %vm2571 = vmor %vm2569, %vm2570
      %v2572 = vsel %vm2571, %v2563, %v2568
      %v2573 = vrsqrt.pop %v2384
      %v2574 = vmul.f32 %v2573, %v2384
      %v2575 = vmul.f32 %v2574, %v2573
      %v2576 = vmul.f32 0.5, %v2575
      %v2577 = vsub.f32 1.5, %v2576
      %v2578 = vmul.f32 %v2573, %v2577
      %vm2579 = vweird.f32 %v2384
      %vm2580 = vweird.f32 %v2573
      %vm2581 = vmor %vm2579, %vm2580
      %v2582 = vsel %vm2581, %v2573, %v2578
      %v2583 = vrsqrt.pop %v2385
      %v2584 = vmul.f32 %v2583, %v2385
      %v2585 = vmul.f32 %v2584, %v2583
      %v2586 = vmul.f32 0.5, %v2585
      %v2587 = vsub.f32 1.5, %v2586
      %v2588 = vmul.f32 %v2583, %v2587
      %vm2589 = vweird.f32 %v2385
      %vm2590 = vweird.f32 %v2583
      %vm2591 = vmor %vm2589, %vm2590
      %v2592 = vsel %vm2591, %v2583, %v2588
      %v2593 = vrsqrt.pop %v2386
      %v2594 = vmul.f32 %v2593, %v2386
      %v2595 = vmul.f32 %v2594, %v2593
      %v2596 = vmul.f32 0.5, %v2595
      %v2597 = vsub.f32 1.5, %v2596
      %v2598 = vmul.f32 %v2593, %v2597
      %vm2599 = vweird.f32 %v2386
      %vm2600 = vweird.f32 %v2593
      %vm2601 = vmor %vm2599, %vm2600
      %v2602 = vsel %vm2601, %v2593, %v2598
      %v2603 = vrsqrt.pop %v2387
      %v2604 = vmul.f32 %v2603, %v2387
      %v2605 = vmul.f32 %v2604, %v2603
      %v2606 = vmul.f32 0.5, %v2605
      %v2607 = vsub.f32 1.5, %v2606
      %v2608 = vmul.f32 %v2603, %v2607
      %vm2609 = vweird.f32 %v2387
      %vm2610 = vweird.f32 %v2603
      %vm2611 = vmor %vm2609, %vm2610
      %v2612 = vsel %vm2611, %v2603, %v2608
      %v2613 = vrsqrt.pop %v2388
      %v2614 = vmul.f32 %v2613, %v2388
      %v2615 = vmul.f32 %v2614, %v2613
      %v2616 = vmul.f32 0.5, %v2615
      %v2617 = vsub.f32 1.5, %v2616
      %v2618 = vmul.f32 %v2613, %v2617
      %vm2619 = vweird.f32 %v2388
      %vm2620 = vweird.f32 %v2613
      %vm2621 = vmor %vm2619, %vm2620
      %v2622 = vsel %vm2621, %v2613, %v2618
      %v2623 = vrsqrt.pop %v2389
      %v2624 = vmul.f32 %v2623, %v2389
      %v2625 = vmul.f32 %v2624, %v2623
      %v2626 = vmul.f32 0.5, %v2625
      %v2627 = vsub.f32 1.5, %v2626
      %v2628 = vmul.f32 %v2623, %v2627
      %vm2629 = vweird.f32 %v2389
      %vm2630 = vweird.f32 %v2623
      %vm2631 = vmor %vm2629, %vm2630
      %v2632 = vsel %vm2631, %v2623, %v2628
      %v2633 = vrsqrt.pop %v2390
      %v2634 = vmul.f32 %v2633, %v2390
      %v2635 = vmul.f32 %v2634, %v2633
      %v2636 = vmul.f32 0.5, %v2635
      %v2637 = vsub.f32 1.5, %v2636
      %v2638 = vmul.f32 %v2633, %v2637
      %vm2639 = vweird.f32 %v2390
      %vm2640 = vweird.f32 %v2633
      %vm2641 = vmor %vm2639, %vm2640
      %v2642 = vsel %vm2641, %v2633, %v2638
      %v2643 = vrsqrt.pop %v2391
      %v2644 = vmul.f32 %v2643, %v2391
      %v2645 = vmul.f32 %v2644, %v2643
      %v2646 = vmul.f32 0.5, %v2645
      %v2647 = vsub.f32 1.5, %v2646
      %v2648 = vmul.f32 %v2643, %v2647
      %vm2649 = vweird.f32 %v2391
      %vm2650 = vweird.f32 %v2643
      %vm2651 = vmor %vm2649, %vm2650
      %v2652 = vsel %vm2651, %v2643, %v2648
      %v2653 = vrsqrt.pop %v2392
      %v2654 = vmul.f32 %v2653, %v2392
      %v2655 = vmul.f32 %v2654, %v2653
      %v2656 = vmul.f32 0.5, %v2655
      %v2657 = vsub.f32 1.5, %v2656
      %v2658 = vmul.f32 %v2653, %v2657
      %vm2659 = vweird.f32 %v2392
      %vm2660 = vweird.f32 %v2653
      %vm2661 = vmor %vm2659, %vm2660
      %v2662 = vsel %vm2661, %v2653, %v2658
      %v2663 = vrsqrt.pop %v2393
      %v2664 = vmul.f32 %v2663, %v2393
      %v2665 = vmul.f32 %v2664, %v2663
      %v2666 = vmul.f32 0.5, %v2665
      %v2667 = vsub.f32 1.5, %v2666
      %v2668 = vmul.f32 %v2663, %v2667
      %vm2669 = vweird.f32 %v2393
      %vm2670 = vweird.f32 %v2663
      %vm2671 = vmor %vm2669, %vm2670
      %v2672 = vsel %vm2671, %v2663, %v2668
      %v2673 = vrsqrt.pop %v2394
      %v2674 = vmul.f32 %v2673, %v2394
      %v2675 = vmul.f32 %v2674, %v2673
      %v2676 = vmul.f32 0.5, %v2675
      %v2677 = vsub.f32 1.5, %v2676
      %v2678 = vmul.f32 %v2673, %v2677
      %vm2679 = vweird.f32 %v2394
      %vm2680 = vweird.f32 %v2673
      %vm2681 = vmor %vm2679, %vm2680
      %v2682 = vsel %vm2681, %v2673, %v2678
      %v2683 = vrsqrt.pop %v2395
      %v2684 = vmul.f32 %v2683, %v2395
      %v2685 = vmul.f32 %v2684, %v2683
      %v2686 = vmul.f32 0.5, %v2685
      %v2687 = vsub.f32 1.5, %v2686
      %v2688 = vmul.f32 %v2683, %v2687
      %vm2689 = vweird.f32 %v2395
      %vm2690 = vweird.f32 %v2683
      %vm2691 = vmor %vm2689, %vm2690
      %v2692 = vsel %vm2691, %v2683, %v2688
      %v2693 = vrsqrt.pop %v2396
      %v2694 = vmul.f32 %v2693, %v2396
      %v2695 = vmul.f32 %v2694, %v2693
      %v2696 = vmul.f32 0.5, %v2695
      %v2697 = vsub.f32 1.5, %v2696
      %v2698 = vmul.f32 %v2693, %v2697
      %vm2699 = vweird.f32 %v2396
      %vm2700 = vweird.f32 %v2693
      %vm2701 = vmor %vm2699, %vm2700
      %v2702 = vsel %vm2701, %v2693, %v2698
      %v2703 = vrsqrt.pop %v2397
      %v2704 = vmul.f32 %v2703, %v2397
      %v2705 = vmul.f32 %v2704, %v2703
      %v2706 = vmul.f32 0.5, %v2705
      %v2707 = vsub.f32 1.5, %v2706
      %v2708 = vmul.f32 %v2703, %v2707
      %vm2709 = vweird.f32 %v2397
      %vm2710 = vweird.f32 %v2703
      %vm2711 = vmor %vm2709, %vm2710
      %v2712 = vsel %vm2711, %v2703, %v2708
      %v2713 = vrsqrt.pop %v2398
      %v2714 = vmul.f32 %v2713, %v2398
      %v2715 = vmul.f32 %v2714, %v2713
      %v2716 = vmul.f32 0.5, %v2715
      %v2717 = vsub.f32 1.5, %v2716
      %v2718 = vmul.f32 %v2713, %v2717
      %vm2719 = vweird.f32 %v2398
      %vm2720 = vweird.f32 %v2713
      %vm2721 = vmor %vm2719, %vm2720
      %v2722 = vsel %vm2721, %v2713, %v2718
      %v2723 = vrsqrt.pop %v2399
      %v2724 = vmul.f32 %v2723, %v2399
      %v2725 = vmul.f32 %v2724, %v2723
      %v2726 = vmul.f32 0.5, %v2725
      %v2727 = vsub.f32 1.5, %v2726
      %v2728 = vmul.f32 %v2723, %v2727
      %vm2729 = vweird.f32 %v2399
      %vm2730 = vweird.f32 %v2723
      %vm2731 = vmor %vm2729, %vm2730
      %v2732 = vsel %vm2731, %v2723, %v2728
      %v2733 = vrsqrt.pop %v2400
      %v2734 = vmul.f32 %v2733, %v2400
      %v2735 = vmul.f32 %v2734, %v2733
      %v2736 = vmul.f32 0.5, %v2735
      %v2737 = vsub.f32 1.5, %v2736
      %v2738 = vmul.f32 %v2733, %v2737
      %vm2739 = vweird.f32 %v2400
      %vm2740 = vweird.f32 %v2733
      %vm2741 = vmor %vm2739, %vm2740
      %v2742 = vsel %vm2741, %v2733, %v2738
      %v2743 = vrsqrt.pop %v2401
      %v2744 = vmul.f32 %v2743, %v2401
      %v2745 = vmul.f32 %v2744, %v2743
      %v2746 = vmul.f32 0.5, %v2745
      %v2747 = vsub.f32 1.5, %v2746
      %v2748 = vmul.f32 %v2743, %v2747
      %vm2749 = vweird.f32 %v2401
      %vm2750 = vweird.f32 %v2743
      %vm2751 = vmor %vm2749, %vm2750
      %v2752 = vsel %vm2751, %v2743, %v2748
      %v2753 = vrsqrt.pop %v2402
      %v2754 = vmul.f32 %v2753, %v2402
      %v2755 = vmul.f32 %v2754, %v2753
      %v2756 = vmul.f32 0.5, %v2755
      %v2757 = vsub.f32 1.5, %v2756
      %v2758 = vmul.f32 %v2753, %v2757
      %vm2759 = vweird.f32 %v2402
      %vm2760 = vweird.f32 %v2753
      %vm2761 = vmor %vm2759, %vm2760
      %v2762 = vsel %vm2761, %v2753, %v2758
      %v2763 = vrsqrt.pop %v2403
      %v2764 = vmul.f32 %v2763, %v2403
      %v2765 = vmul.f32 %v2764, %v2763
      %v2766 = vmul.f32 0.5, %v2765
      %v2767 = vsub.f32 1.5, %v2766
      %v2768 = vmul.f32 %v2763, %v2767
      %vm2769 = vweird.f32 %v2403
      %vm2770 = vweird.f32 %v2763
      %vm2771 = vmor %vm2769, %vm2770
      %v2772 = vsel %vm2771, %v2763, %v2768
      %v2773 = vrsqrt.pop %v2404
      %v2774 = vmul.f32 %v2773, %v2404
      %v2775 = vmul.f32 %v2774, %v2773
      %v2776 = vmul.f32 0.5, %v2775
      %v2777 = vsub.f32 1.5, %v2776
      %v2778 = vmul.f32 %v2773, %v2777
      %vm2779 = vweird.f32 %v2404
      %vm2780 = vweird.f32 %v2773
      %vm2781 = vmor %vm2779, %vm2780
      %v2782 = vsel %vm2781, %v2773, %v2778
      %v2783 = vrsqrt.pop %v2405
      %v2784 = vmul.f32 %v2783, %v2405
      %v2785 = vmul.f32 %v2784, %v2783
      %v2786 = vmul.f32 0.5, %v2785
      %v2787 = vsub.f32 1.5, %v2786
      %v2788 = vmul.f32 %v2783, %v2787
      %vm2789 = vweird.f32 %v2405
      %vm2790 = vweird.f32 %v2783
      %vm2791 = vmor %vm2789, %vm2790
      %v2792 = vsel %vm2791, %v2783, %v2788
      %v2793 = vrsqrt.pop %v2406
      %v2794 = vmul.f32 %v2793, %v2406
      %v2795 = vmul.f32 %v2794, %v2793
      %v2796 = vmul.f32 0.5, %v2795
      %v2797 = vsub.f32 1.5, %v2796
      %v2798 = vmul.f32 %v2793, %v2797
      %vm2799 = vweird.f32 %v2406
      %vm2800 = vweird.f32 %v2793
      %vm2801 = vmor %vm2799, %vm2800
      %v2802 = vsel %vm2801, %v2793, %v2798
      %v2803 = vrsqrt.pop %v2407
      %v2804 = vmul.f32 %v2803, %v2407
      %v2805 = vmul.f32 %v2804, %v2803
      %v2806 = vmul.f32 0.5, %v2805
      %v2807 = vsub.f32 1.5, %v2806
      %v2808 = vmul.f32 %v2803, %v2807
      %vm2809 = vweird.f32 %v2407
      %vm2810 = vweird.f32 %v2803
      %vm2811 = vmor %vm2809, %vm2810
      %v2812 = vsel %vm2811, %v2803, %v2808
      %v2813 = vrsqrt.pop %v2408
      %v2814 = vmul.f32 %v2813, %v2408
      %v2815 = vmul.f32 %v2814, %v2813
      %v2816 = vmul.f32 0.5, %v2815
      %v2817 = vsub.f32 1.5, %v2816
      %v2818 = vmul.f32 %v2813, %v2817
      %vm2819 = vweird.f32 %v2408
      %vm2820 = vweird.f32 %v2813
      %vm2821 = vmor %vm2819, %vm2820
      %v2822 = vsel %vm2821, %v2813, %v2818
      %v2823 = vrsqrt.pop %v2409
      %v2824 = vmul.f32 %v2823, %v2409
      %v2825 = vmul.f32 %v2824, %v2823
      %v2826 = vmul.f32 0.5, %v2825
      %v2827 = vsub.f32 1.5, %v2826
      %v2828 = vmul.f32 %v2823, %v2827
      %vm2829 = vweird.f32 %v2409
      %vm2830 = vweird.f32 %v2823
      %vm2831 = vmor %vm2829, %vm2830
      %v2832 = vsel %vm2831, %v2823, %v2828
      %v2833 = vrsqrt.pop %v2410
      %v2834 = vmul.f32 %v2833, %v2410
      %v2835 = vmul.f32 %v2834, %v2833
      %v2836 = vmul.f32 0.5, %v2835
      %v2837 = vsub.f32 1.5, %v2836
      %v2838 = vmul.f32 %v2833, %v2837
      %vm2839 = vweird.f32 %v2410
      %vm2840 = vweird.f32 %v2833
      %vm2841 = vmor %vm2839, %vm2840
      %v2842 = vsel %vm2841, %v2833, %v2838
      %v2843 = vrsqrt.pop %v2411
      %v2844 = vmul.f32 %v2843, %v2411
      %v2845 = vmul.f32 %v2844, %v2843
      %v2846 = vmul.f32 0.5, %v2845
      %v2847 = vsub.f32 1.5, %v2846
      %v2848 = vmul.f32 %v2843, %v2847
      %vm2849 = vweird.f32 %v2411
      %vm2850 = vweird.f32 %v2843
      %vm2851 = vmor %vm2849, %vm2850
      %v2852 = vsel %vm2851, %v2843, %v2848
      %v2853 = vrsqrt.pop %v2412
      %v2854 = vmul.f32 %v2853, %v2412
      %v2855 = vmul.f32 %v2854, %v2853
      %v2856 = vmul.f32 0.5, %v2855
      %v2857 = vsub.f32 1.5, %v2856
      %v2858 = vmul.f32 %v2853, %v2857
      %vm2859 = vweird.f32 %v2412
      %vm2860 = vweird.f32 %v2853
      %vm2861 = vmor %vm2859, %vm2860
      %v2862 = vsel %vm2861, %v2853, %v2858
      %v2863 = vrsqrt.pop %v2413
      %v2864 = vmul.f32 %v2863, %v2413
      %v2865 = vmul.f32 %v2864, %v2863
      %v2866 = vmul.f32 0.5, %v2865
      %v2867 = vsub.f32 1.5, %v2866
      %v2868 = vmul.f32 %v2863, %v2867
      %vm2869 = vweird.f32 %v2413
      %vm2870 = vweird.f32 %v2863
      %vm2871 = vmor %vm2869, %vm2870
      %v2872 = vsel %vm2871, %v2863, %v2868
      %v2873 = vrsqrt.pop %v2414
      %v2874 = vmul.f32 %v2873, %v2414
      %v2875 = vmul.f32 %v2874, %v2873
      %v2876 = vmul.f32 0.5, %v2875
      %v2877 = vsub.f32 1.5, %v2876
      %v2878 = vmul.f32 %v2873, %v2877
      %vm2879 = vweird.f32 %v2414
      %vm2880 = vweird.f32 %v2873
      %vm2881 = vmor %vm2879, %vm2880
      %v2882 = vsel %vm2881, %v2873, %v2878
      %v2883 = vrsqrt.pop %v2415
      %v2884 = vmul.f32 %v2883, %v2415
      %v2885 = vmul.f32 %v2884, %v2883
      %v2886 = vmul.f32 0.5, %v2885
      %v2887 = vsub.f32 1.5, %v2886
      %v2888 = vmul.f32 %v2883, %v2887
      %vm2889 = vweird.f32 %v2415
      %vm2890 = vweird.f32 %v2883
      %vm2891 = vmor %vm2889, %vm2890
      %v2892 = vsel %vm2891, %v2883, %v2888
      %v2893 = vrsqrt.pop %v2416
      %v2894 = vmul.f32 %v2893, %v2416
      %v2895 = vmul.f32 %v2894, %v2893
      %v2896 = vmul.f32 0.5, %v2895
      %v2897 = vsub.f32 1.5, %v2896
      %v2898 = vmul.f32 %v2893, %v2897
      %vm2899 = vweird.f32 %v2416
      %vm2900 = vweird.f32 %v2893
      %vm2901 = vmor %vm2899, %vm2900
      %v2902 = vsel %vm2901, %v2893, %v2898
      %v2903 = vrsqrt.pop %v2417
      %v2904 = vmul.f32 %v2903, %v2417
      %v2905 = vmul.f32 %v2904, %v2903
      %v2906 = vmul.f32 0.5, %v2905
      %v2907 = vsub.f32 1.5, %v2906
      %v2908 = vmul.f32 %v2903, %v2907
      %vm2909 = vweird.f32 %v2417
      %vm2910 = vweird.f32 %v2903
      %vm2911 = vmor %vm2909, %vm2910
      %v2912 = vsel %vm2911, %v2903, %v2908
      %v2913 = vrsqrt.pop %v2418
      %v2914 = vmul.f32 %v2913, %v2418
      %v2915 = vmul.f32 %v2914, %v2913
      %v2916 = vmul.f32 0.5, %v2915
      %v2917 = vsub.f32 1.5, %v2916
      %v2918 = vmul.f32 %v2913, %v2917
      %vm2919 = vweird.f32 %v2418
      %vm2920 = vweird.f32 %v2913
      %vm2921 = vmor %vm2919, %vm2920
      %v2922 = vsel %vm2921, %v2913, %v2918
      %v2923 = vrsqrt.pop %v2419
      %v2924 = vmul.f32 %v2923, %v2419
      %v2925 = vmul.f32 %v2924, %v2923
      %v2926 = vmul.f32 0.5, %v2925
      %v2927 = vsub.f32 1.5, %v2926
      %v2928 = vmul.f32 %v2923, %v2927
      %vm2929 = vweird.f32 %v2419
      %vm2930 = vweird.f32 %v2923
      %vm2931 = vmor %vm2929, %vm2930
      %v2932 = vsel %vm2931, %v2923, %v2928
      %v2933 = vrsqrt.pop %v2420
      %v2934 = vmul.f32 %v2933, %v2420
      %v2935 = vmul.f32 %v2934, %v2933
      %v2936 = vmul.f32 0.5, %v2935
      %v2937 = vsub.f32 1.5, %v2936
      %v2938 = vmul.f32 %v2933, %v2937
      %vm2939 = vweird.f32 %v2420
      %vm2940 = vweird.f32 %v2933
      %vm2941 = vmor %vm2939, %vm2940
      %v2942 = vsel %vm2941, %v2933, %v2938
      %v2943 = vrsqrt.pop %v2421
      %v2944 = vmul.f32 %v2943, %v2421
      %v2945 = vmul.f32 %v2944, %v2943
      %v2946 = vmul.f32 0.5, %v2945
      %v2947 = vsub.f32 1.5, %v2946
      %v2948 = vmul.f32 %v2943, %v2947
      %vm2949 = vweird.f32 %v2421
      %vm2950 = vweird.f32 %v2943
      %vm2951 = vmor %vm2949, %vm2950
      %v2952 = vsel %vm2951, %v2943, %v2948
      %v2953 = vrsqrt.pop %v2422
      %v2954 = vmul.f32 %v2953, %v2422
      %v2955 = vmul.f32 %v2954, %v2953
      %v2956 = vmul.f32 0.5, %v2955
      %v2957 = vsub.f32 1.5, %v2956
      %v2958 = vmul.f32 %v2953, %v2957
      %vm2959 = vweird.f32 %v2422
      %vm2960 = vweird.f32 %v2953
      %vm2961 = vmor %vm2959, %vm2960
      %v2962 = vsel %vm2961, %v2953, %v2958
      %v2963 = vrsqrt.pop %v2423
      %v2964 = vmul.f32 %v2963, %v2423
      %v2965 = vmul.f32 %v2964, %v2963
      %v2966 = vmul.f32 0.5, %v2965
      %v2967 = vsub.f32 1.5, %v2966
      %v2968 = vmul.f32 %v2963, %v2967
      %vm2969 = vweird.f32 %v2423
      %vm2970 = vweird.f32 %v2963
      %vm2971 = vmor %vm2969, %vm2970
      %v2972 = vsel %vm2971, %v2963, %v2968
      %v2973 = vrsqrt.pop %v2424
      %v2974 = vmul.f32 %v2973, %v2424
      %v2975 = vmul.f32 %v2974, %v2973
      %v2976 = vmul.f32 0.5, %v2975
      %v2977 = vsub.f32 1.5, %v2976
      %v2978 = vmul.f32 %v2973, %v2977
      %vm2979 = vweird.f32 %v2424
      %vm2980 = vweird.f32 %v2973
      %vm2981 = vmor %vm2979, %vm2980
      %v2982 = vsel %vm2981, %v2973, %v2978
      %v2983 = vrsqrt.pop %v2425
      %v2984 = vmul.f32 %v2983, %v2425
      %v2985 = vmul.f32 %v2984, %v2983
      %v2986 = vmul.f32 0.5, %v2985
      %v2987 = vsub.f32 1.5, %v2986
      %v2988 = vmul.f32 %v2983, %v2987
      %vm2989 = vweird.f32 %v2425
      %vm2990 = vweird.f32 %v2983
      %vm2991 = vmor %vm2989, %vm2990
      %v2992 = vsel %vm2991, %v2983, %v2988
      %v2993 = vrsqrt.pop %v2426
      %v2994 = vmul.f32 %v2993, %v2426
      %v2995 = vmul.f32 %v2994, %v2993
      %v2996 = vmul.f32 0.5, %v2995
      %v2997 = vsub.f32 1.5, %v2996
      %v2998 = vmul.f32 %v2993, %v2997
      %vm2999 = vweird.f32 %v2426
      %vm3000 = vweird.f32 %v2993
      %vm3001 = vmor %vm2999, %vm3000
      %v3002 = vsel %vm3001, %v2993, %v2998
      %v3003 = vrsqrt.pop %v2427
      %v3004 = vmul.f32 %v3003, %v2427
      %v3005 = vmul.f32 %v3004, %v3003
      %v3006 = vmul.f32 0.5, %v3005
      %v3007 = vsub.f32 1.5, %v3006
      %v3008 = vmul.f32 %v3003, %v3007
      %vm3009 = vweird.f32 %v2427
      %vm3010 = vweird.f32 %v3003
      %vm3011 = vmor %vm3009, %vm3010
      %v3012 = vsel %vm3011, %v3003, %v3008
      %v3013 = vrsqrt.pop %v2428
      %v3014 = vmul.f32 %v3013, %v2428
      %v3015 = vmul.f32 %v3014, %v3013
      %v3016 = vmul.f32 0.5, %v3015
      %v3017 = vsub.f32 1.5, %v3016
      %v3018 = vmul.f32 %v3013, %v3017
      %vm3019 = vweird.f32 %v2428
      %vm3020 = vweird.f32 %v3013
      %vm3021 = vmor %vm3019, %vm3020
      %v3022 = vsel %vm3021, %v3013, %v3018
      %v3023 = vrsqrt.pop %v2429
      %v3024 = vmul.f32 %v3023, %v2429
      %v3025 = vmul.f32 %v3024, %v3023
      %v3026 = vmul.f32 0.5, %v3025
      %v3027 = vsub.f32 1.5, %v3026
      %v3028 = vmul.f32 %v3023, %v3027
      %vm3029 = vweird.f32 %v2429
      %vm3030 = vweird.f32 %v3023
      %vm3031 = vmor %vm3029, %vm3030
      %v3032 = vsel %vm3031, %v3023, %v3028
      %v3033 = vrsqrt.pop %v2430
      %v3034 = vmul.f32 %v3033, %v2430
      %v3035 = vmul.f32 %v3034, %v3033
      %v3036 = vmul.f32 0.5, %v3035
      %v3037 = vsub.f32 1.5, %v3036
      %v3038 = vmul.f32 %v3033, %v3037
      %vm3039 = vweird.f32 %v2430
      %vm3040 = vweird.f32 %v3033
      %vm3041 = vmor %vm3039, %vm3040
      %v3042 = vsel %vm3041, %v3033, %v3038
      %v3043 = vrsqrt.pop %v2431
      %v3044 = vmul.f32 %v3043, %v2431
      %v3045 = vmul.f32 %v3044, %v3043
      %v3046 = vmul.f32 0.5, %v3045
      %v3047 = vsub.f32 1.5, %v3046
      %v3048 = vmul.f32 %v3043, %v3047
      %vm3049 = vweird.f32 %v2431
      %vm3050 = vweird.f32 %v3043
      %vm3051 = vmor %vm3049, %vm3050
      %v3052 = vsel %vm3051, %v3043, %v3048
      %v3053 = vrsqrt.pop %v2432
      %v3054 = vmul.f32 %v3053, %v2432
      %v3055 = vmul.f32 %v3054, %v3053
      %v3056 = vmul.f32 0.5, %v3055
      %v3057 = vsub.f32 1.5, %v3056
      %v3058 = vmul.f32 %v3053, %v3057
      %vm3059 = vweird.f32 %v2432
      %vm3060 = vweird.f32 %v3053
      %vm3061 = vmor %vm3059, %vm3060
      %v3062 = vsel %vm3061, %v3053, %v3058
      %v3063 = vrsqrt.pop %v2433
      %v3064 = vmul.f32 %v3063, %v2433
      %v3065 = vmul.f32 %v3064, %v3063
      %v3066 = vmul.f32 0.5, %v3065
      %v3067 = vsub.f32 1.5, %v3066
      %v3068 = vmul.f32 %v3063, %v3067
      %vm3069 = vweird.f32 %v2433
      %vm3070 = vweird.f32 %v3063
      %vm3071 = vmor %vm3069, %vm3070
      %v3072 = vsel %vm3071, %v3063, %v3068
      %v3073 = vrsqrt.pop %v2434
      %v3074 = vmul.f32 %v3073, %v2434
      %v3075 = vmul.f32 %v3074, %v3073
      %v3076 = vmul.f32 0.5, %v3075
      %v3077 = vsub.f32 1.5, %v3076
      %v3078 = vmul.f32 %v3073, %v3077
      %vm3079 = vweird.f32 %v2434
      %vm3080 = vweird.f32 %v3073
      %vm3081 = vmor %vm3079, %vm3080
      %v3082 = vsel %vm3081, %v3073, %v3078
      %v3083 = vrsqrt.pop %v2435
      %v3084 = vmul.f32 %v3083, %v2435
      %v3085 = vmul.f32 %v3084, %v3083
      %v3086 = vmul.f32 0.5, %v3085
      %v3087 = vsub.f32 1.5, %v3086
      %v3088 = vmul.f32 %v3083, %v3087
      %vm3089 = vweird.f32 %v2435
      %vm3090 = vweird.f32 %v3083
      %vm3091 = vmor %vm3089, %vm3090
      %v3092 = vsel %vm3091, %v3083, %v3088
      %v3093 = vrsqrt.pop %v2436
      %v3094 = vmul.f32 %v3093, %v2436
      %v3095 = vmul.f32 %v3094, %v3093
      %v3096 = vmul.f32 0.5, %v3095
      %v3097 = vsub.f32 1.5, %v3096
      %v3098 = vmul.f32 %v3093, %v3097
      %vm3099 = vweird.f32 %v2436
      %vm3100 = vweird.f32 %v3093
      %vm3101 = vmor %vm3099, %vm3100
      %v3102 = vsel %vm3101, %v3093, %v3098
      %v3103 = vrsqrt.pop %v2437
      %v3104 = vmul.f32 %v3103, %v2437
      %v3105 = vmul.f32 %v3104, %v3103
      %v3106 = vmul.f32 0.5, %v3105
      %v3107 = vsub.f32 1.5, %v3106
      %v3108 = vmul.f32 %v3103, %v3107
      %vm3109 = vweird.f32 %v2437
      %vm3110 = vweird.f32 %v3103
      %vm3111 = vmor %vm3109, %vm3110
      %v3112 = vsel %vm3111, %v3103, %v3108
      %v3113 = vrsqrt.pop %v2438
      %v3114 = vmul.f32 %v3113, %v2438
      %v3115 = vmul.f32 %v3114, %v3113
      %v3116 = vmul.f32 0.5, %v3115
      %v3117 = vsub.f32 1.5, %v3116
      %v3118 = vmul.f32 %v3113, %v3117
      %vm3119 = vweird.f32 %v2438
      %vm3120 = vweird.f32 %v3113
      %vm3121 = vmor %vm3119, %vm3120
      %v3122 = vsel %vm3121, %v3113, %v3118
      %v3123 = vrsqrt.pop %v2439
      %v3124 = vmul.f32 %v3123, %v2439
      %v3125 = vmul.f32 %v3124, %v3123
      %v3126 = vmul.f32 0.5, %v3125
      %v3127 = vsub.f32 1.5, %v3126
      %v3128 = vmul.f32 %v3123, %v3127
      %vm3129 = vweird.f32 %v2439
      %vm3130 = vweird.f32 %v3123
      %vm3131 = vmor %vm3129, %vm3130
      %v3132 = vsel %vm3131, %v3123, %v3128
      %v3133 = vrsqrt.pop %v2440
      %v3134 = vmul.f32 %v3133, %v2440
      %v3135 = vmul.f32 %v3134, %v3133
      %v3136 = vmul.f32 0.5, %v3135
      %v3137 = vsub.f32 1.5, %v3136
      %v3138 = vmul.f32 %v3133, %v3137
      %vm3139 = vweird.f32 %v2440
      %vm3140 = vweird.f32 %v3133
      %vm3141 = vmor %vm3139, %vm3140
      %v3142 = vsel %vm3141, %v3133, %v3138
      %v3143 = vrsqrt.pop %v2441
      %v3144 = vmul.f32 %v3143, %v2441
      %v3145 = vmul.f32 %v3144, %v3143
      %v3146 = vmul.f32 0.5, %v3145
      %v3147 = vsub.f32 1.5, %v3146
      %v3148 = vmul.f32 %v3143, %v3147
      %vm3149 = vweird.f32 %v2441
      %vm3150 = vweird.f32 %v3143
      %vm3151 = vmor %vm3149, %vm3150
      %v3152 = vsel %vm3151, %v3143, %v3148
      %v3153 = vrsqrt.pop %v2442
      %v3154 = vmul.f32 %v3153, %v2442
      %v3155 = vmul.f32 %v3154, %v3153
      %v3156 = vmul.f32 0.5, %v3155
      %v3157 = vsub.f32 1.5, %v3156
      %v3158 = vmul.f32 %v3153, %v3157
      %vm3159 = vweird.f32 %v2442
      %vm3160 = vweird.f32 %v3153
      %vm3161 = vmor %vm3159, %vm3160
      %v3162 = vsel %vm3161, %v3153, %v3158
      %v3163 = vrsqrt.pop %v2443
      %v3164 = vmul.f32 %v3163, %v2443
      %v3165 = vmul.f32 %v3164, %v3163
      %v3166 = vmul.f32 0.5, %v3165
      %v3167 = vsub.f32 1.5, %v3166
      %v3168 = vmul.f32 %v3163, %v3167
      %vm3169 = vweird.f32 %v2443
      %vm3170 = vweird.f32 %v3163
      %vm3171 = vmor %vm3169, %vm3170
      %v3172 = vsel %vm3171, %v3163, %v3168
      %v3173 = vrsqrt.pop %v2444
      %v3174 = vmul.f32 %v3173, %v2444
      %v3175 = vmul.f32 %v3174, %v3173
      %v3176 = vmul.f32 0.5, %v3175
      %v3177 = vsub.f32 1.5, %v3176
      %v3178 = vmul.f32 %v3173, %v3177
      %vm3179 = vweird.f32 %v2444
      %vm3180 = vweird.f32 %v3173
      %vm3181 = vmor %vm3179, %vm3180
      %v3182 = vsel %vm3181, %v3173, %v3178
      %v3183 = vrsqrt.pop %v2445
      %v3184 = vmul.f32 %v3183, %v2445
      %v3185 = vmul.f32 %v3184, %v3183
      %v3186 = vmul.f32 0.5, %v3185
      %v3187 = vsub.f32 1.5, %v3186
      %v3188 = vmul.f32 %v3183, %v3187
      %vm3189 = vweird.f32 %v2445
      %vm3190 = vweird.f32 %v3183
      %vm3191 = vmor %vm3189, %vm3190
      %v3192 = vsel %vm3191, %v3183, %v3188
      %v3193 = vrsqrt.pop %v2446
      %v3194 = vmul.f32 %v3193, %v2446
      %v3195 = vmul.f32 %v3194, %v3193
      %v3196 = vmul.f32 0.5, %v3195
      %v3197 = vsub.f32 1.5, %v3196
      %v3198 = vmul.f32 %v3193, %v3197
      %vm3199 = vweird.f32 %v2446
      %vm3200 = vweird.f32 %v3193
      %vm3201 = vmor %vm3199, %vm3200
      %v3202 = vsel %vm3201, %v3193, %v3198
      %v3203 = vrsqrt.pop %v2447
      %v3204 = vmul.f32 %v3203, %v2447
      %v3205 = vmul.f32 %v3204, %v3203
      %v3206 = vmul.f32 0.5, %v3205
      %v3207 = vsub.f32 1.5, %v3206
      %v3208 = vmul.f32 %v3203, %v3207
      %vm3209 = vweird.f32 %v2447
      %vm3210 = vweird.f32 %v3203
      %vm3211 = vmor %vm3209, %vm3210
      %v3212 = vsel %vm3211, %v3203, %v3208
      %v3213 = vrsqrt.pop %v2448
      %v3214 = vmul.f32 %v3213, %v2448
      %v3215 = vmul.f32 %v3214, %v3213
      %v3216 = vmul.f32 0.5, %v3215
      %v3217 = vsub.f32 1.5, %v3216
      %v3218 = vmul.f32 %v3213, %v3217
      %vm3219 = vweird.f32 %v2448
      %vm3220 = vweird.f32 %v3213
      %vm3221 = vmor %vm3219, %vm3220
      %v3222 = vsel %vm3221, %v3213, %v3218
      %v3223 = vrsqrt.pop %v2449
      %v3224 = vmul.f32 %v3223, %v2449
      %v3225 = vmul.f32 %v3224, %v3223
      %v3226 = vmul.f32 0.5, %v3225
      %v3227 = vsub.f32 1.5, %v3226
      %v3228 = vmul.f32 %v3223, %v3227
      %vm3229 = vweird.f32 %v2449
      %vm3230 = vweird.f32 %v3223
      %vm3231 = vmor %vm3229, %vm3230
      %v3232 = vsel %vm3231, %v3223, %v3228
      %v3233 = vrsqrt.pop %v2450
      %v3234 = vmul.f32 %v3233, %v2450
      %v3235 = vmul.f32 %v3234, %v3233
      %v3236 = vmul.f32 0.5, %v3235
      %v3237 = vsub.f32 1.5, %v3236
      %v3238 = vmul.f32 %v3233, %v3237
      %vm3239 = vweird.f32 %v2450
      %vm3240 = vweird.f32 %v3233
      %vm3241 = vmor %vm3239, %vm3240
      %v3242 = vsel %vm3241, %v3233, %v3238
      %v3243 = vrsqrt.pop %v2451
      %v3244 = vmul.f32 %v3243, %v2451
      %v3245 = vmul.f32 %v3244, %v3243
      %v3246 = vmul.f32 0.5, %v3245
      %v3247 = vsub.f32 1.5, %v3246
      %v3248 = vmul.f32 %v3243, %v3247
      %vm3249 = vweird.f32 %v2451
      %vm3250 = vweird.f32 %v3243
      %vm3251 = vmor %vm3249, %vm3250
      %v3252 = vsel %vm3251, %v3243, %v3248
      %v3253 = vrsqrt.pop %v2452
      %v3254 = vmul.f32 %v3253, %v2452
      %v3255 = vmul.f32 %v3254, %v3253
      %v3256 = vmul.f32 0.5, %v3255
      %v3257 = vsub.f32 1.5, %v3256
      %v3258 = vmul.f32 %v3253, %v3257
      %vm3259 = vweird.f32 %v2452
      %vm3260 = vweird.f32 %v3253
      %vm3261 = vmor %vm3259, %vm3260
      %v3262 = vsel %vm3261, %v3253, %v3258
      %v3263 = vrsqrt.pop %v2453
      %v3264 = vmul.f32 %v3263, %v2453
      %v3265 = vmul.f32 %v3264, %v3263
      %v3266 = vmul.f32 0.5, %v3265
      %v3267 = vsub.f32 1.5, %v3266
      %v3268 = vmul.f32 %v3263, %v3267
      %vm3269 = vweird.f32 %v2453
      %vm3270 = vweird.f32 %v3263
      %vm3271 = vmor %vm3269, %vm3270
      %v3272 = vsel %vm3271, %v3263, %v3268
      %v3273 = vrsqrt.pop %v2454
      %v3274 = vmul.f32 %v3273, %v2454
      %v3275 = vmul.f32 %v3274, %v3273
      %v3276 = vmul.f32 0.5, %v3275
      %v3277 = vsub.f32 1.5, %v3276
      %v3278 = vmul.f32 %v3273, %v3277
      %vm3279 = vweird.f32 %v2454
      %vm3280 = vweird.f32 %v3273
      %vm3281 = vmor %vm3279, %vm3280
      %v3282 = vsel %vm3281, %v3273, %v3278
      %v3283 = vrsqrt.pop %v2455
      %v3284 = vmul.f32 %v3283, %v2455
      %v3285 = vmul.f32 %v3284, %v3283
      %v3286 = vmul.f32 0.5, %v3285
      %v3287 = vsub.f32 1.5, %v3286
      %v3288 = vmul.f32 %v3283, %v3287
      %vm3289 = vweird.f32 %v2455
      %vm3290 = vweird.f32 %v3283
      %vm3291 = vmor %vm3289, %vm3290
      %v3292 = vsel %vm3291, %v3283, %v3288
      %v3293 = vrsqrt.pop %v2456
      %v3294 = vmul.f32 %v3293, %v2456
      %v3295 = vmul.f32 %v3294, %v3293
      %v3296 = vmul.f32 0.5, %v3295
      %v3297 = vsub.f32 1.5, %v3296
      %v3298 = vmul.f32 %v3293, %v3297
      %vm3299 = vweird.f32 %v2456
      %vm3300 = vweird.f32 %v3293
      %vm3301 = vmor %vm3299, %vm3300
      %v3302 = vsel %vm3301, %v3293, %v3298
      %v3303 = vrsqrt.pop %v2457
      %v3304 = vmul.f32 %v3303, %v2457
      %v3305 = vmul.f32 %v3304, %v3303
      %v3306 = vmul.f32 0.5, %v3305
      %v3307 = vsub.f32 1.5, %v3306
      %v3308 = vmul.f32 %v3303, %v3307
      %vm3309 = vweird.f32 %v2457
      %vm3310 = vweird.f32 %v3303
      %vm3311 = vmor %vm3309, %vm3310
      %v3312 = vsel %vm3311, %v3303, %v3308
      %v3313 = vrsqrt.pop %v2458
      %v3314 = vmul.f32 %v3313, %v2458
      %v3315 = vmul.f32 %v3314, %v3313
      %v3316 = vmul.f32 0.5, %v3315
      %v3317 = vsub.f32 1.5, %v3316
      %v3318 = vmul.f32 %v3313, %v3317
      %vm3319 = vweird.f32 %v2458
      %vm3320 = vweird.f32 %v3313
      %vm3321 = vmor %vm3319, %vm3320
      %v3322 = vsel %vm3321, %v3313, %v3318
      %v3323 = vrsqrt.pop %v2459
      %v3324 = vmul.f32 %v3323, %v2459
      %v3325 = vmul.f32 %v3324, %v3323
      %v3326 = vmul.f32 0.5, %v3325
      %v3327 = vsub.f32 1.5, %v3326
      %v3328 = vmul.f32 %v3323, %v3327
      %vm3329 = vweird.f32 %v2459
      %vm3330 = vweird.f32 %v3323
      %vm3331 = vmor %vm3329, %vm3330
      %v3332 = vsel %vm3331, %v3323, %v3328
      %v3333 = vrsqrt.pop %v2460
      %v3334 = vmul.f32 %v3333, %v2460
      %v3335 = vmul.f32 %v3334, %v3333
      %v3336 = vmul.f32 0.5, %v3335
      %v3337 = vsub.f32 1.5, %v3336
      %v3338 = vmul.f32 %v3333, %v3337
      %vm3339 = vweird.f32 %v2460
      %vm3340 = vweird.f32 %v3333
      %vm3341 = vmor %vm3339, %vm3340
      %v3342 = vsel %vm3341, %v3333, %v3338
      %v3343 = vrsqrt.pop %v2461
      %v3344 = vmul.f32 %v3343, %v2461
      %v3345 = vmul.f32 %v3344, %v3343
      %v3346 = vmul.f32 0.5, %v3345
      %v3347 = vsub.f32 1.5, %v3346
      %v3348 = vmul.f32 %v3343, %v3347
      %vm3349 = vweird.f32 %v2461
      %vm3350 = vweird.f32 %v3343
      %vm3351 = vmor %vm3349, %vm3350
      %v3352 = vsel %vm3351, %v3343, %v3348
      %v3353 = vrsqrt.pop %v2462
      %v3354 = vmul.f32 %v3353, %v2462
      %v3355 = vmul.f32 %v3354, %v3353
      %v3356 = vmul.f32 0.5, %v3355
      %v3357 = vsub.f32 1.5, %v3356
      %v3358 = vmul.f32 %v3353, %v3357
      %vm3359 = vweird.f32 %v2462
      %vm3360 = vweird.f32 %v3353
      %vm3361 = vmor %vm3359, %vm3360
      %v3362 = vsel %vm3361, %v3353, %v3358
      %v3363 = vrsqrt.pop %v2463
      %v3364 = vmul.f32 %v3363, %v2463
      %v3365 = vmul.f32 %v3364, %v3363
      %v3366 = vmul.f32 0.5, %v3365
      %v3367 = vsub.f32 1.5, %v3366
      %v3368 = vmul.f32 %v3363, %v3367
      %vm3369 = vweird.f32 %v2463
      %vm3370 = vweird.f32 %v3363
      %vm3371 = vmor %vm3369, %vm3370
      %v3372 = vsel %vm3371, %v3363, %v3368
      %v3373 = vrsqrt.pop %v2464
      %v3374 = vmul.f32 %v3373, %v2464
      %v3375 = vmul.f32 %v3374, %v3373
      %v3376 = vmul.f32 0.5, %v3375
      %v3377 = vsub.f32 1.5, %v3376
      %v3378 = vmul.f32 %v3373, %v3377
      %vm3379 = vweird.f32 %v2464
      %vm3380 = vweird.f32 %v3373
      %vm3381 = vmor %vm3379, %vm3380
      %v3382 = vsel %vm3381, %v3373, %v3378
      %v3383 = vrsqrt.pop %v2465
      %v3384 = vmul.f32 %v3383, %v2465
      %v3385 = vmul.f32 %v3384, %v3383
      %v3386 = vmul.f32 0.5, %v3385
      %v3387 = vsub.f32 1.5, %v3386
      %v3388 = vmul.f32 %v3383, %v3387
      %vm3389 = vweird.f32 %v2465
      %vm3390 = vweird.f32 %v3383
      %vm3391 = vmor %vm3389, %vm3390
      %v3392 = vsel %vm3391, %v3383, %v3388
      %v3393 = vrsqrt.pop %v2466
      %v3394 = vmul.f32 %v3393, %v2466
      %v3395 = vmul.f32 %v3394, %v3393
      %v3396 = vmul.f32 0.5, %v3395
      %v3397 = vsub.f32 1.5, %v3396
      %v3398 = vmul.f32 %v3393, %v3397
      %vm3399 = vweird.f32 %v2466
      %vm3400 = vweird.f32 %v3393
      %vm3401 = vmor %vm3399, %vm3400
      %v3402 = vsel %vm3401, %v3393, %v3398
      %v3403 = vrsqrt.pop %v2467
      %v3404 = vmul.f32 %v3403, %v2467
      %v3405 = vmul.f32 %v3404, %v3403
      %v3406 = vmul.f32 0.5, %v3405
      %v3407 = vsub.f32 1.5, %v3406
      %v3408 = vmul.f32 %v3403, %v3407
      %vm3409 = vweird.f32 %v2467
      %vm3410 = vweird.f32 %v3403
      %vm3411 = vmor %vm3409, %vm3410
      %v3412 = vsel %vm3411, %v3403, %v3408
      %v3413 = vrsqrt.pop %v2468
      %v3414 = vmul.f32 %v3413, %v2468
      %v3415 = vmul.f32 %v3414, %v3413
      %v3416 = vmul.f32 0.5, %v3415
      %v3417 = vsub.f32 1.5, %v3416
      %v3418 = vmul.f32 %v3413, %v3417
      %vm3419 = vweird.f32 %v2468
      %vm3420 = vweird.f32 %v3413
      %vm3421 = vmor %vm3419, %vm3420
      %v3422 = vsel %vm3421, %v3413, %v3418
      %v3423 = vrsqrt.pop %v2469
      %v3424 = vmul.f32 %v3423, %v2469
      %v3425 = vmul.f32 %v3424, %v3423
      %v3426 = vmul.f32 0.5, %v3425
      %v3427 = vsub.f32 1.5, %v3426
      %v3428 = vmul.f32 %v3423, %v3427
      %vm3429 = vweird.f32 %v2469
      %vm3430 = vweird.f32 %v3423
      %vm3431 = vmor %vm3429, %vm3430
      %v3432 = vsel %vm3431, %v3423, %v3428
      %v3433 = vrsqrt.pop %v2470
      %v3434 = vmul.f32 %v3433, %v2470
      %v3435 = vmul.f32 %v3434, %v3433
      %v3436 = vmul.f32 0.5, %v3435
      %v3437 = vsub.f32 1.5, %v3436
      %v3438 = vmul.f32 %v3433, %v3437
      %vm3439 = vweird.f32 %v2470
      %vm3440 = vweird.f32 %v3433
      %vm3441 = vmor %vm3439, %vm3440
      %v3442 = vsel %vm3441, %v3433, %v3438
      %v3443 = vrsqrt.pop %v2471
      %v3444 = vmul.f32 %v3443, %v2471
      %v3445 = vmul.f32 %v3444, %v3443
      %v3446 = vmul.f32 0.5, %v3445
      %v3447 = vsub.f32 1.5, %v3446
      %v3448 = vmul.f32 %v3443, %v3447
      %vm3449 = vweird.f32 %v2471
      %vm3450 = vweird.f32 %v3443
      %vm3451 = vmor %vm3449, %vm3450
      %v3452 = vsel %vm3451, %v3443, %v3448
      %v3453 = vrsqrt.pop %v2472
      %v3454 = vmul.f32 %v3453, %v2472
      %v3455 = vmul.f32 %v3454, %v3453
      %v3456 = vmul.f32 0.5, %v3455
      %v3457 = vsub.f32 1.5, %v3456
      %v3458 = vmul.f32 %v3453, %v3457
      %vm3459 = vweird.f32 %v2472
      %vm3460 = vweird.f32 %v3453
      %vm3461 = vmor %vm3459, %vm3460
      %v3462 = vsel %vm3461, %v3453, %v3458
      %v3463 = vrsqrt.pop %v2473
      %v3464 = vmul.f32 %v3463, %v2473
      %v3465 = vmul.f32 %v3464, %v3463
      %v3466 = vmul.f32 0.5, %v3465
      %v3467 = vsub.f32 1.5, %v3466
      %v3468 = vmul.f32 %v3463, %v3467
      %vm3469 = vweird.f32 %v2473
      %vm3470 = vweird.f32 %v3463
      %vm3471 = vmor %vm3469, %vm3470
      %v3472 = vsel %vm3471, %v3463, %v3468
      %v3473 = vrsqrt.pop %v2474
      %v3474 = vmul.f32 %v3473, %v2474
      %v3475 = vmul.f32 %v3474, %v3473
      %v3476 = vmul.f32 0.5, %v3475
      %v3477 = vsub.f32 1.5, %v3476
      %v3478 = vmul.f32 %v3473, %v3477
      %vm3479 = vweird.f32 %v2474
      %vm3480 = vweird.f32 %v3473
      %vm3481 = vmor %vm3479, %vm3480
      %v3482 = vsel %vm3481, %v3473, %v3478
      %v3483 = vrsqrt.pop %v2475
      %v3484 = vmul.f32 %v3483, %v2475
      %v3485 = vmul.f32 %v3484, %v3483
      %v3486 = vmul.f32 0.5, %v3485
      %v3487 = vsub.f32 1.5, %v3486
      %v3488 = vmul.f32 %v3483, %v3487
      %vm3489 = vweird.f32 %v2475
      %vm3490 = vweird.f32 %v3483
      %vm3491 = vmor %vm3489, %vm3490
      %v3492 = vsel %vm3491, %v3483, %v3488
      %v3493 = vrsqrt.pop %v2476
      %v3494 = vmul.f32 %v3493, %v2476
      %v3495 = vmul.f32 %v3494, %v3493
      %v3496 = vmul.f32 0.5, %v3495
      %v3497 = vsub.f32 1.5, %v3496
      %v3498 = vmul.f32 %v3493, %v3497
      %vm3499 = vweird.f32 %v2476
      %vm3500 = vweird.f32 %v3493
      %vm3501 = vmor %vm3499, %vm3500
      %v3502 = vsel %vm3501, %v3493, %v3498
      %v3503 = vrsqrt.pop %v2477
      %v3504 = vmul.f32 %v3503, %v2477
      %v3505 = vmul.f32 %v3504, %v3503
      %v3506 = vmul.f32 0.5, %v3505
      %v3507 = vsub.f32 1.5, %v3506
      %v3508 = vmul.f32 %v3503, %v3507
      %vm3509 = vweird.f32 %v2477
      %vm3510 = vweird.f32 %v3503
      %vm3511 = vmor %vm3509, %vm3510
      %v3512 = vsel %vm3511, %v3503, %v3508
      %v3513 = vrsqrt.pop %v2478
      %v3514 = vmul.f32 %v3513, %v2478
      %v3515 = vmul.f32 %v3514, %v3513
      %v3516 = vmul.f32 0.5, %v3515
      %v3517 = vsub.f32 1.5, %v3516
      %v3518 = vmul.f32 %v3513, %v3517
      %vm3519 = vweird.f32 %v2478
      %vm3520 = vweird.f32 %v3513
      %vm3521 = vmor %vm3519, %vm3520
      %v3522 = vsel %vm3521, %v3513, %v3518
      %v3523 = vrsqrt.pop %v2479
      %v3524 = vmul.f32 %v3523, %v2479
      %v3525 = vmul.f32 %v3524, %v3523
      %v3526 = vmul.f32 0.5, %v3525
      %v3527 = vsub.f32 1.5, %v3526
      %v3528 = vmul.f32 %v3523, %v3527
      %vm3529 = vweird.f32 %v2479
      %vm3530 = vweird.f32 %v3523
      %vm3531 = vmor %vm3529, %vm3530
      %v3532 = vsel %vm3531, %v3523, %v3528
      %v3533 = vrsqrt.pop %v2480
      %v3534 = vmul.f32 %v3533, %v2480
      %v3535 = vmul.f32 %v3534, %v3533
      %v3536 = vmul.f32 0.5, %v3535
      %v3537 = vsub.f32 1.5, %v3536
      %v3538 = vmul.f32 %v3533, %v3537
      %vm3539 = vweird.f32 %v2480
      %vm3540 = vweird.f32 %v3533
      %vm3541 = vmor %vm3539, %vm3540
      %v3542 = vsel %vm3541, %v3533, %v3538
      %v3543 = vrsqrt.pop %v2481
      %v3544 = vmul.f32 %v3543, %v2481
      %v3545 = vmul.f32 %v3544, %v3543
      %v3546 = vmul.f32 0.5, %v3545
      %v3547 = vsub.f32 1.5, %v3546
      %v3548 = vmul.f32 %v3543, %v3547
      %vm3549 = vweird.f32 %v2481
      %vm3550 = vweird.f32 %v3543
      %vm3551 = vmor %vm3549, %vm3550
      %v3552 = vsel %vm3551, %v3543, %v3548
      %v3553 = vrsqrt.pop %v2482
      %v3554 = vmul.f32 %v3553, %v2482
      %v3555 = vmul.f32 %v3554, %v3553
      %v3556 = vmul.f32 0.5, %v3555
      %v3557 = vsub.f32 1.5, %v3556
      %v3558 = vmul.f32 %v3553, %v3557
      %vm3559 = vweird.f32 %v2482
      %vm3560 = vweird.f32 %v3553
      %vm3561 = vmor %vm3559, %vm3560
      %v3562 = vsel %vm3561, %v3553, %v3558
      %v3563 = vrsqrt.pop %v2483
      %v3564 = vmul.f32 %v3563, %v2483
      %v3565 = vmul.f32 %v3564, %v3563
      %v3566 = vmul.f32 0.5, %v3565
      %v3567 = vsub.f32 1.5, %v3566
      %v3568 = vmul.f32 %v3563, %v3567
      %vm3569 = vweird.f32 %v2483
      %vm3570 = vweird.f32 %v3563
      %vm3571 = vmor %vm3569, %vm3570
      %v3572 = vsel %vm3571, %v3563, %v3568
      %v3573 = vrsqrt.pop %v2484
      %v3574 = vmul.f32 %v3573, %v2484
      %v3575 = vmul.f32 %v3574, %v3573
      %v3576 = vmul.f32 0.5, %v3575
      %v3577 = vsub.f32 1.5, %v3576
      %v3578 = vmul.f32 %v3573, %v3577
      %vm3579 = vweird.f32 %v2484
      %vm3580 = vweird.f32 %v3573
      %vm3581 = vmor %vm3579, %vm3580
      %v3582 = vsel %vm3581, %v3573, %v3578
      %v3583 = vrsqrt.pop %v2485
      %v3584 = vmul.f32 %v3583, %v2485
      %v3585 = vmul.f32 %v3584, %v3583
      %v3586 = vmul.f32 0.5, %v3585
      %v3587 = vsub.f32 1.5, %v3586
      %v3588 = vmul.f32 %v3583, %v3587
      %vm3589 = vweird.f32 %v2485
      %vm3590 = vweird.f32 %v3583
      %vm3591 = vmor %vm3589, %vm3590
      %v3592 = vsel %vm3591, %v3583, %v3588
      %v3593 = vrsqrt.pop %v2486
      %v3594 = vmul.f32 %v3593, %v2486
      %v3595 = vmul.f32 %v3594, %v3593
      %v3596 = vmul.f32 0.5, %v3595
      %v3597 = vsub.f32 1.5, %v3596
      %v3598 = vmul.f32 %v3593, %v3597
      %vm3599 = vweird.f32 %v2486
      %vm3600 = vweird.f32 %v3593
      %vm3601 = vmor %vm3599, %vm3600
      %v3602 = vsel %vm3601, %v3593, %v3598
      %v3603 = vrsqrt.pop %v2487
      %v3604 = vmul.f32 %v3603, %v2487
      %v3605 = vmul.f32 %v3604, %v3603
      %v3606 = vmul.f32 0.5, %v3605
      %v3607 = vsub.f32 1.5, %v3606
      %v3608 = vmul.f32 %v3603, %v3607
      %vm3609 = vweird.f32 %v2487
      %vm3610 = vweird.f32 %v3603
      %vm3611 = vmor %vm3609, %vm3610
      %v3612 = vsel %vm3611, %v3603, %v3608
      %v3613 = vrsqrt.pop %v2488
      %v3614 = vmul.f32 %v3613, %v2488
      %v3615 = vmul.f32 %v3614, %v3613
      %v3616 = vmul.f32 0.5, %v3615
      %v3617 = vsub.f32 1.5, %v3616
      %v3618 = vmul.f32 %v3613, %v3617
      %vm3619 = vweird.f32 %v2488
      %vm3620 = vweird.f32 %v3613
      %vm3621 = vmor %vm3619, %vm3620
      %v3622 = vsel %vm3621, %v3613, %v3618
      %v3623 = vrsqrt.pop %v2489
      %v3624 = vmul.f32 %v3623, %v2489
      %v3625 = vmul.f32 %v3624, %v3623
      %v3626 = vmul.f32 0.5, %v3625
      %v3627 = vsub.f32 1.5, %v3626
      %v3628 = vmul.f32 %v3623, %v3627
      %vm3629 = vweird.f32 %v2489
      %vm3630 = vweird.f32 %v3623
      %vm3631 = vmor %vm3629, %vm3630
      %v3632 = vsel %vm3631, %v3623, %v3628
      %v3633 = vrsqrt.pop %v2490
      %v3634 = vmul.f32 %v3633, %v2490
      %v3635 = vmul.f32 %v3634, %v3633
      %v3636 = vmul.f32 0.5, %v3635
      %v3637 = vsub.f32 1.5, %v3636
      %v3638 = vmul.f32 %v3633, %v3637
      %vm3639 = vweird.f32 %v2490
      %vm3640 = vweird.f32 %v3633
      %vm3641 = vmor %vm3639, %vm3640
      %v3642 = vsel %vm3641, %v3633, %v3638
      %v3643 = vrsqrt.pop %v2491
      %v3644 = vmul.f32 %v3643, %v2491
      %v3645 = vmul.f32 %v3644, %v3643
      %v3646 = vmul.f32 0.5, %v3645
      %v3647 = vsub.f32 1.5, %v3646
      %v3648 = vmul.f32 %v3643, %v3647
      %vm3649 = vweird.f32 %v2491
      %vm3650 = vweird.f32 %v3643
      %vm3651 = vmor %vm3649, %vm3650
      %v3652 = vsel %vm3651, %v3643, %v3648
      %v3653 = vrsqrt.pop %v2492
      %v3654 = vmul.f32 %v3653, %v2492
      %v3655 = vmul.f32 %v3654, %v3653
      %v3656 = vmul.f32 0.5, %v3655
      %v3657 = vsub.f32 1.5, %v3656
      %v3658 = vmul.f32 %v3653, %v3657
      %vm3659 = vweird.f32 %v2492
      %vm3660 = vweird.f32 %v3653
      %vm3661 = vmor %vm3659, %vm3660
      %v3662 = vsel %vm3661, %v3653, %v3658
      %v3663 = vrsqrt.pop %v2493
      %v3664 = vmul.f32 %v3663, %v2493
      %v3665 = vmul.f32 %v3664, %v3663
      %v3666 = vmul.f32 0.5, %v3665
      %v3667 = vsub.f32 1.5, %v3666
      %v3668 = vmul.f32 %v3663, %v3667
      %vm3669 = vweird.f32 %v2493
      %vm3670 = vweird.f32 %v3663
      %vm3671 = vmor %vm3669, %vm3670
      %v3672 = vsel %vm3671, %v3663, %v3668
      %v3673 = vrsqrt.pop %v2494
      %v3674 = vmul.f32 %v3673, %v2494
      %v3675 = vmul.f32 %v3674, %v3673
      %v3676 = vmul.f32 0.5, %v3675
      %v3677 = vsub.f32 1.5, %v3676
      %v3678 = vmul.f32 %v3673, %v3677
      %vm3679 = vweird.f32 %v2494
      %vm3680 = vweird.f32 %v3673
      %vm3681 = vmor %vm3679, %vm3680
      %v3682 = vsel %vm3681, %v3673, %v3678
      %v3683 = vrsqrt.pop %v2495
      %v3684 = vmul.f32 %v3683, %v2495
      %v3685 = vmul.f32 %v3684, %v3683
      %v3686 = vmul.f32 0.5, %v3685
      %v3687 = vsub.f32 1.5, %v3686
      %v3688 = vmul.f32 %v3683, %v3687
      %vm3689 = vweird.f32 %v2495
      %vm3690 = vweird.f32 %v3683
      %vm3691 = vmor %vm3689, %vm3690
      %v3692 = vsel %vm3691, %v3683, %v3688
      %v3693 = vrsqrt.pop %v2496
      %v3694 = vmul.f32 %v3693, %v2496
      %v3695 = vmul.f32 %v3694, %v3693
      %v3696 = vmul.f32 0.5, %v3695
      %v3697 = vsub.f32 1.5, %v3696
      %v3698 = vmul.f32 %v3693, %v3697
      %vm3699 = vweird.f32 %v2496
      %vm3700 = vweird.f32 %v3693
      %vm3701 = vmor %vm3699, %vm3700
      %v3702 = vsel %vm3701, %v3693, %v3698
      %v3703 = vrsqrt.pop %v2497
      %v3704 = vmul.f32 %v3703, %v2497
      %v3705 = vmul.f32 %v3704, %v3703
      %v3706 = vmul.f32 0.5, %v3705
      %v3707 = vsub.f32 1.5, %v3706
      %v3708 = vmul.f32 %v3703, %v3707
      %vm3709 = vweird.f32 %v2497
      %vm3710 = vweird.f32 %v3703
      %vm3711 = vmor %vm3709, %vm3710
      %v3712 = vsel %vm3711, %v3703, %v3708
      %v3713 = vrsqrt.pop %v2498
      %v3714 = vmul.f32 %v3713, %v2498
      %v3715 = vmul.f32 %v3714, %v3713
      %v3716 = vmul.f32 0.5, %v3715
      %v3717 = vsub.f32 1.5, %v3716
      %v3718 = vmul.f32 %v3713, %v3717
      %vm3719 = vweird.f32 %v2498
      %vm3720 = vweird.f32 %v3713
      %vm3721 = vmor %vm3719, %vm3720
      %v3722 = vsel %vm3721, %v3713, %v3718
      %v3723 = vrsqrt.pop %v2499
      %v3724 = vmul.f32 %v3723, %v2499
      %v3725 = vmul.f32 %v3724, %v3723
      %v3726 = vmul.f32 0.5, %v3725
      %v3727 = vsub.f32 1.5, %v3726
      %v3728 = vmul.f32 %v3723, %v3727
      %vm3729 = vweird.f32 %v2499
      %vm3730 = vweird.f32 %v3723
      %vm3731 = vmor %vm3729, %vm3730
      %v3732 = vsel %vm3731, %v3723, %v3728
      %v3733 = vrsqrt.pop %v2500
      %v3734 = vmul.f32 %v3733, %v2500
      %v3735 = vmul.f32 %v3734, %v3733
      %v3736 = vmul.f32 0.5, %v3735
      %v3737 = vsub.f32 1.5, %v3736
      %v3738 = vmul.f32 %v3733, %v3737
      %vm3739 = vweird.f32 %v2500
      %vm3740 = vweird.f32 %v3733
      %vm3741 = vmor %vm3739, %vm3740
      %v3742 = vsel %vm3741, %v3733, %v3738
      %v3743 = vrsqrt.pop %v2501
      %v3744 = vmul.f32 %v3743, %v2501
      %v3745 = vmul.f32 %v3744, %v3743
      %v3746 = vmul.f32 0.5, %v3745
      %v3747 = vsub.f32 1.5, %v3746
      %v3748 = vmul.f32 %v3743, %v3747
      %vm3749 = vweird.f32 %v2501
      %vm3750 = vweird.f32 %v3743
      %vm3751 = vmor %vm3749, %vm3750
      %v3752 = vsel %vm3751, %v3743, %v3748
      %v3753 = vrsqrt.pop %v2502
      %v3754 = vmul.f32 %v3753, %v2502
      %v3755 = vmul.f32 %v3754, %v3753
      %v3756 = vmul.f32 0.5, %v3755
      %v3757 = vsub.f32 1.5, %v3756
      %v3758 = vmul.f32 %v3753, %v3757
      %vm3759 = vweird.f32 %v2502
      %vm3760 = vweird.f32 %v3753
      %vm3761 = vmor %vm3759, %vm3760
      %v3762 = vsel %vm3761, %v3753, %v3758
      %v3763 = vrsqrt.pop %v2503
      %v3764 = vmul.f32 %v3763, %v2503
      %v3765 = vmul.f32 %v3764, %v3763
      %v3766 = vmul.f32 0.5, %v3765
      %v3767 = vsub.f32 1.5, %v3766
      %v3768 = vmul.f32 %v3763, %v3767
      %vm3769 = vweird.f32 %v2503
      %vm3770 = vweird.f32 %v3763
      %vm3771 = vmor %vm3769, %vm3770
      %v3772 = vsel %vm3771, %v3763, %v3768
      %v3773 = vrsqrt.pop %v2504
      %v3774 = vmul.f32 %v3773, %v2504
      %v3775 = vmul.f32 %v3774, %v3773
      %v3776 = vmul.f32 0.5, %v3775
      %v3777 = vsub.f32 1.5, %v3776
      %v3778 = vmul.f32 %v3773, %v3777
      %vm3779 = vweird.f32 %v2504
      %vm3780 = vweird.f32 %v3773
      %vm3781 = vmor %vm3779, %vm3780
      %v3782 = vsel %vm3781, %v3773, %v3778
      %v3783 = vrsqrt.pop %v2505
      %v3784 = vmul.f32 %v3783, %v2505
      %v3785 = vmul.f32 %v3784, %v3783
      %v3786 = vmul.f32 0.5, %v3785
      %v3787 = vsub.f32 1.5, %v3786
      %v3788 = vmul.f32 %v3783, %v3787
      %vm3789 = vweird.f32 %v2505
      %vm3790 = vweird.f32 %v3783
      %vm3791 = vmor %vm3789, %vm3790
      %v3792 = vsel %vm3791, %v3783, %v3788
      %v3793 = vrsqrt.pop %v2506
      %v3794 = vmul.f32 %v3793, %v2506
      %v3795 = vmul.f32 %v3794, %v3793
      %v3796 = vmul.f32 0.5, %v3795
      %v3797 = vsub.f32 1.5, %v3796
      %v3798 = vmul.f32 %v3793, %v3797
      %vm3799 = vweird.f32 %v2506
      %vm3800 = vweird.f32 %v3793
      %vm3801 = vmor %vm3799, %vm3800
      %v3802 = vsel %vm3801, %v3793, %v3798
      %v3803 = vrsqrt.pop %v2507
      %v3804 = vmul.f32 %v3803, %v2507
      %v3805 = vmul.f32 %v3804, %v3803
      %v3806 = vmul.f32 0.5, %v3805
      %v3807 = vsub.f32 1.5, %v3806
      %v3808 = vmul.f32 %v3803, %v3807
      %vm3809 = vweird.f32 %v2507
      %vm3810 = vweird.f32 %v3803
      %vm3811 = vmor %vm3809, %vm3810
      %v3812 = vsel %vm3811, %v3803, %v3808
      %v3813 = vrsqrt.pop %v2508
      %v3814 = vmul.f32 %v3813, %v2508
      %v3815 = vmul.f32 %v3814, %v3813
      %v3816 = vmul.f32 0.5, %v3815
      %v3817 = vsub.f32 1.5, %v3816
      %v3818 = vmul.f32 %v3813, %v3817
      %vm3819 = vweird.f32 %v2508
      %vm3820 = vweird.f32 %v3813
      %vm3821 = vmor %vm3819, %vm3820
      %v3822 = vsel %vm3821, %v3813, %v3818
      %v3823 = vrsqrt.pop %v2509
      %v3824 = vmul.f32 %v3823, %v2509
      %v3825 = vmul.f32 %v3824, %v3823
      %v3826 = vmul.f32 0.5, %v3825
      %v3827 = vsub.f32 1.5, %v3826
      %v3828 = vmul.f32 %v3823, %v3827
      %vm3829 = vweird.f32 %v2509
      %vm3830 = vweird.f32 %v3823
      %vm3831 = vmor %vm3829, %vm3830
      %v3832 = vsel %vm3831, %v3823, %v3828
      %v3833 = vrsqrt.pop %v2510
      %v3834 = vmul.f32 %v3833, %v2510
      %v3835 = vmul.f32 %v3834, %v3833
      %v3836 = vmul.f32 0.5, %v3835
      %v3837 = vsub.f32 1.5, %v3836
      %v3838 = vmul.f32 %v3833, %v3837
      %vm3839 = vweird.f32 %v2510
      %vm3840 = vweird.f32 %v3833
      %vm3841 = vmor %vm3839, %vm3840
      %v3842 = vsel %vm3841, %v3833, %v3838
      %v3843 = vrsqrt.pop %v2511
      %v3844 = vmul.f32 %v3843, %v2511
      %v3845 = vmul.f32 %v3844, %v3843
      %v3846 = vmul.f32 0.5, %v3845
      %v3847 = vsub.f32 1.5, %v3846
      %v3848 = vmul.f32 %v3843, %v3847
      %vm3849 = vweird.f32 %v2511
      %vm3850 = vweird.f32 %v3843
      %vm3851 = vmor %vm3849, %vm3850
      %v3852 = vsel %vm3851, %v3843, %v3848
      %v3853 = vrsqrt.pop %v2512
      %v3854 = vmul.f32 %v3853, %v2512
      %v3855 = vmul.f32 %v3854, %v3853
      %v3856 = vmul.f32 0.5, %v3855
      %v3857 = vsub.f32 1.5, %v3856
      %v3858 = vmul.f32 %v3853, %v3857
      %vm3859 = vweird.f32 %v2512
      %vm3860 = vweird.f32 %v3853
      %vm3861 = vmor %vm3859, %vm3860
      %v3862 = vsel %vm3861, %v3853, %v3858
      %v3863 = vrsqrt.pop %v2513
      %v3864 = vmul.f32 %v3863, %v2513
      %v3865 = vmul.f32 %v3864, %v3863
      %v3866 = vmul.f32 0.5, %v3865
      %v3867 = vsub.f32 1.5, %v3866
      %v3868 = vmul.f32 %v3863, %v3867
      %vm3869 = vweird.f32 %v2513
      %vm3870 = vweird.f32 %v3863
      %vm3871 = vmor %vm3869, %vm3870
      %v3872 = vsel %vm3871, %v3863, %v3868
      %v3873 = vrsqrt.pop %v2514
      %v3874 = vmul.f32 %v3873, %v2514
      %v3875 = vmul.f32 %v3874, %v3873
      %v3876 = vmul.f32 0.5, %v3875
      %v3877 = vsub.f32 1.5, %v3876
      %v3878 = vmul.f32 %v3873, %v3877
      %vm3879 = vweird.f32 %v2514
      %vm3880 = vweird.f32 %v3873
      %vm3881 = vmor %vm3879, %vm3880
      %v3882 = vsel %vm3881, %v3873, %v3878
      %v3883 = vrsqrt.pop %v2515
      %v3884 = vmul.f32 %v3883, %v2515
      %v3885 = vmul.f32 %v3884, %v3883
      %v3886 = vmul.f32 0.5, %v3885
      %v3887 = vsub.f32 1.5, %v3886
      %v3888 = vmul.f32 %v3883, %v3887
      %vm3889 = vweird.f32 %v2515
      %vm3890 = vweird.f32 %v3883
      %vm3891 = vmor %vm3889, %vm3890
      %v3892 = vsel %vm3891, %v3883, %v3888
      %v3893 = vrsqrt.pop %v2516
      %v3894 = vmul.f32 %v3893, %v2516
      %v3895 = vmul.f32 %v3894, %v3893
      %v3896 = vmul.f32 0.5, %v3895
      %v3897 = vsub.f32 1.5, %v3896
      %v3898 = vmul.f32 %v3893, %v3897
      %vm3899 = vweird.f32 %v2516
      %vm3900 = vweird.f32 %v3893
      %vm3901 = vmor %vm3899, %vm3900
      %v3902 = vsel %vm3901, %v3893, %v3898
      %v3903 = vrsqrt.pop %v2517
      %v3904 = vmul.f32 %v3903, %v2517
      %v3905 = vmul.f32 %v3904, %v3903
      %v3906 = vmul.f32 0.5, %v3905
      %v3907 = vsub.f32 1.5, %v3906
      %v3908 = vmul.f32 %v3903, %v3907
      %vm3909 = vweird.f32 %v2517
      %vm3910 = vweird.f32 %v3903
      %vm3911 = vmor %vm3909, %vm3910
      %v3912 = vsel %vm3911, %v3903, %v3908
      %v3913 = vrsqrt.pop %v2518
      %v3914 = vmul.f32 %v3913, %v2518
      %v3915 = vmul.f32 %v3914, %v3913
      %v3916 = vmul.f32 0.5, %v3915
      %v3917 = vsub.f32 1.5, %v3916
      %v3918 = vmul.f32 %v3913, %v3917
      %vm3919 = vweird.f32 %v2518
      %vm3920 = vweird.f32 %v3913
      %vm3921 = vmor %vm3919, %vm3920
      %v3922 = vsel %vm3921, %v3913, %v3918
      %v3923 = vrsqrt.pop %v2519
      %v3924 = vmul.f32 %v3923, %v2519
      %v3925 = vmul.f32 %v3924, %v3923
      %v3926 = vmul.f32 0.5, %v3925
      %v3927 = vsub.f32 1.5, %v3926
      %v3928 = vmul.f32 %v3923, %v3927
      %vm3929 = vweird.f32 %v2519
      %vm3930 = vweird.f32 %v3923
      %vm3931 = vmor %vm3929, %vm3930
      %v3932 = vsel %vm3931, %v3923, %v3928
      %v3933 = vrsqrt.pop %v2520
      %v3934 = vmul.f32 %v3933, %v2520
      %v3935 = vmul.f32 %v3934, %v3933
      %v3936 = vmul.f32 0.5, %v3935
      %v3937 = vsub.f32 1.5, %v3936
      %v3938 = vmul.f32 %v3933, %v3937
      %vm3939 = vweird.f32 %v2520
      %vm3940 = vweird.f32 %v3933
      %vm3941 = vmor %vm3939, %vm3940
      %v3942 = vsel %vm3941, %v3933, %v3938
      %v3943 = vrsqrt.pop %v2521
      %v3944 = vmul.f32 %v3943, %v2521
      %v3945 = vmul.f32 %v3944, %v3943
      %v3946 = vmul.f32 0.5, %v3945
      %v3947 = vsub.f32 1.5, %v3946
      %v3948 = vmul.f32 %v3943, %v3947
      %vm3949 = vweird.f32 %v2521
      %vm3950 = vweird.f32 %v3943
      %vm3951 = vmor %vm3949, %vm3950
      %v3952 = vsel %vm3951, %v3943, %v3948
      %v3953 = vrsqrt.pop %v2522
      %v3954 = vmul.f32 %v3953, %v2522
      %v3955 = vmul.f32 %v3954, %v3953
      %v3956 = vmul.f32 0.5, %v3955
      %v3957 = vsub.f32 1.5, %v3956
      %v3958 = vmul.f32 %v3953, %v3957
      %vm3959 = vweird.f32 %v2522
      %vm3960 = vweird.f32 %v3953
      %vm3961 = vmor %vm3959, %vm3960
      %v3962 = vsel %vm3961, %v3953, %v3958
      %v3963 = vld [vmem:[%s204] sm:$0xff]
      %v3964 = vld [vmem:[%s204 + $0x8] sm:$0xff]
      %v3965 = vld [vmem:[%s204 + $0x10] sm:$0xff]
      %v3966 = vld [vmem:[%s204 + $0x18] sm:$0xff]
      %v3967 = vld [vmem:[%s204 + $0x20] sm:$0xff]
      %v3968 = vld [vmem:[%s204 + $0x28] sm:$0xff]
      %v3969 = vld [vmem:[%s204 + $0x30] sm:$0xff]
      %v3970 = vld [vmem:[%s204 + $0x38] sm:$0xff]
      %v3971 = vld [vmem:[%s204 + $0x40] sm:$0xff]
      %v3972 = vld [vmem:[%s204 + $0x48] sm:$0xff]
      %v3973 = vld [vmem:[%s204 + $0x50] sm:$0xff]
      %v3974 = vld [vmem:[%s204 + $0x58] sm:$0xff]
      %v3975 = vld [vmem:[%s204 + $0x60] sm:$0xff]
      %v3976 = vld [vmem:[%s204 + $0x68] sm:$0xff]
      %v3977 = vld [vmem:[%s204 + $0x70] sm:$0xff]
      %v3978 = vld [vmem:[%s204 + $0x78] sm:$0xff]
      %v3979 = vld [vmem:[%s204 + $0x80] sm:$0xff]
      %v3980 = vld [vmem:[%s204 + $0x88] sm:$0xff]
      %v3981 = vld [vmem:[%s204 + $0x90] sm:$0xff]
      %v3982 = vld [vmem:[%s204 + $0x98] sm:$0xff]
      %v3983 = vld [vmem:[%s204 + $0xa0] sm:$0xff]
      %v3984 = vld [vmem:[%s204 + $0xa8] sm:$0xff]
      %v3985 = vld [vmem:[%s204 + $0xb0] sm:$0xff]
      %v3986 = vld [vmem:[%s204 + $0xb8] sm:$0xff]
      %v3987 = vld [vmem:[%s204 + $0xc0] sm:$0xff]
      %v3988 = vld [vmem:[%s204 + $0xc8] sm:$0xff]
      %v3989 = vld [vmem:[%s204 + $0xd0] sm:$0xff]
      %v3990 = vld [vmem:[%s204 + $0xd8] sm:$0xff]
      %v3991 = vld [vmem:[%s204 + $0xe0] sm:$0xff]
      %v3992 = vld [vmem:[%s204 + $0xe8] sm:$0xff]
      %v3993 = vld [vmem:[%s204 + $0xf0] sm:$0xff]
      %v3994 = vld [vmem:[%s204 + $0xf8] sm:$0xff]
      %v3995 = vld [vmem:[%s204 + $0x100] sm:$0xff]
      %v3996 = vld [vmem:[%s204 + $0x108] sm:$0xff]
      %v3997 = vld [vmem:[%s204 + $0x110] sm:$0xff]
      %v3998 = vld [vmem:[%s204 + $0x118] sm:$0xff]
      %v3999 = vld [vmem:[%s204 + $0x120] sm:$0xff]
      %v4000 = vld [vmem:[%s204 + $0x128] sm:$0xff]
      %v4001 = vld [vmem:[%s204 + $0x130] sm:$0xff]
      %v4002 = vld [vmem:[%s204 + $0x138] sm:$0xff]
      %v4003 = vld [vmem:[%s204 + $0x140] sm:$0xff]
      %v4004 = vld [vmem:[%s204 + $0x148] sm:$0xff]
      %v4005 = vld [vmem:[%s204 + $0x150] sm:$0xff]
      %v4006 = vld [vmem:[%s204 + $0x158] sm:$0xff]
      %v4007 = vld [vmem:[%s204 + $0x160] sm:$0xff]
      %v4008 = vld [vmem:[%s204 + $0x168] sm:$0xff]
      %v4009 = vld [vmem:[%s204 + $0x170] sm:$0xff]
      %v4010 = vld [vmem:[%s204 + $0x178] sm:$0xff]
      %v4011 = vld [vmem:[%s204 + $0x180] sm:$0xff]
      %v4012 = vld [vmem:[%s204 + $0x188] sm:$0xff]
      %v4013 = vld [vmem:[%s204 + $0x190] sm:$0xff]
      %v4014 = vld [vmem:[%s204 + $0x198] sm:$0xff]
      %v4015 = vld [vmem:[%s204 + $0x1a0] sm:$0xff]
      %v4016 = vld [vmem:[%s204 + $0x1a8] sm:$0xff]
      %v4017 = vld [vmem:[%s204 + $0x1b0] sm:$0xff]
      %v4018 = vld [vmem:[%s204 + $0x1b8] sm:$0xff]
      %v4019 = vld [vmem:[%s204 + $0x1c0] sm:$0xff]
      %v4020 = vld [vmem:[%s204 + $0x1c8] sm:$0xff]
      %v4021 = vld [vmem:[%s204 + $0x1d0] sm:$0xff]
      %v4022 = vld [vmem:[%s204 + $0x1d8] sm:$0xff]
      %v4023 = vld [vmem:[%s204 + $0x1e0] sm:$0xff]
      %v4024 = vld [vmem:[%s204 + $0x1e8] sm:$0xff]
      %v4025 = vld [vmem:[%s204 + $0x1f0] sm:$0xff]
      %v4026 = vld [vmem:[%s204 + $0x1f8] sm:$0xff]
      %v4027 = vld [vmem:[%s204 + $0x200] sm:$0xff]
      %v4028 = vld [vmem:[%s204 + $0x208] sm:$0xff]
      %v4029 = vld [vmem:[%s204 + $0x210] sm:$0xff]
      %v4030 = vld [vmem:[%s204 + $0x218] sm:$0xff]
      %v4031 = vld [vmem:[%s204 + $0x220] sm:$0xff]
      %v4032 = vld [vmem:[%s204 + $0x228] sm:$0xff]
      %v4033 = vld [vmem:[%s204 + $0x230] sm:$0xff]
      %v4034 = vld [vmem:[%s204 + $0x238] sm:$0xff]
      %v4035 = vld [vmem:[%s204 + $0x240] sm:$0xff]
      %v4036 = vld [vmem:[%s204 + $0x248] sm:$0xff]
      %v4037 = vld [vmem:[%s204 + $0x250] sm:$0xff]
      %v4038 = vld [vmem:[%s204 + $0x258] sm:$0xff]
      %v4039 = vld [vmem:[%s204 + $0x260] sm:$0xff]
      %v4040 = vld [vmem:[%s204 + $0x268] sm:$0xff]
      %v4041 = vld [vmem:[%s204 + $0x270] sm:$0xff]
      %v4042 = vld [vmem:[%s204 + $0x278] sm:$0xff]
      %v4043 = vld [vmem:[%s204 + $0x280] sm:$0xff]
      %v4044 = vld [vmem:[%s204 + $0x288] sm:$0xff]
      %v4045 = vld [vmem:[%s204 + $0x290] sm:$0xff]
      %v4046 = vld [vmem:[%s204 + $0x298] sm:$0xff]
      %v4047 = vld [vmem:[%s204 + $0x2a0] sm:$0xff]
      %v4048 = vld [vmem:[%s204 + $0x2a8] sm:$0xff]
      %v4049 = vld [vmem:[%s204 + $0x2b0] sm:$0xff]
      %v4050 = vld [vmem:[%s204 + $0x2b8] sm:$0xff]
      %v4051 = vld [vmem:[%s204 + $0x2c0] sm:$0xff]
      %v4052 = vld [vmem:[%s204 + $0x2c8] sm:$0xff]
      %v4053 = vld [vmem:[%s204 + $0x2d0] sm:$0xff]
      %v4054 = vld [vmem:[%s204 + $0x2d8] sm:$0xff]
      %v4055 = vld [vmem:[%s204 + $0x2e0] sm:$0xff]
      %v4056 = vld [vmem:[%s204 + $0x2e8] sm:$0xff]
      %v4057 = vld [vmem:[%s204 + $0x2f0] sm:$0xff]
      %v4058 = vld [vmem:[%s204 + $0x2f8] sm:$0xff]
      %v4059 = vld [vmem:[%s204 + $0x300] sm:$0xff]
      %v4060 = vld [vmem:[%s204 + $0x308] sm:$0xff]
      %v4061 = vld [vmem:[%s204 + $0x310] sm:$0xff]
      %v4062 = vld [vmem:[%s204 + $0x318] sm:$0xff]
      %v4063 = vld [vmem:[%s204 + $0x320] sm:$0xff]
      %v4064 = vld [vmem:[%s204 + $0x328] sm:$0xff]
      %v4065 = vld [vmem:[%s204 + $0x330] sm:$0xff]
      %v4066 = vld [vmem:[%s204 + $0x338] sm:$0xff]
      %v4067 = vld [vmem:[%s204 + $0x340] sm:$0xff]
      %v4068 = vld [vmem:[%s204 + $0x348] sm:$0xff]
      %v4069 = vld [vmem:[%s204 + $0x350] sm:$0xff]
      %v4070 = vld [vmem:[%s204 + $0x358] sm:$0xff]
      %v4071 = vld [vmem:[%s204 + $0x360] sm:$0xff]
      %v4072 = vld [vmem:[%s204 + $0x368] sm:$0xff]
      %v4073 = vld [vmem:[%s204 + $0x370] sm:$0xff]
      %v4074 = vld [vmem:[%s204 + $0x378] sm:$0xff]
      %v4075 = vld [vmem:[%s204 + $0x380] sm:$0xff]
      %v4076 = vld [vmem:[%s204 + $0x388] sm:$0xff]
      %v4077 = vld [vmem:[%s204 + $0x390] sm:$0xff]
      %v4078 = vld [vmem:[%s204 + $0x398] sm:$0xff]
      %v4079 = vld [vmem:[%s204 + $0x3a0] sm:$0xff]
      %v4080 = vld [vmem:[%s204 + $0x3a8] sm:$0xff]
      %v4081 = vld [vmem:[%s204 + $0x3b0] sm:$0xff]
      %v4082 = vld [vmem:[%s204 + $0x3b8] sm:$0xff]
      %v4083 = vld [vmem:[%s204 + $0x3c0] sm:$0xff]
      %v4084 = vld [vmem:[%s204 + $0x3c8] sm:$0xff]
      %v4085 = vld [vmem:[%s204 + $0x3d0] sm:$0xff]
      %v4086 = vld [vmem:[%s204 + $0x3d8] sm:$0xff]
      %v4087 = vld [vmem:[%s204 + $0x3e0] sm:$0xff]
      %v4088 = vld [vmem:[%s204 + $0x3e8] sm:$0xff]
      %v4089 = vld [vmem:[%s204 + $0x3f0] sm:$0xff]
      %v4090 = vld [vmem:[%s204 + $0x3f8] sm:$0xff]
      %v4091 = vld [vmem:[%s204 + $0x400] sm:$0xff]
      %v4092 = vld [vmem:[%s204 + $0x408] sm:$0xff]
      %v4093 = vld [vmem:[%s204 + $0x410] sm:$0xff]
      %v4094 = vld [vmem:[%s204 + $0x418] sm:$0xff]
      %v4095 = vld [vmem:[%s204 + $0x420] sm:$0xff]
      %v4096 = vld [vmem:[%s204 + $0x428] sm:$0xff]
      %v4097 = vld [vmem:[%s204 + $0x430] sm:$0xff]
      %v4098 = vld [vmem:[%s204 + $0x438] sm:$0xff]
      %v4099 = vld [vmem:[%s204 + $0x440] sm:$0xff]
      %v4100 = vld [vmem:[%s204 + $0x448] sm:$0xff]
      %v4101 = vld [vmem:[%s204 + $0x450] sm:$0xff]
      %v4102 = vld [vmem:[%s204 + $0x458] sm:$0xff]
      %v4103 = vld [vmem:[%s204 + $0x460] sm:$0xff]
      %v4104 = vld [vmem:[%s204 + $0x468] sm:$0xff]
      %v4105 = vld [vmem:[%s204 + $0x470] sm:$0xff]
      %v4106 = vld [vmem:[%s204 + $0x478] sm:$0xff]
      %v4107 = vmul.f32 %v2532, %v3963
      %v4108 = vmul.f32 %v2542, %v3964
      %v4109 = vmul.f32 %v2552, %v3965
      %v4110 = vmul.f32 %v2562, %v3966
      %v4111 = vmul.f32 %v2572, %v3967
      %v4112 = vmul.f32 %v2582, %v3968
      %v4113 = vmul.f32 %v2592, %v3969
      %v4114 = vmul.f32 %v2602, %v3970
      %v4115 = vmul.f32 %v2612, %v3971
      %v4116 = vmul.f32 %v2622, %v3972
      %v4117 = vmul.f32 %v2632, %v3973
      %v4118 = vmul.f32 %v2642, %v3974
      %v4119 = vmul.f32 %v2652, %v3975
      %v4120 = vmul.f32 %v2662, %v3976
      %v4121 = vmul.f32 %v2672, %v3977
      %v4122 = vmul.f32 %v2682, %v3978
      %v4123 = vmul.f32 %v2692, %v3979
      %v4124 = vmul.f32 %v2702, %v3980
      %v4125 = vmul.f32 %v2712, %v3981
      %v4126 = vmul.f32 %v2722, %v3982
      %v4127 = vmul.f32 %v2732, %v3983
      %v4128 = vmul.f32 %v2742, %v3984
      %v4129 = vmul.f32 %v2752, %v3985
      %v4130 = vmul.f32 %v2762, %v3986
      %v4131 = vmul.f32 %v2772, %v3987
      %v4132 = vmul.f32 %v2782, %v3988
      %v4133 = vmul.f32 %v2792, %v3989
      %v4134 = vmul.f32 %v2802, %v3990
      %v4135 = vmul.f32 %v2812, %v3991
      %v4136 = vmul.f32 %v2822, %v3992
      %v4137 = vmul.f32 %v2832, %v3993
      %v4138 = vmul.f32 %v2842, %v3994
      %v4139 = vmul.f32 %v2852, %v3995
      %v4140 = vmul.f32 %v2862, %v3996
      %v4141 = vmul.f32 %v2872, %v3997
      %v4142 = vmul.f32 %v2882, %v3998
      %v4143 = vmul.f32 %v2892, %v3999
      %v4144 = vmul.f32 %v2902, %v4000
      %v4145 = vmul.f32 %v2912, %v4001
      %v4146 = vmul.f32 %v2922, %v4002
      %v4147 = vmul.f32 %v2932, %v4003
      %v4148 = vmul.f32 %v2942, %v4004
      %v4149 = vmul.f32 %v2952, %v4005
      %v4150 = vmul.f32 %v2962, %v4006
      %v4151 = vmul.f32 %v2972, %v4007
      %v4152 = vmul.f32 %v2982, %v4008
      %v4153 = vmul.f32 %v2992, %v4009
      %v4154 = vmul.f32 %v3002, %v4010
      %v4155 = vmul.f32 %v3012, %v4011
      %v4156 = vmul.f32 %v3022, %v4012
      %v4157 = vmul.f32 %v3032, %v4013
      %v4158 = vmul.f32 %v3042, %v4014
      %v4159 = vmul.f32 %v3052, %v4015
      %v4160 = vmul.f32 %v3062, %v4016
      %v4161 = vmul.f32 %v3072, %v4017
      %v4162 = vmul.f32 %v3082, %v4018
      %v4163 = vmul.f32 %v3092, %v4019
      %v4164 = vmul.f32 %v3102, %v4020
      %v4165 = vmul.f32 %v3112, %v4021
      %v4166 = vmul.f32 %v3122, %v4022
      %v4167 = vmul.f32 %v3132, %v4023
      %v4168 = vmul.f32 %v3142, %v4024
      %v4169 = vmul.f32 %v3152, %v4025
      %v4170 = vmul.f32 %v3162, %v4026
      %v4171 = vmul.f32 %v3172, %v4027
      %v4172 = vmul.f32 %v3182, %v4028
      %v4173 = vmul.f32 %v3192, %v4029
      %v4174 = vmul.f32 %v3202, %v4030
      %v4175 = vmul.f32 %v3212, %v4031
      %v4176 = vmul.f32 %v3222, %v4032
      %v4177 = vmul.f32 %v3232, %v4033
      %v4178 = vmul.f32 %v3242, %v4034
      %v4179 = vmul.f32 %v3252, %v4035
      %v4180 = vmul.f32 %v3262, %v4036
      %v4181 = vmul.f32 %v3272, %v4037
      %v4182 = vmul.f32 %v3282, %v4038
      %v4183 = vmul.f32 %v3292, %v4039
      %v4184 = vmul.f32 %v3302, %v4040
      %v4185 = vmul.f32 %v3312, %v4041
      %v4186 = vmul.f32 %v3322, %v4042
      %v4187 = vmul.f32 %v3332, %v4043
      %v4188 = vmul.f32 %v3342, %v4044
      %v4189 = vmul.f32 %v3352, %v4045
      %v4190 = vmul.f32 %v3362, %v4046
      %v4191 = vmul.f32 %v3372, %v4047
      %v4192 = vmul.f32 %v3382, %v4048
      %v4193 = vmul.f32 %v3392, %v4049
      %v4194 = vmul.f32 %v3402, %v4050
      %v4195 = vmul.f32 %v3412, %v4051
      %v4196 = vmul.f32 %v3422, %v4052
      %v4197 = vmul.f32 %v3432, %v4053
      %v4198 = vmul.f32 %v3442, %v4054
      %v4199 = vmul.f32 %v3452, %v4055
      %v4200 = vmul.f32 %v3462, %v4056
      %v4201 = vmul.f32 %v3472, %v4057
      %v4202 = vmul.f32 %v3482, %v4058
      %v4203 = vmul.f32 %v3492, %v4059
      %v4204 = vmul.f32 %v3502, %v4060
      %v4205 = vmul.f32 %v3512, %v4061
      %v4206 = vmul.f32 %v3522, %v4062
      %v4207 = vmul.f32 %v3532, %v4063
      %v4208 = vmul.f32 %v3542, %v4064
      %v4209 = vmul.f32 %v3552, %v4065
      %v4210 = vmul.f32 %v3562, %v4066
      %v4211 = vmul.f32 %v3572, %v4067
      %v4212 = vmul.f32 %v3582, %v4068
      %v4213 = vmul.f32 %v3592, %v4069
      %v4214 = vmul.f32 %v3602, %v4070
      %v4215 = vmul.f32 %v3612, %v4071
      %v4216 = vmul.f32 %v3622, %v4072
      %v4217 = vmul.f32 %v3632, %v4073
      %v4218 = vmul.f32 %v3642, %v4074
      %v4219 = vmul.f32 %v3652, %v4075
      %v4220 = vmul.f32 %v3662, %v4076
      %v4221 = vmul.f32 %v3672, %v4077
      %v4222 = vmul.f32 %v3682, %v4078
      %v4223 = vmul.f32 %v3692, %v4079
      %v4224 = vmul.f32 %v3702, %v4080
      %v4225 = vmul.f32 %v3712, %v4081
      %v4226 = vmul.f32 %v3722, %v4082
      %v4227 = vmul.f32 %v3732, %v4083
      %v4228 = vmul.f32 %v3742, %v4084
      %v4229 = vmul.f32 %v3752, %v4085
      %v4230 = vmul.f32 %v3762, %v4086
      %v4231 = vmul.f32 %v3772, %v4087
      %v4232 = vmul.f32 %v3782, %v4088
      %v4233 = vmul.f32 %v3792, %v4089
      %v4234 = vmul.f32 %v3802, %v4090
      %v4235 = vmul.f32 %v3812, %v4091
      %v4236 = vmul.f32 %v3822, %v4092
      %v4237 = vmul.f32 %v3832, %v4093
      %v4238 = vmul.f32 %v3842, %v4094
      %v4239 = vmul.f32 %v3852, %v4095
      %v4240 = vmul.f32 %v3862, %v4096
      %v4241 = vmul.f32 %v3872, %v4097
      %v4242 = vmul.f32 %v3882, %v4098
      %v4243 = vmul.f32 %v3892, %v4099
      %v4244 = vmul.f32 %v3902, %v4100
      %v4245 = vmul.f32 %v3912, %v4101
      %v4246 = vmul.f32 %v3922, %v4102
      %v4247 = vmul.f32 %v3932, %v4103
      %v4248 = vmul.f32 %v3942, %v4104
      %v4249 = vmul.f32 %v3952, %v4105
      %v4250 = vmul.f32 %v3962, %v4106
      %v4251 = vld [vmem:[%s210] sm:$0xff]
      %v4252 = vld [vmem:[%s210 + $0x8] sm:$0xff]
      %v4253 = vld [vmem:[%s210 + $0x10] sm:$0xff]
      %v4254 = vld [vmem:[%s210 + $0x18] sm:$0xff]
      %v4255 = vld [vmem:[%s210 + $0x20] sm:$0xff]
      %v4256 = vld [vmem:[%s210 + $0x28] sm:$0xff]
      %v4257 = vld [vmem:[%s210 + $0x30] sm:$0xff]
      %v4258 = vld [vmem:[%s210 + $0x38] sm:$0xff]
      %v4259 = vld [vmem:[%s210 + $0x40] sm:$0xff]
      %v4260 = vld [vmem:[%s210 + $0x48] sm:$0xff]
      %v4261 = vld [vmem:[%s210 + $0x50] sm:$0xff]
      %v4262 = vld [vmem:[%s210 + $0x58] sm:$0xff]
      %v4263 = vld [vmem:[%s210 + $0x60] sm:$0xff]
      %v4264 = vld [vmem:[%s210 + $0x68] sm:$0xff]
      %v4265 = vld [vmem:[%s210 + $0x70] sm:$0xff]
      %v4266 = vld [vmem:[%s210 + $0x78] sm:$0xff]
      %v4267 = vld [vmem:[%s210 + $0x80] sm:$0xff]
      %v4268 = vld [vmem:[%s210 + $0x88] sm:$0xff]
      %v4269 = vld [vmem:[%s210 + $0x90] sm:$0xff]
      %v4270 = vld [vmem:[%s210 + $0x98] sm:$0xff]
      %v4271 = vld [vmem:[%s210 + $0xa0] sm:$0xff]
      %v4272 = vld [vmem:[%s210 + $0xa8] sm:$0xff]
      %v4273 = vld [vmem:[%s210 + $0xb0] sm:$0xff]
      %v4274 = vld [vmem:[%s210 + $0xb8] sm:$0xff]
      %v4275 = vld [vmem:[%s210 + $0xc0] sm:$0xff]
      %v4276 = vld [vmem:[%s210 + $0xc8] sm:$0xff]
      %v4277 = vld [vmem:[%s210 + $0xd0] sm:$0xff]
      %v4278 = vld [vmem:[%s210 + $0xd8] sm:$0xff]
      %v4279 = vld [vmem:[%s210 + $0xe0] sm:$0xff]
      %v4280 = vld [vmem:[%s210 + $0xe8] sm:$0xff]
      %v4281 = vld [vmem:[%s210 + $0xf0] sm:$0xff]
      %v4282 = vld [vmem:[%s210 + $0xf8] sm:$0xff]
      %v4283 = vld [vmem:[%s210 + $0x100] sm:$0xff]
      %v4284 = vld [vmem:[%s210 + $0x108] sm:$0xff]
      %v4285 = vld [vmem:[%s210 + $0x110] sm:$0xff]
      %v4286 = vld [vmem:[%s210 + $0x118] sm:$0xff]
      %v4287 = vld [vmem:[%s210 + $0x120] sm:$0xff]
      %v4288 = vld [vmem:[%s210 + $0x128] sm:$0xff]
      %v4289 = vld [vmem:[%s210 + $0x130] sm:$0xff]
      %v4290 = vld [vmem:[%s210 + $0x138] sm:$0xff]
      %v4291 = vld [vmem:[%s210 + $0x140] sm:$0xff]
      %v4292 = vld [vmem:[%s210 + $0x148] sm:$0xff]
      %v4293 = vld [vmem:[%s210 + $0x150] sm:$0xff]
      %v4294 = vld [vmem:[%s210 + $0x158] sm:$0xff]
      %v4295 = vld [vmem:[%s210 + $0x160] sm:$0xff]
      %v4296 = vld [vmem:[%s210 + $0x168] sm:$0xff]
      %v4297 = vld [vmem:[%s210 + $0x170] sm:$0xff]
      %v4298 = vld [vmem:[%s210 + $0x178] sm:$0xff]
      %v4299 = vld [vmem:[%s210 + $0x180] sm:$0xff]
      %v4300 = vld [vmem:[%s210 + $0x188] sm:$0xff]
      %v4301 = vld [vmem:[%s210 + $0x190] sm:$0xff]
      %v4302 = vld [vmem:[%s210 + $0x198] sm:$0xff]
      %v4303 = vld [vmem:[%s210 + $0x1a0] sm:$0xff]
      %v4304 = vld [vmem:[%s210 + $0x1a8] sm:$0xff]
      %v4305 = vld [vmem:[%s210 + $0x1b0] sm:$0xff]
      %v4306 = vld [vmem:[%s210 + $0x1b8] sm:$0xff]
      %v4307 = vld [vmem:[%s210 + $0x1c0] sm:$0xff]
      %v4308 = vld [vmem:[%s210 + $0x1c8] sm:$0xff]
      %v4309 = vld [vmem:[%s210 + $0x1d0] sm:$0xff]
      %v4310 = vld [vmem:[%s210 + $0x1d8] sm:$0xff]
      %v4311 = vld [vmem:[%s210 + $0x1e0] sm:$0xff]
      %v4312 = vld [vmem:[%s210 + $0x1e8] sm:$0xff]
      %v4313 = vld [vmem:[%s210 + $0x1f0] sm:$0xff]
      %v4314 = vld [vmem:[%s210 + $0x1f8] sm:$0xff]
      %v4315 = vld [vmem:[%s210 + $0x200] sm:$0xff]
      %v4316 = vld [vmem:[%s210 + $0x208] sm:$0xff]
      %v4317 = vld [vmem:[%s210 + $0x210] sm:$0xff]
      %v4318 = vld [vmem:[%s210 + $0x218] sm:$0xff]
      %v4319 = vld [vmem:[%s210 + $0x220] sm:$0xff]
      %v4320 = vld [vmem:[%s210 + $0x228] sm:$0xff]
      %v4321 = vld [vmem:[%s210 + $0x230] sm:$0xff]
      %v4322 = vld [vmem:[%s210 + $0x238] sm:$0xff]
      %v4323 = vld [vmem:[%s210 + $0x240] sm:$0xff]
      %v4324 = vld [vmem:[%s210 + $0x248] sm:$0xff]
      %v4325 = vld [vmem:[%s210 + $0x250] sm:$0xff]
      %v4326 = vld [vmem:[%s210 + $0x258] sm:$0xff]
      %v4327 = vld [vmem:[%s210 + $0x260] sm:$0xff]
      %v4328 = vld [vmem:[%s210 + $0x268] sm:$0xff]
      %v4329 = vld [vmem:[%s210 + $0x270] sm:$0xff]
      %v4330 = vld [vmem:[%s210 + $0x278] sm:$0xff]
      %v4331 = vld [vmem:[%s210 + $0x280] sm:$0xff]
      %v4332 = vld [vmem:[%s210 + $0x288] sm:$0xff]
      %v4333 = vld [vmem:[%s210 + $0x290] sm:$0xff]
      %v4334 = vld [vmem:[%s210 + $0x298] sm:$0xff]
      %v4335 = vld [vmem:[%s210 + $0x2a0] sm:$0xff]
      %v4336 = vld [vmem:[%s210 + $0x2a8] sm:$0xff]
      %v4337 = vld [vmem:[%s210 + $0x2b0] sm:$0xff]
      %v4338 = vld [vmem:[%s210 + $0x2b8] sm:$0xff]
      %v4339 = vld [vmem:[%s210 + $0x2c0] sm:$0xff]
      %v4340 = vld [vmem:[%s210 + $0x2c8] sm:$0xff]
      %v4341 = vld [vmem:[%s210 + $0x2d0] sm:$0xff]
      %v4342 = vld [vmem:[%s210 + $0x2d8] sm:$0xff]
      %v4343 = vld [vmem:[%s210 + $0x2e0] sm:$0xff]
      %v4344 = vld [vmem:[%s210 + $0x2e8] sm:$0xff]
      %v4345 = vld [vmem:[%s210 + $0x2f0] sm:$0xff]
      %v4346 = vld [vmem:[%s210 + $0x2f8] sm:$0xff]
      %v4347 = vld [vmem:[%s210 + $0x300] sm:$0xff]
      %v4348 = vld [vmem:[%s210 + $0x308] sm:$0xff]
      %v4349 = vld [vmem:[%s210 + $0x310] sm:$0xff]
      %v4350 = vld [vmem:[%s210 + $0x318] sm:$0xff]
      %v4351 = vld [vmem:[%s210 + $0x320] sm:$0xff]
      %v4352 = vld [vmem:[%s210 + $0x328] sm:$0xff]
      %v4353 = vld [vmem:[%s210 + $0x330] sm:$0xff]
      %v4354 = vld [vmem:[%s210 + $0x338] sm:$0xff]
      %v4355 = vld [vmem:[%s210 + $0x340] sm:$0xff]
      %v4356 = vld [vmem:[%s210 + $0x348] sm:$0xff]
      %v4357 = vld [vmem:[%s210 + $0x350] sm:$0xff]
      %v4358 = vld [vmem:[%s210 + $0x358] sm:$0xff]
      %v4359 = vld [vmem:[%s210 + $0x360] sm:$0xff]
      %v4360 = vld [vmem:[%s210 + $0x368] sm:$0xff]
      %v4361 = vld [vmem:[%s210 + $0x370] sm:$0xff]
      %v4362 = vld [vmem:[%s210 + $0x378] sm:$0xff]
      %v4363 = vld [vmem:[%s210 + $0x380] sm:$0xff]
      %v4364 = vld [vmem:[%s210 + $0x388] sm:$0xff]
      %v4365 = vld [vmem:[%s210 + $0x390] sm:$0xff]
      %v4366 = vld [vmem:[%s210 + $0x398] sm:$0xff]
      %v4367 = vld [vmem:[%s210 + $0x3a0] sm:$0xff]
      %v4368 = vld [vmem:[%s210 + $0x3a8] sm:$0xff]
      %v4369 = vld [vmem:[%s210 + $0x3b0] sm:$0xff]
      %v4370 = vld [vmem:[%s210 + $0x3b8] sm:$0xff]
      %v4371 = vld [vmem:[%s210 + $0x3c0] sm:$0xff]
      %v4372 = vld [vmem:[%s210 + $0x3c8] sm:$0xff]
      %v4373 = vld [vmem:[%s210 + $0x3d0] sm:$0xff]
      %v4374 = vld [vmem:[%s210 + $0x3d8] sm:$0xff]
      %v4375 = vld [vmem:[%s210 + $0x3e0] sm:$0xff]
      %v4376 = vld [vmem:[%s210 + $0x3e8] sm:$0xff]
      %v4377 = vld [vmem:[%s210 + $0x3f0] sm:$0xff]
      %v4378 = vld [vmem:[%s210 + $0x3f8] sm:$0xff]
      %v4379 = vld [vmem:[%s210 + $0x400] sm:$0xff]
      %v4380 = vld [vmem:[%s210 + $0x408] sm:$0xff]
      %v4381 = vld [vmem:[%s210 + $0x410] sm:$0xff]
      %v4382 = vld [vmem:[%s210 + $0x418] sm:$0xff]
      %v4383 = vld [vmem:[%s210 + $0x420] sm:$0xff]
      %v4384 = vld [vmem:[%s210 + $0x428] sm:$0xff]
      %v4385 = vld [vmem:[%s210 + $0x430] sm:$0xff]
      %v4386 = vld [vmem:[%s210 + $0x438] sm:$0xff]
      %v4387 = vld [vmem:[%s210 + $0x440] sm:$0xff]
      %v4388 = vld [vmem:[%s210 + $0x448] sm:$0xff]
      %v4389 = vld [vmem:[%s210 + $0x450] sm:$0xff]
      %v4390 = vld [vmem:[%s210 + $0x458] sm:$0xff]
      %v4391 = vld [vmem:[%s210 + $0x460] sm:$0xff]
      %v4392 = vld [vmem:[%s210 + $0x468] sm:$0xff]
      %v4393 = vld [vmem:[%s210 + $0x470] sm:$0xff]
      %v4394 = vld [vmem:[%s210 + $0x478] sm:$0xff]
      %v4395 = vmul.f32 %v1659, %v4107
      %v4396 = vmul.f32 %v1660, %v4108
      %v4397 = vmul.f32 %v1661, %v4109
      %v4398 = vmul.f32 %v1662, %v4110
      %v4399 = vmul.f32 %v1663, %v4111
      %v4400 = vmul.f32 %v1664, %v4112
      %v4401 = vmul.f32 %v1665, %v4113
      %v4402 = vmul.f32 %v1666, %v4114
      %v4403 = vmul.f32 %v1667, %v4115
      %v4404 = vmul.f32 %v1668, %v4116
      %v4405 = vmul.f32 %v1669, %v4117
      %v4406 = vmul.f32 %v1670, %v4118
      %v4407 = vmul.f32 %v1671, %v4119
      %v4408 = vmul.f32 %v1672, %v4120
      %v4409 = vmul.f32 %v1673, %v4121
      %v4410 = vmul.f32 %v1674, %v4122
      %v4411 = vmul.f32 %v1675, %v4123
      %v4412 = vmul.f32 %v1676, %v4124
      %v4413 = vmul.f32 %v1677, %v4125
      %v4414 = vmul.f32 %v1678, %v4126
      %v4415 = vmul.f32 %v1679, %v4127
      %v4416 = vmul.f32 %v1680, %v4128
      %v4417 = vmul.f32 %v1681, %v4129
      %v4418 = vmul.f32 %v1682, %v4130
      %v4419 = vmul.f32 %v1683, %v4131
      %v4420 = vmul.f32 %v1684, %v4132
      %v4421 = vmul.f32 %v1685, %v4133
      %v4422 = vmul.f32 %v1686, %v4134
      %v4423 = vmul.f32 %v1687, %v4135
      %v4424 = vmul.f32 %v1688, %v4136
      %v4425 = vmul.f32 %v1689, %v4137
      %v4426 = vmul.f32 %v1690, %v4138
      %v4427 = vmul.f32 %v1691, %v4139
      %v4428 = vmul.f32 %v1692, %v4140
      %v4429 = vmul.f32 %v1693, %v4141
      %v4430 = vmul.f32 %v1694, %v4142
      %v4431 = vmul.f32 %v1695, %v4143
      %v4432 = vmul.f32 %v1696, %v4144
      %v4433 = vmul.f32 %v1697, %v4145
      %v4434 = vmul.f32 %v1698, %v4146
      %v4435 = vmul.f32 %v1699, %v4147
      %v4436 = vmul.f32 %v1700, %v4148
      %v4437 = vmul.f32 %v1701, %v4149
      %v4438 = vmul.f32 %v1702, %v4150
      %v4439 = vmul.f32 %v1703, %v4151
      %v4440 = vmul.f32 %v1704, %v4152
      %v4441 = vmul.f32 %v1705, %v4153
      %v4442 = vmul.f32 %v1706, %v4154
      %v4443 = vmul.f32 %v1707, %v4155
      %v4444 = vmul.f32 %v1708, %v4156
      %v4445 = vmul.f32 %v1709, %v4157
      %v4446 = vmul.f32 %v1710, %v4158
      %v4447 = vmul.f32 %v1711, %v4159
      %v4448 = vmul.f32 %v1712, %v4160
      %v4449 = vmul.f32 %v1713, %v4161
      %v4450 = vmul.f32 %v1714, %v4162
      %v4451 = vmul.f32 %v1715, %v4163
      %v4452 = vmul.f32 %v1716, %v4164
      %v4453 = vmul.f32 %v1717, %v4165
      %v4454 = vmul.f32 %v1718, %v4166
      %v4455 = vmul.f32 %v1719, %v4167
      %v4456 = vmul.f32 %v1720, %v4168
      %v4457 = vmul.f32 %v1721, %v4169
      %v4458 = vmul.f32 %v1722, %v4170
      %v4459 = vmul.f32 %v1723, %v4171
      %v4460 = vmul.f32 %v1724, %v4172
      %v4461 = vmul.f32 %v1725, %v4173
      %v4462 = vmul.f32 %v1726, %v4174
      %v4463 = vmul.f32 %v1727, %v4175
      %v4464 = vmul.f32 %v1728, %v4176
      %v4465 = vmul.f32 %v1729, %v4177
      %v4466 = vmul.f32 %v1730, %v4178
      %v4467 = vmul.f32 %v1731, %v4179
      %v4468 = vmul.f32 %v1732, %v4180
      %v4469 = vmul.f32 %v1733, %v4181
      %v4470 = vmul.f32 %v1734, %v4182
      %v4471 = vmul.f32 %v1735, %v4183
      %v4472 = vmul.f32 %v1736, %v4184
      %v4473 = vmul.f32 %v1737, %v4185
      %v4474 = vmul.f32 %v1738, %v4186
      %v4475 = vmul.f32 %v1739, %v4187
      %v4476 = vmul.f32 %v1740, %v4188
      %v4477 = vmul.f32 %v1741, %v4189
      %v4478 = vmul.f32 %v1742, %v4190
      %v4479 = vmul.f32 %v1743, %v4191
      %v4480 = vmul.f32 %v1744, %v4192
      %v4481 = vmul.f32 %v1745, %v4193
      %v4482 = vmul.f32 %v1746, %v4194
      %v4483 = vmul.f32 %v1747, %v4195
      %v4484 = vmul.f32 %v1748, %v4196
      %v4485 = vmul.f32 %v1749, %v4197
      %v4486 = vmul.f32 %v1750, %v4198
      %v4487 = vmul.f32 %v1751, %v4199
      %v4488 = vmul.f32 %v1752, %v4200
      %v4489 = vmul.f32 %v1753, %v4201
      %v4490 = vmul.f32 %v1754, %v4202
      %v4491 = vmul.f32 %v1755, %v4203
      %v4492 = vmul.f32 %v1756, %v4204
      %v4493 = vmul.f32 %v1757, %v4205
      %v4494 = vmul.f32 %v1758, %v4206
      %v4495 = vmul.f32 %v1759, %v4207
      %v4496 = vmul.f32 %v1760, %v4208
      %v4497 = vmul.f32 %v1761, %v4209
      %v4498 = vmul.f32 %v1762, %v4210
      %v4499 = vmul.f32 %v1763, %v4211
      %v4500 = vmul.f32 %v1764, %v4212
      %v4501 = vmul.f32 %v1765, %v4213
      %v4502 = vmul.f32 %v1766, %v4214
      %v4503 = vmul.f32 %v1767, %v4215
      %v4504 = vmul.f32 %v1768, %v4216
      %v4505 = vmul.f32 %v1769, %v4217
      %v4506 = vmul.f32 %v1770, %v4218
      %v4507 = vmul.f32 %v1771, %v4219
      %v4508 = vmul.f32 %v1772, %v4220
      %v4509 = vmul.f32 %v1773, %v4221
      %v4510 = vmul.f32 %v1774, %v4222
      %v4511 = vmul.f32 %v1775, %v4223
      %v4512 = vmul.f32 %v1776, %v4224
      %v4513 = vmul.f32 %v1777, %v4225
      %v4514 = vmul.f32 %v1778, %v4226
      %v4515 = vmul.f32 %v1779, %v4227
      %v4516 = vmul.f32 %v1780, %v4228
      %v4517 = vmul.f32 %v1781, %v4229
      %v4518 = vmul.f32 %v1782, %v4230
      %v4519 = vmul.f32 %v1783, %v4231
      %v4520 = vmul.f32 %v1784, %v4232
      %v4521 = vmul.f32 %v1785, %v4233
      %v4522 = vmul.f32 %v1786, %v4234
      %v4523 = vmul.f32 %v1787, %v4235
      %v4524 = vmul.f32 %v1788, %v4236
      %v4525 = vmul.f32 %v1789, %v4237
      %v4526 = vmul.f32 %v1790, %v4238
      %v4527 = vmul.f32 %v1791, %v4239
      %v4528 = vmul.f32 %v1792, %v4240
      %v4529 = vmul.f32 %v1793, %v4241
      %v4530 = vmul.f32 %v1794, %v4242
      %v4531 = vmul.f32 %v1795, %v4243
      %v4532 = vmul.f32 %v1796, %v4244
      %v4533 = vmul.f32 %v1797, %v4245
      %v4534 = vmul.f32 %v1798, %v4246
      %v4535 = vmul.f32 %v1799, %v4247
      %v4536 = vmul.f32 %v1800, %v4248
      %v4537 = vmul.f32 %v1801, %v4249
      %v4538 = vmul.f32 %v1802, %v4250
      %v4539 = vsub.f32 %v4251, %v4395
      %v4540 = vsub.f32 %v4252, %v4396
      %v4541 = vsub.f32 %v4253, %v4397
      %v4542 = vsub.f32 %v4254, %v4398
      %v4543 = vsub.f32 %v4255, %v4399
      %v4544 = vsub.f32 %v4256, %v4400
      %v4545 = vsub.f32 %v4257, %v4401
      %v4546 = vsub.f32 %v4258, %v4402
      %v4547 = vsub.f32 %v4259, %v4403
      %v4548 = vsub.f32 %v4260, %v4404
      %v4549 = vsub.f32 %v4261, %v4405
      %v4550 = vsub.f32 %v4262, %v4406
      %v4551 = vsub.f32 %v4263, %v4407
      %v4552 = vsub.f32 %v4264, %v4408
      %v4553 = vsub.f32 %v4265, %v4409
      %v4554 = vsub.f32 %v4266, %v4410
      %v4555 = vsub.f32 %v4267, %v4411
      %v4556 = vsub.f32 %v4268, %v4412
      %v4557 = vsub.f32 %v4269, %v4413
      %v4558 = vsub.f32 %v4270, %v4414
      %v4559 = vsub.f32 %v4271, %v4415
      %v4560 = vsub.f32 %v4272, %v4416
      %v4561 = vsub.f32 %v4273, %v4417
      %v4562 = vsub.f32 %v4274, %v4418
      %v4563 = vsub.f32 %v4275, %v4419
      %v4564 = vsub.f32 %v4276, %v4420
      %v4565 = vsub.f32 %v4277, %v4421
      %v4566 = vsub.f32 %v4278, %v4422
      %v4567 = vsub.f32 %v4279, %v4423
      %v4568 = vsub.f32 %v4280, %v4424
      %v4569 = vsub.f32 %v4281, %v4425
      %v4570 = vsub.f32 %v4282, %v4426
      %v4571 = vsub.f32 %v4283, %v4427
      %v4572 = vsub.f32 %v4284, %v4428
      %v4573 = vsub.f32 %v4285, %v4429
      %v4574 = vsub.f32 %v4286, %v4430
      %v4575 = vsub.f32 %v4287, %v4431
      %v4576 = vsub.f32 %v4288, %v4432
      %v4577 = vsub.f32 %v4289, %v4433
      %v4578 = vsub.f32 %v4290, %v4434
      %v4579 = vsub.f32 %v4291, %v4435
      %v4580 = vsub.f32 %v4292, %v4436
      %v4581 = vsub.f32 %v4293, %v4437
      %v4582 = vsub.f32 %v4294, %v4438
      %v4583 = vsub.f32 %v4295, %v4439
      %v4584 = vsub.f32 %v4296, %v4440
      %v4585 = vsub.f32 %v4297, %v4441
      %v4586 = vsub.f32 %v4298, %v4442
      %v4587 = vsub.f32 %v4299, %v4443
      %v4588 = vsub.f32 %v4300, %v4444
      %v4589 = vsub.f32 %v4301, %v4445
      %v4590 = vsub.f32 %v4302, %v4446
      %v4591 = vsub.f32 %v4303, %v4447
      %v4592 = vsub.f32 %v4304, %v4448
      %v4593 = vsub.f32 %v4305, %v4449
      %v4594 = vsub.f32 %v4306, %v4450
      %v4595 = vsub.f32 %v4307, %v4451
      %v4596 = vsub.f32 %v4308, %v4452
      %v4597 = vsub.f32 %v4309, %v4453
      %v4598 = vsub.f32 %v4310, %v4454
      %v4599 = vsub.f32 %v4311, %v4455
      %v4600 = vsub.f32 %v4312, %v4456
      %v4601 = vsub.f32 %v4313, %v4457
      %v4602 = vsub.f32 %v4314, %v4458
      %v4603 = vsub.f32 %v4315, %v4459
      %v4604 = vsub.f32 %v4316, %v4460
      %v4605 = vsub.f32 %v4317, %v4461
      %v4606 = vsub.f32 %v4318, %v4462
      %v4607 = vsub.f32 %v4319, %v4463
      %v4608 = vsub.f32 %v4320, %v4464
      %v4609 = vsub.f32 %v4321, %v4465
      %v4610 = vsub.f32 %v4322, %v4466
      %v4611 = vsub.f32 %v4323, %v4467
      %v4612 = vsub.f32 %v4324, %v4468
      %v4613 = vsub.f32 %v4325, %v4469
      %v4614 = vsub.f32 %v4326, %v4470
      %v4615 = vsub.f32 %v4327, %v4471
      %v4616 = vsub.f32 %v4328, %v4472
      %v4617 = vsub.f32 %v4329, %v4473
      %v4618 = vsub.f32 %v4330, %v4474
      %v4619 = vsub.f32 %v4331, %v4475
      %v4620 = vsub.f32 %v4332, %v4476
      %v4621 = vsub.f32 %v4333, %v4477
      %v4622 = vsub.f32 %v4334, %v4478
      %v4623 = vsub.f32 %v4335, %v4479
      %v4624 = vsub.f32 %v4336, %v4480
      %v4625 = vsub.f32 %v4337, %v4481
      %v4626 = vsub.f32 %v4338, %v4482
      %v4627 = vsub.f32 %v4339, %v4483
      %v4628 = vsub.f32 %v4340, %v4484
      %v4629 = vsub.f32 %v4341, %v4485
      %v4630 = vsub.f32 %v4342, %v4486
      %v4631 = vsub.f32 %v4343, %v4487
      %v4632 = vsub.f32 %v4344, %v4488
      %v4633 = vsub.f32 %v4345, %v4489
      %v4634 = vsub.f32 %v4346, %v4490
      %v4635 = vsub.f32 %v4347, %v4491
      %v4636 = vsub.f32 %v4348, %v4492
      %v4637 = vsub.f32 %v4349, %v4493
      %v4638 = vsub.f32 %v4350, %v4494
      %v4639 = vsub.f32 %v4351, %v4495
      %v4640 = vsub.f32 %v4352, %v4496
      %v4641 = vsub.f32 %v4353, %v4497
      %v4642 = vsub.f32 %v4354, %v4498
      %v4643 = vsub.f32 %v4355, %v4499
      %v4644 = vsub.f32 %v4356, %v4500
      %v4645 = vsub.f32 %v4357, %v4501
      %v4646 = vsub.f32 %v4358, %v4502
      %v4647 = vsub.f32 %v4359, %v4503
      %v4648 = vsub.f32 %v4360, %v4504
      %v4649 = vsub.f32 %v4361, %v4505
      %v4650 = vsub.f32 %v4362, %v4506
      %v4651 = vsub.f32 %v4363, %v4507
      %v4652 = vsub.f32 %v4364, %v4508
      %v4653 = vsub.f32 %v4365, %v4509
      %v4654 = vsub.f32 %v4366, %v4510
      %v4655 = vsub.f32 %v4367, %v4511
      %v4656 = vsub.f32 %v4368, %v4512
      %v4657 = vsub.f32 %v4369, %v4513
      %v4658 = vsub.f32 %v4370, %v4514
      %v4659 = vsub.f32 %v4371, %v4515
      %v4660 = vsub.f32 %v4372, %v4516
      %v4661 = vsub.f32 %v4373, %v4517
      %v4662 = vsub.f32 %v4374, %v4518
      %v4663 = vsub.f32 %v4375, %v4519
      %v4664 = vsub.f32 %v4376, %v4520
      %v4665 = vsub.f32 %v4377, %v4521
      %v4666 = vsub.f32 %v4378, %v4522
      %v4667 = vsub.f32 %v4379, %v4523
      %v4668 = vsub.f32 %v4380, %v4524
      %v4669 = vsub.f32 %v4381, %v4525
      %v4670 = vsub.f32 %v4382, %v4526
      %v4671 = vsub.f32 %v4383, %v4527
      %v4672 = vsub.f32 %v4384, %v4528
      %v4673 = vsub.f32 %v4385, %v4529
      %v4674 = vsub.f32 %v4386, %v4530
      %v4675 = vsub.f32 %v4387, %v4531
      %v4676 = vsub.f32 %v4388, %v4532
      %v4677 = vsub.f32 %v4389, %v4533
      %v4678 = vsub.f32 %v4390, %v4534
      %v4679 = vsub.f32 %v4391, %v4535
      %v4680 = vsub.f32 %v4392, %v4536
      %v4681 = vsub.f32 %v4393, %v4537
      %v4682 = vsub.f32 %v4394, %v4538
      %4684 = vset.pattern.permute.xlu0 0
      %4685 = vperm.xlu0 %4684, %v4107
      %v4686 = vpop.permute.xlu0 %4685
      %4689 = vset.pattern.permute.xlu0 0
      %4690 = vperm.xlu0 %4689, %v4108
      %v4691 = vpop.permute.xlu0 %4690
      %4694 = vset.pattern.permute.xlu0 0
      %4695 = vperm.xlu0 %4694, %v4109
      %v4696 = vpop.permute.xlu0 %4695
      %4699 = vset.pattern.permute.xlu0 0
      %4700 = vperm.xlu0 %4699, %v4110
      %v4701 = vpop.permute.xlu0 %4700
      %4704 = vset.pattern.permute.xlu0 0
      %4705 = vperm.xlu0 %4704, %v4111
      %v4706 = vpop.permute.xlu0 %4705
      %4709 = vset.pattern.permute.xlu0 0
      %4710 = vperm.xlu0 %4709, %v4112
      %v4711 = vpop.permute.xlu0 %4710
      %4714 = vset.pattern.permute.xlu0 0
      %4715 = vperm.xlu0 %4714, %v4113
      %v4716 = vpop.permute.xlu0 %4715
      %4719 = vset.pattern.permute.xlu0 0
      %4720 = vperm.xlu0 %4719, %v4114
      %v4721 = vpop.permute.xlu0 %4720
      %4724 = vset.pattern.permute.xlu0 0
      %4725 = vperm.xlu0 %4724, %v4115
      %v4726 = vpop.permute.xlu0 %4725
      %4729 = vset.pattern.permute.xlu0 0
      %4730 = vperm.xlu0 %4729, %v4116
      %v4731 = vpop.permute.xlu0 %4730
      %4734 = vset.pattern.permute.xlu0 0
      %4735 = vperm.xlu0 %4734, %v4117
      %v4736 = vpop.permute.xlu0 %4735
      %4739 = vset.pattern.permute.xlu0 0
      %4740 = vperm.xlu0 %4739, %v4118
      %v4741 = vpop.permute.xlu0 %4740
      %4744 = vset.pattern.permute.xlu0 0
      %4745 = vperm.xlu0 %4744, %v4119
      %v4746 = vpop.permute.xlu0 %4745
      %4749 = vset.pattern.permute.xlu0 0
      %4750 = vperm.xlu0 %4749, %v4120
      %v4751 = vpop.permute.xlu0 %4750
      %4754 = vset.pattern.permute.xlu0 0
      %4755 = vperm.xlu0 %4754, %v4121
      %v4756 = vpop.permute.xlu0 %4755
      %4759 = vset.pattern.permute.xlu0 0
      %4760 = vperm.xlu0 %4759, %v4122
      %v4761 = vpop.permute.xlu0 %4760
      %4764 = vset.pattern.permute.xlu0 0
      %4765 = vperm.xlu0 %4764, %v4123
      %v4766 = vpop.permute.xlu0 %4765
      %4769 = vset.pattern.permute.xlu0 0
      %4770 = vperm.xlu0 %4769, %v4124
      %v4771 = vpop.permute.xlu0 %4770
      %4774 = vset.pattern.permute.xlu0 0
      %4775 = vperm.xlu0 %4774, %v4125
      %v4776 = vpop.permute.xlu0 %4775
      %4779 = vset.pattern.permute.xlu0 0
      %4780 = vperm.xlu0 %4779, %v4126
      %v4781 = vpop.permute.xlu0 %4780
      %4784 = vset.pattern.permute.xlu0 0
      %4785 = vperm.xlu0 %4784, %v4127
      %v4786 = vpop.permute.xlu0 %4785
      %4789 = vset.pattern.permute.xlu0 0
      %4790 = vperm.xlu0 %4789, %v4128
      %v4791 = vpop.permute.xlu0 %4790
      %4794 = vset.pattern.permute.xlu0 0
      %4795 = vperm.xlu0 %4794, %v4129
      %v4796 = vpop.permute.xlu0 %4795
      %4799 = vset.pattern.permute.xlu0 0
      %4800 = vperm.xlu0 %4799, %v4130
      %v4801 = vpop.permute.xlu0 %4800
      %4804 = vset.pattern.permute.xlu0 0
      %4805 = vperm.xlu0 %4804, %v4131
      %v4806 = vpop.permute.xlu0 %4805
      %4809 = vset.pattern.permute.xlu0 0
      %4810 = vperm.xlu0 %4809, %v4132
      %v4811 = vpop.permute.xlu0 %4810
      %4814 = vset.pattern.permute.xlu0 0
      %4815 = vperm.xlu0 %4814, %v4133
      %v4816 = vpop.permute.xlu0 %4815
      %4819 = vset.pattern.permute.xlu0 0
      %4820 = vperm.xlu0 %4819, %v4134
      %v4821 = vpop.permute.xlu0 %4820
      %4824 = vset.pattern.permute.xlu0 0
      %4825 = vperm.xlu0 %4824, %v4135
      %v4826 = vpop.permute.xlu0 %4825
      %4829 = vset.pattern.permute.xlu0 0
      %4830 = vperm.xlu0 %4829, %v4136
      %v4831 = vpop.permute.xlu0 %4830
      %4834 = vset.pattern.permute.xlu0 0
      %4835 = vperm.xlu0 %4834, %v4137
      %v4836 = vpop.permute.xlu0 %4835
      %4839 = vset.pattern.permute.xlu0 0
      %4840 = vperm.xlu0 %4839, %v4138
      %v4841 = vpop.permute.xlu0 %4840
      %4844 = vset.pattern.permute.xlu0 0
      %4845 = vperm.xlu0 %4844, %v4139
      %v4846 = vpop.permute.xlu0 %4845
      %4849 = vset.pattern.permute.xlu0 0
      %4850 = vperm.xlu0 %4849, %v4140
      %v4851 = vpop.permute.xlu0 %4850
      %4854 = vset.pattern.permute.xlu0 0
      %4855 = vperm.xlu0 %4854, %v4141
      %v4856 = vpop.permute.xlu0 %4855
      %4859 = vset.pattern.permute.xlu0 0
      %4860 = vperm.xlu0 %4859, %v4142
      %v4861 = vpop.permute.xlu0 %4860
      %4864 = vset.pattern.permute.xlu0 0
      %4865 = vperm.xlu0 %4864, %v4143
      %v4866 = vpop.permute.xlu0 %4865
      %4869 = vset.pattern.permute.xlu0 0
      %4870 = vperm.xlu0 %4869, %v4144
      %v4871 = vpop.permute.xlu0 %4870
      %4874 = vset.pattern.permute.xlu0 0
      %4875 = vperm.xlu0 %4874, %v4145
      %v4876 = vpop.permute.xlu0 %4875
      %4879 = vset.pattern.permute.xlu0 0
      %4880 = vperm.xlu0 %4879, %v4146
      %v4881 = vpop.permute.xlu0 %4880
      %4884 = vset.pattern.permute.xlu0 0
      %4885 = vperm.xlu0 %4884, %v4147
      %v4886 = vpop.permute.xlu0 %4885
      %4889 = vset.pattern.permute.xlu0 0
      %4890 = vperm.xlu0 %4889, %v4148
      %v4891 = vpop.permute.xlu0 %4890
      %4894 = vset.pattern.permute.xlu0 0
      %4895 = vperm.xlu0 %4894, %v4149
      %v4896 = vpop.permute.xlu0 %4895
      %4899 = vset.pattern.permute.xlu0 0
      %4900 = vperm.xlu0 %4899, %v4150
      %v4901 = vpop.permute.xlu0 %4900
      %4904 = vset.pattern.permute.xlu0 0
      %4905 = vperm.xlu0 %4904, %v4151
      %v4906 = vpop.permute.xlu0 %4905
      %4909 = vset.pattern.permute.xlu0 0
      %4910 = vperm.xlu0 %4909, %v4152
      %v4911 = vpop.permute.xlu0 %4910
      %4914 = vset.pattern.permute.xlu0 0
      %4915 = vperm.xlu0 %4914, %v4153
      %v4916 = vpop.permute.xlu0 %4915
      %4919 = vset.pattern.permute.xlu0 0
      %4920 = vperm.xlu0 %4919, %v4154
      %v4921 = vpop.permute.xlu0 %4920
      %4924 = vset.pattern.permute.xlu0 0
      %4925 = vperm.xlu0 %4924, %v4155
      %v4926 = vpop.permute.xlu0 %4925
      %4929 = vset.pattern.permute.xlu0 0
      %4930 = vperm.xlu0 %4929, %v4156
      %v4931 = vpop.permute.xlu0 %4930
      %4934 = vset.pattern.permute.xlu0 0
      %4935 = vperm.xlu0 %4934, %v4157
      %v4936 = vpop.permute.xlu0 %4935
      %4939 = vset.pattern.permute.xlu0 0
      %4940 = vperm.xlu0 %4939, %v4158
      %v4941 = vpop.permute.xlu0 %4940
      %4944 = vset.pattern.permute.xlu0 0
      %4945 = vperm.xlu0 %4944, %v4159
      %v4946 = vpop.permute.xlu0 %4945
      %4949 = vset.pattern.permute.xlu0 0
      %4950 = vperm.xlu0 %4949, %v4160
      %v4951 = vpop.permute.xlu0 %4950
      %4954 = vset.pattern.permute.xlu0 0
      %4955 = vperm.xlu0 %4954, %v4161
      %v4956 = vpop.permute.xlu0 %4955
      %4959 = vset.pattern.permute.xlu0 0
      %4960 = vperm.xlu0 %4959, %v4162
      %v4961 = vpop.permute.xlu0 %4960
      %4964 = vset.pattern.permute.xlu0 0
      %4965 = vperm.xlu0 %4964, %v4163
      %v4966 = vpop.permute.xlu0 %4965
      %4969 = vset.pattern.permute.xlu0 0
      %4970 = vperm.xlu0 %4969, %v4164
      %v4971 = vpop.permute.xlu0 %4970
      %4974 = vset.pattern.permute.xlu0 0
      %4975 = vperm.xlu0 %4974, %v4165
      %v4976 = vpop.permute.xlu0 %4975
      %4979 = vset.pattern.permute.xlu0 0
      %4980 = vperm.xlu0 %4979, %v4166
      %v4981 = vpop.permute.xlu0 %4980
      %4984 = vset.pattern.permute.xlu0 0
      %4985 = vperm.xlu0 %4984, %v4167
      %v4986 = vpop.permute.xlu0 %4985
      %4989 = vset.pattern.permute.xlu0 0
      %4990 = vperm.xlu0 %4989, %v4168
      %v4991 = vpop.permute.xlu0 %4990
      %4994 = vset.pattern.permute.xlu0 0
      %4995 = vperm.xlu0 %4994, %v4169
      %v4996 = vpop.permute.xlu0 %4995
      %4999 = vset.pattern.permute.xlu0 0
      %5000 = vperm.xlu0 %4999, %v4170
      %v5001 = vpop.permute.xlu0 %5000
      %5004 = vset.pattern.permute.xlu0 0
      %5005 = vperm.xlu0 %5004, %v4171
      %v5006 = vpop.permute.xlu0 %5005
      %5009 = vset.pattern.permute.xlu0 0
      %5010 = vperm.xlu0 %5009, %v4172
      %v5011 = vpop.permute.xlu0 %5010
      %5014 = vset.pattern.permute.xlu0 0
      %5015 = vperm.xlu0 %5014, %v4173
      %v5016 = vpop.permute.xlu0 %5015
      %5019 = vset.pattern.permute.xlu0 0
      %5020 = vperm.xlu0 %5019, %v4174
      %v5021 = vpop.permute.xlu0 %5020
      %5024 = vset.pattern.permute.xlu0 0
      %5025 = vperm.xlu0 %5024, %v4175
      %v5026 = vpop.permute.xlu0 %5025
      %5029 = vset.pattern.permute.xlu0 0
      %5030 = vperm.xlu0 %5029, %v4176
      %v5031 = vpop.permute.xlu0 %5030
      %5034 = vset.pattern.permute.xlu0 0
      %5035 = vperm.xlu0 %5034, %v4177
      %v5036 = vpop.permute.xlu0 %5035
      %5039 = vset.pattern.permute.xlu0 0
      %5040 = vperm.xlu0 %5039, %v4178
      %v5041 = vpop.permute.xlu0 %5040
      %5044 = vset.pattern.permute.xlu0 0
      %5045 = vperm.xlu0 %5044, %v4179
      %v5046 = vpop.permute.xlu0 %5045
      %5049 = vset.pattern.permute.xlu0 0
      %5050 = vperm.xlu0 %5049, %v4180
      %v5051 = vpop.permute.xlu0 %5050
      %5054 = vset.pattern.permute.xlu0 0
      %5055 = vperm.xlu0 %5054, %v4181
      %v5056 = vpop.permute.xlu0 %5055
      %5059 = vset.pattern.permute.xlu0 0
      %5060 = vperm.xlu0 %5059, %v4182
      %v5061 = vpop.permute.xlu0 %5060
      %5064 = vset.pattern.permute.xlu0 0
      %5065 = vperm.xlu0 %5064, %v4183
      %v5066 = vpop.permute.xlu0 %5065
      %5069 = vset.pattern.permute.xlu0 0
      %5070 = vperm.xlu0 %5069, %v4184
      %v5071 = vpop.permute.xlu0 %5070
      %5074 = vset.pattern.permute.xlu0 0
      %5075 = vperm.xlu0 %5074, %v4185
      %v5076 = vpop.permute.xlu0 %5075
      %5079 = vset.pattern.permute.xlu0 0
      %5080 = vperm.xlu0 %5079, %v4186
      %v5081 = vpop.permute.xlu0 %5080
      %5084 = vset.pattern.permute.xlu0 0
      %5085 = vperm.xlu0 %5084, %v4187
      %v5086 = vpop.permute.xlu0 %5085
      %5089 = vset.pattern.permute.xlu0 0
      %5090 = vperm.xlu0 %5089, %v4188
      %v5091 = vpop.permute.xlu0 %5090
      %5094 = vset.pattern.permute.xlu0 0
      %5095 = vperm.xlu0 %5094, %v4189
      %v5096 = vpop.permute.xlu0 %5095
      %5099 = vset.pattern.permute.xlu0 0
      %5100 = vperm.xlu0 %5099, %v4190
      %v5101 = vpop.permute.xlu0 %5100
      %5104 = vset.pattern.permute.xlu0 0
      %5105 = vperm.xlu0 %5104, %v4191
      %v5106 = vpop.permute.xlu0 %5105
      %5109 = vset.pattern.permute.xlu0 0
      %5110 = vperm.xlu0 %5109, %v4192
      %v5111 = vpop.permute.xlu0 %5110
      %5114 = vset.pattern.permute.xlu0 0
      %5115 = vperm.xlu0 %5114, %v4193
      %v5116 = vpop.permute.xlu0 %5115
      %5119 = vset.pattern.permute.xlu0 0
      %5120 = vperm.xlu0 %5119, %v4194
      %v5121 = vpop.permute.xlu0 %5120
      %5124 = vset.pattern.permute.xlu0 0
      %5125 = vperm.xlu0 %5124, %v4195
      %v5126 = vpop.permute.xlu0 %5125
      %5129 = vset.pattern.permute.xlu0 0
      %5130 = vperm.xlu0 %5129, %v4196
      %v5131 = vpop.permute.xlu0 %5130
      %5134 = vset.pattern.permute.xlu0 0
      %5135 = vperm.xlu0 %5134, %v4197
      %v5136 = vpop.permute.xlu0 %5135
      %5139 = vset.pattern.permute.xlu0 0
      %5140 = vperm.xlu0 %5139, %v4198
      %v5141 = vpop.permute.xlu0 %5140
      %5144 = vset.pattern.permute.xlu0 0
      %5145 = vperm.xlu0 %5144, %v4199
      %v5146 = vpop.permute.xlu0 %5145
      %5149 = vset.pattern.permute.xlu0 0
      %5150 = vperm.xlu0 %5149, %v4200
      %v5151 = vpop.permute.xlu0 %5150
      %5154 = vset.pattern.permute.xlu0 0
      %5155 = vperm.xlu0 %5154, %v4201
      %v5156 = vpop.permute.xlu0 %5155
      %5159 = vset.pattern.permute.xlu0 0
      %5160 = vperm.xlu0 %5159, %v4202
      %v5161 = vpop.permute.xlu0 %5160
      %5164 = vset.pattern.permute.xlu0 0
      %5165 = vperm.xlu0 %5164, %v4203
      %v5166 = vpop.permute.xlu0 %5165
      %5169 = vset.pattern.permute.xlu0 0
      %5170 = vperm.xlu0 %5169, %v4204
      %v5171 = vpop.permute.xlu0 %5170
      %5174 = vset.pattern.permute.xlu0 0
      %5175 = vperm.xlu0 %5174, %v4205
      %v5176 = vpop.permute.xlu0 %5175
      %5179 = vset.pattern.permute.xlu0 0
      %5180 = vperm.xlu0 %5179, %v4206
      %v5181 = vpop.permute.xlu0 %5180
      %5184 = vset.pattern.permute.xlu0 0
      %5185 = vperm.xlu0 %5184, %v4207
      %v5186 = vpop.permute.xlu0 %5185
      %5189 = vset.pattern.permute.xlu0 0
      %5190 = vperm.xlu0 %5189, %v4208
      %v5191 = vpop.permute.xlu0 %5190
      %5194 = vset.pattern.permute.xlu0 0
      %5195 = vperm.xlu0 %5194, %v4209
      %v5196 = vpop.permute.xlu0 %5195
      %5199 = vset.pattern.permute.xlu0 0
      %5200 = vperm.xlu0 %5199, %v4210
      %v5201 = vpop.permute.xlu0 %5200
      %5204 = vset.pattern.permute.xlu0 0
      %5205 = vperm.xlu0 %5204, %v4211
      %v5206 = vpop.permute.xlu0 %5205
      %5209 = vset.pattern.permute.xlu0 0
      %5210 = vperm.xlu0 %5209, %v4212
      %v5211 = vpop.permute.xlu0 %5210
      %5214 = vset.pattern.permute.xlu0 0
      %5215 = vperm.xlu0 %5214, %v4213
      %v5216 = vpop.permute.xlu0 %5215
      %5219 = vset.pattern.permute.xlu0 0
      %5220 = vperm.xlu0 %5219, %v4214
      %v5221 = vpop.permute.xlu0 %5220
      %5224 = vset.pattern.permute.xlu0 0
      %5225 = vperm.xlu0 %5224, %v4215
      %v5226 = vpop.permute.xlu0 %5225
      %5229 = vset.pattern.permute.xlu0 0
      %5230 = vperm.xlu0 %5229, %v4216
      %v5231 = vpop.permute.xlu0 %5230
      %5234 = vset.pattern.permute.xlu0 0
      %5235 = vperm.xlu0 %5234, %v4217
      %v5236 = vpop.permute.xlu0 %5235
      %5239 = vset.pattern.permute.xlu0 0
      %5240 = vperm.xlu0 %5239, %v4218
      %v5241 = vpop.permute.xlu0 %5240
      %5244 = vset.pattern.permute.xlu0 0
      %5245 = vperm.xlu0 %5244, %v4219
      %v5246 = vpop.permute.xlu0 %5245
      %5249 = vset.pattern.permute.xlu0 0
      %5250 = vperm.xlu0 %5249, %v4220
      %v5251 = vpop.permute.xlu0 %5250
      %5254 = vset.pattern.permute.xlu0 0
      %5255 = vperm.xlu0 %5254, %v4221
      %v5256 = vpop.permute.xlu0 %5255
      %5259 = vset.pattern.permute.xlu0 0
      %5260 = vperm.xlu0 %5259, %v4222
      %v5261 = vpop.permute.xlu0 %5260
      %5264 = vset.pattern.permute.xlu0 0
      %5265 = vperm.xlu0 %5264, %v4223
      %v5266 = vpop.permute.xlu0 %5265
      %5269 = vset.pattern.permute.xlu0 0
      %5270 = vperm.xlu0 %5269, %v4224
      %v5271 = vpop.permute.xlu0 %5270
      %5274 = vset.pattern.permute.xlu0 0
      %5275 = vperm.xlu0 %5274, %v4225
      %v5276 = vpop.permute.xlu0 %5275
      %5279 = vset.pattern.permute.xlu0 0
      %5280 = vperm.xlu0 %5279, %v4226
      %v5281 = vpop.permute.xlu0 %5280
      %5284 = vset.pattern.permute.xlu0 0
      %5285 = vperm.xlu0 %5284, %v4227
      %v5286 = vpop.permute.xlu0 %5285
      %5289 = vset.pattern.permute.xlu0 0
      %5290 = vperm.xlu0 %5289, %v4228
      %v5291 = vpop.permute.xlu0 %5290
      %5294 = vset.pattern.permute.xlu0 0
      %5295 = vperm.xlu0 %5294, %v4229
      %v5296 = vpop.permute.xlu0 %5295
      %5299 = vset.pattern.permute.xlu0 0
      %5300 = vperm.xlu0 %5299, %v4230
      %v5301 = vpop.permute.xlu0 %5300
      %5304 = vset.pattern.permute.xlu0 0
      %5305 = vperm.xlu0 %5304, %v4231
      %v5306 = vpop.permute.xlu0 %5305
      %5309 = vset.pattern.permute.xlu0 0
      %5310 = vperm.xlu0 %5309, %v4232
      %v5311 = vpop.permute.xlu0 %5310
      %5314 = vset.pattern.permute.xlu0 0
      %5315 = vperm.xlu0 %5314, %v4233
      %v5316 = vpop.permute.xlu0 %5315
      %5319 = vset.pattern.permute.xlu0 0
      %5320 = vperm.xlu0 %5319, %v4234
      %v5321 = vpop.permute.xlu0 %5320
      %5324 = vset.pattern.permute.xlu0 0
      %5325 = vperm.xlu0 %5324, %v4235
      %v5326 = vpop.permute.xlu0 %5325
      %5329 = vset.pattern.permute.xlu0 0
      %5330 = vperm.xlu0 %5329, %v4236
      %v5331 = vpop.permute.xlu0 %5330
      %5334 = vset.pattern.permute.xlu0 0
      %5335 = vperm.xlu0 %5334, %v4237
      %v5336 = vpop.permute.xlu0 %5335
      %5339 = vset.pattern.permute.xlu0 0
      %5340 = vperm.xlu0 %5339, %v4238
      %v5341 = vpop.permute.xlu0 %5340
      %5344 = vset.pattern.permute.xlu0 0
      %5345 = vperm.xlu0 %5344, %v4239
      %v5346 = vpop.permute.xlu0 %5345
      %5349 = vset.pattern.permute.xlu0 0
      %5350 = vperm.xlu0 %5349, %v4240
      %v5351 = vpop.permute.xlu0 %5350
      %5354 = vset.pattern.permute.xlu0 0
      %5355 = vperm.xlu0 %5354, %v4241
      %v5356 = vpop.permute.xlu0 %5355
      %5359 = vset.pattern.permute.xlu0 0
      %5360 = vperm.xlu0 %5359, %v4242
      %v5361 = vpop.permute.xlu0 %5360
      %5364 = vset.pattern.permute.xlu0 0
      %5365 = vperm.xlu0 %5364, %v4243
      %v5366 = vpop.permute.xlu0 %5365
      %5369 = vset.pattern.permute.xlu0 0
      %5370 = vperm.xlu0 %5369, %v4244
      %v5371 = vpop.permute.xlu0 %5370
      %5374 = vset.pattern.permute.xlu0 0
      %5375 = vperm.xlu0 %5374, %v4245
      %v5376 = vpop.permute.xlu0 %5375
      %5379 = vset.pattern.permute.xlu0 0
      %5380 = vperm.xlu0 %5379, %v4246
      %v5381 = vpop.permute.xlu0 %5380
      %5384 = vset.pattern.permute.xlu0 0
      %5385 = vperm.xlu0 %5384, %v4247
      %v5386 = vpop.permute.xlu0 %5385
      %5389 = vset.pattern.permute.xlu0 0
      %5390 = vperm.xlu0 %5389, %v4248
      %v5391 = vpop.permute.xlu0 %5390
      %5394 = vset.pattern.permute.xlu0 0
      %5395 = vperm.xlu0 %5394, %v4249
      %v5396 = vpop.permute.xlu0 %5395
      %5399 = vset.pattern.permute.xlu0 0
      %5400 = vperm.xlu0 %5399, %v4250
      %v5401 = vpop.permute.xlu0 %5400
      %v5403 = vmul.f32 %v218, %v4686
      %v5404 = vmul.f32 %v219, %v4691
      %v5405 = vmul.f32 %v220, %v4696
      %v5406 = vmul.f32 %v221, %v4701
      %v5407 = vmul.f32 %v222, %v4706
      %v5408 = vmul.f32 %v223, %v4711
      %v5409 = vmul.f32 %v224, %v4716
      %v5410 = vmul.f32 %v225, %v4721
      %v5411 = vmul.f32 %v226, %v4726
      %v5412 = vmul.f32 %v227, %v4731
      %v5413 = vmul.f32 %v228, %v4736
      %v5414 = vmul.f32 %v229, %v4741
      %v5415 = vmul.f32 %v230, %v4746
      %v5416 = vmul.f32 %v231, %v4751
      %v5417 = vmul.f32 %v232, %v4756
      %v5418 = vmul.f32 %v233, %v4761
      %v5419 = vmul.f32 %v234, %v4766
      %v5420 = vmul.f32 %v235, %v4771
      %v5421 = vmul.f32 %v236, %v4776
      %v5422 = vmul.f32 %v237, %v4781
      %v5423 = vmul.f32 %v238, %v4786
      %v5424 = vmul.f32 %v239, %v4791
      %v5425 = vmul.f32 %v240, %v4796
      %v5426 = vmul.f32 %v241, %v4801
      %v5427 = vmul.f32 %v242, %v4806
      %v5428 = vmul.f32 %v243, %v4811
      %v5429 = vmul.f32 %v244, %v4816
      %v5430 = vmul.f32 %v245, %v4821
      %v5431 = vmul.f32 %v246, %v4826
      %v5432 = vmul.f32 %v247, %v4831
      %v5433 = vmul.f32 %v248, %v4836
      %v5434 = vmul.f32 %v249, %v4841
      %v5435 = vmul.f32 %v250, %v4846
      %v5436 = vmul.f32 %v251, %v4851
      %v5437 = vmul.f32 %v252, %v4856
      %v5438 = vmul.f32 %v253, %v4861
      %v5439 = vmul.f32 %v254, %v4866
      %v5440 = vmul.f32 %v255, %v4871
      %v5441 = vmul.f32 %v256, %v4876
      %v5442 = vmul.f32 %v257, %v4881
      %v5443 = vmul.f32 %v258, %v4886
      %v5444 = vmul.f32 %v259, %v4891
      %v5445 = vmul.f32 %v260, %v4896
      %v5446 = vmul.f32 %v261, %v4901
      %v5447 = vmul.f32 %v262, %v4906
      %v5448 = vmul.f32 %v263, %v4911
      %v5449 = vmul.f32 %v264, %v4916
      %v5450 = vmul.f32 %v265, %v4921
      %v5451 = vmul.f32 %v266, %v4926
      %v5452 = vmul.f32 %v267, %v4931
      %v5453 = vmul.f32 %v268, %v4936
      %v5454 = vmul.f32 %v269, %v4941
      %v5455 = vmul.f32 %v270, %v4946
      %v5456 = vmul.f32 %v271, %v4951
      %v5457 = vmul.f32 %v272, %v4956
      %v5458 = vmul.f32 %v273, %v4961
      %v5459 = vmul.f32 %v274, %v4966
      %v5460 = vmul.f32 %v275, %v4971
      %v5461 = vmul.f32 %v276, %v4976
      %v5462 = vmul.f32 %v277, %v4981
      %v5463 = vmul.f32 %v278, %v4986
      %v5464 = vmul.f32 %v279, %v4991
      %v5465 = vmul.f32 %v280, %v4996
      %v5466 = vmul.f32 %v281, %v5001
      %v5467 = vmul.f32 %v282, %v5006
      %v5468 = vmul.f32 %v283, %v5011
      %v5469 = vmul.f32 %v284, %v5016
      %v5470 = vmul.f32 %v285, %v5021
      %v5471 = vmul.f32 %v286, %v5026
      %v5472 = vmul.f32 %v287, %v5031
      %v5473 = vmul.f32 %v288, %v5036
      %v5474 = vmul.f32 %v289, %v5041
      %v5475 = vmul.f32 %v290, %v5046
      %v5476 = vmul.f32 %v291, %v5051
      %v5477 = vmul.f32 %v292, %v5056
      %v5478 = vmul.f32 %v293, %v5061
      %v5479 = vmul.f32 %v294, %v5066
      %v5480 = vmul.f32 %v295, %v5071
      %v5481 = vmul.f32 %v296, %v5076
      %v5482 = vmul.f32 %v297, %v5081
      %v5483 = vmul.f32 %v298, %v5086
      %v5484 = vmul.f32 %v299, %v5091
      %v5485 = vmul.f32 %v300, %v5096
      %v5486 = vmul.f32 %v301, %v5101
      %v5487 = vmul.f32 %v302, %v5106
      %v5488 = vmul.f32 %v303, %v5111
      %v5489 = vmul.f32 %v304, %v5116
      %v5490 = vmul.f32 %v305, %v5121
      %v5491 = vmul.f32 %v306, %v5126
      %v5492 = vmul.f32 %v307, %v5131
      %v5493 = vmul.f32 %v308, %v5136
      %v5494 = vmul.f32 %v309, %v5141
      %v5495 = vmul.f32 %v310, %v5146
      %v5496 = vmul.f32 %v311, %v5151
      %v5497 = vmul.f32 %v312, %v5156
      %v5498 = vmul.f32 %v313, %v5161
      %v5499 = vmul.f32 %v314, %v5166
      %v5500 = vmul.f32 %v315, %v5171
      %v5501 = vmul.f32 %v316, %v5176
      %v5502 = vmul.f32 %v317, %v5181
      %v5503 = vmul.f32 %v318, %v5186
      %v5504 = vmul.f32 %v319, %v5191
      %v5505 = vmul.f32 %v320, %v5196
      %v5506 = vmul.f32 %v321, %v5201
      %v5507 = vmul.f32 %v322, %v5206
      %v5508 = vmul.f32 %v323, %v5211
      %v5509 = vmul.f32 %v324, %v5216
      %v5510 = vmul.f32 %v325, %v5221
      %v5511 = vmul.f32 %v326, %v5226
      %v5512 = vmul.f32 %v327, %v5231
      %v5513 = vmul.f32 %v328, %v5236
      %v5514 = vmul.f32 %v329, %v5241
      %v5515 = vmul.f32 %v330, %v5246
      %v5516 = vmul.f32 %v331, %v5251
      %v5517 = vmul.f32 %v332, %v5256
      %v5518 = vmul.f32 %v333, %v5261
      %v5519 = vmul.f32 %v334, %v5266
      %v5520 = vmul.f32 %v335, %v5271
      %v5521 = vmul.f32 %v336, %v5276
      %v5522 = vmul.f32 %v337, %v5281
      %v5523 = vmul.f32 %v338, %v5286
      %v5524 = vmul.f32 %v339, %v5291
      %v5525 = vmul.f32 %v340, %v5296
      %v5526 = vmul.f32 %v341, %v5301
      %v5527 = vmul.f32 %v342, %v5306
      %v5528 = vmul.f32 %v343, %v5311
      %v5529 = vmul.f32 %v344, %v5316
      %v5530 = vmul.f32 %v345, %v5321
      %v5531 = vmul.f32 %v346, %v5326
      %v5532 = vmul.f32 %v347, %v5331
      %v5533 = vmul.f32 %v348, %v5336
      %v5534 = vmul.f32 %v349, %v5341
      %v5535 = vmul.f32 %v350, %v5346
      %v5536 = vmul.f32 %v351, %v5351
      %v5537 = vmul.f32 %v352, %v5356
      %v5538 = vmul.f32 %v353, %v5361
      %v5539 = vmul.f32 %v354, %v5366
      %v5540 = vmul.f32 %v355, %v5371
      %v5541 = vmul.f32 %v356, %v5376
      %v5542 = vmul.f32 %v357, %v5381
      %v5543 = vmul.f32 %v358, %v5386
      %v5544 = vmul.f32 %v359, %v5391
      %v5545 = vmul.f32 %v360, %v5396
      %v5546 = vmul.f32 %v361, %v5401
      %5548 = vset.pattern.permute.xlu0 0
      %5549 = vperm.xlu0 %5548, %v4539
      %v5550 = vpop.permute.xlu0 %5549
      %5553 = vset.pattern.permute.xlu0 0
      %5554 = vperm.xlu0 %5553, %v4540
      %v5555 = vpop.permute.xlu0 %5554
      %5558 = vset.pattern.permute.xlu0 0
      %5559 = vperm.xlu0 %5558, %v4541
      %v5560 = vpop.permute.xlu0 %5559
      %5563 = vset.pattern.permute.xlu0 0
      %5564 = vperm.xlu0 %5563, %v4542
      %v5565 = vpop.permute.xlu0 %5564
      %5568 = vset.pattern.permute.xlu0 0
      %5569 = vperm.xlu0 %5568, %v4543
      %v5570 = vpop.permute.xlu0 %5569
      %5573 = vset.pattern.permute.xlu0 0
      %5574 = vperm.xlu0 %5573, %v4544
      %v5575 = vpop.permute.xlu0 %5574
      %5578 = vset.pattern.permute.xlu0 0
      %5579 = vperm.xlu0 %5578, %v4545
      %v5580 = vpop.permute.xlu0 %5579
      %5583 = vset.pattern.permute.xlu0 0
      %5584 = vperm.xlu0 %5583, %v4546
      %v5585 = vpop.permute.xlu0 %5584
      %5588 = vset.pattern.permute.xlu0 0
      %5589 = vperm.xlu0 %5588, %v4547
      %v5590 = vpop.permute.xlu0 %5589
      %5593 = vset.pattern.permute.xlu0 0
      %5594 = vperm.xlu0 %5593, %v4548
      %v5595 = vpop.permute.xlu0 %5594
      %5598 = vset.pattern.permute.xlu0 0
      %5599 = vperm.xlu0 %5598, %v4549
      %v5600 = vpop.permute.xlu0 %5599
      %5603 = vset.pattern.permute.xlu0 0
      %5604 = vperm.xlu0 %5603, %v4550
      %v5605 = vpop.permute.xlu0 %5604
      %5608 = vset.pattern.permute.xlu0 0
      %5609 = vperm.xlu0 %5608, %v4551
      %v5610 = vpop.permute.xlu0 %5609
      %5613 = vset.pattern.permute.xlu0 0
      %5614 = vperm.xlu0 %5613, %v4552
      %v5615 = vpop.permute.xlu0 %5614
      %5618 = vset.pattern.permute.xlu0 0
      %5619 = vperm.xlu0 %5618, %v4553
      %v5620 = vpop.permute.xlu0 %5619
      %5623 = vset.pattern.permute.xlu0 0
      %5624 = vperm.xlu0 %5623, %v4554
      %v5625 = vpop.permute.xlu0 %5624
      %5628 = vset.pattern.permute.xlu0 0
      %5629 = vperm.xlu0 %5628, %v4555
      %v5630 = vpop.permute.xlu0 %5629
      %5633 = vset.pattern.permute.xlu0 0
      %5634 = vperm.xlu0 %5633, %v4556
      %v5635 = vpop.permute.xlu0 %5634
      %5638 = vset.pattern.permute.xlu0 0
      %5639 = vperm.xlu0 %5638, %v4557
      %v5640 = vpop.permute.xlu0 %5639
      %5643 = vset.pattern.permute.xlu0 0
      %5644 = vperm.xlu0 %5643, %v4558
      %v5645 = vpop.permute.xlu0 %5644
      %5648 = vset.pattern.permute.xlu0 0
      %5649 = vperm.xlu0 %5648, %v4559
      %v5650 = vpop.permute.xlu0 %5649
      %5653 = vset.pattern.permute.xlu0 0
      %5654 = vperm.xlu0 %5653, %v4560
      %v5655 = vpop.permute.xlu0 %5654
      %5658 = vset.pattern.permute.xlu0 0
      %5659 = vperm.xlu0 %5658, %v4561
      %v5660 = vpop.permute.xlu0 %5659
      %5663 = vset.pattern.permute.xlu0 0
      %5664 = vperm.xlu0 %5663, %v4562
      %v5665 = vpop.permute.xlu0 %5664
      %5668 = vset.pattern.permute.xlu0 0
      %5669 = vperm.xlu0 %5668, %v4563
      %v5670 = vpop.permute.xlu0 %5669
      %5673 = vset.pattern.permute.xlu0 0
      %5674 = vperm.xlu0 %5673, %v4564
      %v5675 = vpop.permute.xlu0 %5674
      %5678 = vset.pattern.permute.xlu0 0
      %5679 = vperm.xlu0 %5678, %v4565
      %v5680 = vpop.permute.xlu0 %5679
      %5683 = vset.pattern.permute.xlu0 0
      %5684 = vperm.xlu0 %5683, %v4566
      %v5685 = vpop.permute.xlu0 %5684
      %5688 = vset.pattern.permute.xlu0 0
      %5689 = vperm.xlu0 %5688, %v4567
      %v5690 = vpop.permute.xlu0 %5689
      %5693 = vset.pattern.permute.xlu0 0
      %5694 = vperm.xlu0 %5693, %v4568
      %v5695 = vpop.permute.xlu0 %5694
      %5698 = vset.pattern.permute.xlu0 0
      %5699 = vperm.xlu0 %5698, %v4569
      %v5700 = vpop.permute.xlu0 %5699
      %5703 = vset.pattern.permute.xlu0 0
      %5704 = vperm.xlu0 %5703, %v4570
      %v5705 = vpop.permute.xlu0 %5704
      %5708 = vset.pattern.permute.xlu0 0
      %5709 = vperm.xlu0 %5708, %v4571
      %v5710 = vpop.permute.xlu0 %5709
      %5713 = vset.pattern.permute.xlu0 0
      %5714 = vperm.xlu0 %5713, %v4572
      %v5715 = vpop.permute.xlu0 %5714
      %5718 = vset.pattern.permute.xlu0 0
      %5719 = vperm.xlu0 %5718, %v4573
      %v5720 = vpop.permute.xlu0 %5719
      %5723 = vset.pattern.permute.xlu0 0
      %5724 = vperm.xlu0 %5723, %v4574
      %v5725 = vpop.permute.xlu0 %5724
      %5728 = vset.pattern.permute.xlu0 0
      %5729 = vperm.xlu0 %5728, %v4575
      %v5730 = vpop.permute.xlu0 %5729
      %5733 = vset.pattern.permute.xlu0 0
      %5734 = vperm.xlu0 %5733, %v4576
      %v5735 = vpop.permute.xlu0 %5734
      %5738 = vset.pattern.permute.xlu0 0
      %5739 = vperm.xlu0 %5738, %v4577
      %v5740 = vpop.permute.xlu0 %5739
      %5743 = vset.pattern.permute.xlu0 0
      %5744 = vperm.xlu0 %5743, %v4578
      %v5745 = vpop.permute.xlu0 %5744
      %5748 = vset.pattern.permute.xlu0 0
      %5749 = vperm.xlu0 %5748, %v4579
      %v5750 = vpop.permute.xlu0 %5749
      %5753 = vset.pattern.permute.xlu0 0
      %5754 = vperm.xlu0 %5753, %v4580
      %v5755 = vpop.permute.xlu0 %5754
      %5758 = vset.pattern.permute.xlu0 0
      %5759 = vperm.xlu0 %5758, %v4581
      %v5760 = vpop.permute.xlu0 %5759
      %5763 = vset.pattern.permute.xlu0 0
      %5764 = vperm.xlu0 %5763, %v4582
      %v5765 = vpop.permute.xlu0 %5764
      %5768 = vset.pattern.permute.xlu0 0
      %5769 = vperm.xlu0 %5768, %v4583
      %v5770 = vpop.permute.xlu0 %5769
      %5773 = vset.pattern.permute.xlu0 0
      %5774 = vperm.xlu0 %5773, %v4584
      %v5775 = vpop.permute.xlu0 %5774
      %5778 = vset.pattern.permute.xlu0 0
      %5779 = vperm.xlu0 %5778, %v4585
      %v5780 = vpop.permute.xlu0 %5779
      %5783 = vset.pattern.permute.xlu0 0
      %5784 = vperm.xlu0 %5783, %v4586
      %v5785 = vpop.permute.xlu0 %5784
      %5788 = vset.pattern.permute.xlu0 0
      %5789 = vperm.xlu0 %5788, %v4587
      %v5790 = vpop.permute.xlu0 %5789
      %5793 = vset.pattern.permute.xlu0 0
      %5794 = vperm.xlu0 %5793, %v4588
      %v5795 = vpop.permute.xlu0 %5794
      %5798 = vset.pattern.permute.xlu0 0
      %5799 = vperm.xlu0 %5798, %v4589
      %v5800 = vpop.permute.xlu0 %5799
      %5803 = vset.pattern.permute.xlu0 0
      %5804 = vperm.xlu0 %5803, %v4590
      %v5805 = vpop.permute.xlu0 %5804
      %5808 = vset.pattern.permute.xlu0 0
      %5809 = vperm.xlu0 %5808, %v4591
      %v5810 = vpop.permute.xlu0 %5809
      %5813 = vset.pattern.permute.xlu0 0
      %5814 = vperm.xlu0 %5813, %v4592
      %v5815 = vpop.permute.xlu0 %5814
      %5818 = vset.pattern.permute.xlu0 0
      %5819 = vperm.xlu0 %5818, %v4593
      %v5820 = vpop.permute.xlu0 %5819
      %5823 = vset.pattern.permute.xlu0 0
      %5824 = vperm.xlu0 %5823, %v4594
      %v5825 = vpop.permute.xlu0 %5824
      %5828 = vset.pattern.permute.xlu0 0
      %5829 = vperm.xlu0 %5828, %v4595
      %v5830 = vpop.permute.xlu0 %5829
      %5833 = vset.pattern.permute.xlu0 0
      %5834 = vperm.xlu0 %5833, %v4596
      %v5835 = vpop.permute.xlu0 %5834
      %5838 = vset.pattern.permute.xlu0 0
      %5839 = vperm.xlu0 %5838, %v4597
      %v5840 = vpop.permute.xlu0 %5839
      %5843 = vset.pattern.permute.xlu0 0
      %5844 = vperm.xlu0 %5843, %v4598
      %v5845 = vpop.permute.xlu0 %5844
      %5848 = vset.pattern.permute.xlu0 0
      %5849 = vperm.xlu0 %5848, %v4599
      %v5850 = vpop.permute.xlu0 %5849
      %5853 = vset.pattern.permute.xlu0 0
      %5854 = vperm.xlu0 %5853, %v4600
      %v5855 = vpop.permute.xlu0 %5854
      %5858 = vset.pattern.permute.xlu0 0
      %5859 = vperm.xlu0 %5858, %v4601
      %v5860 = vpop.permute.xlu0 %5859
      %5863 = vset.pattern.permute.xlu0 0
      %5864 = vperm.xlu0 %5863, %v4602
      %v5865 = vpop.permute.xlu0 %5864
      %5868 = vset.pattern.permute.xlu0 0
      %5869 = vperm.xlu0 %5868, %v4603
      %v5870 = vpop.permute.xlu0 %5869
      %5873 = vset.pattern.permute.xlu0 0
      %5874 = vperm.xlu0 %5873, %v4604
      %v5875 = vpop.permute.xlu0 %5874
      %5878 = vset.pattern.permute.xlu0 0
      %5879 = vperm.xlu0 %5878, %v4605
      %v5880 = vpop.permute.xlu0 %5879
      %5883 = vset.pattern.permute.xlu0 0
      %5884 = vperm.xlu0 %5883, %v4606
      %v5885 = vpop.permute.xlu0 %5884
      %5888 = vset.pattern.permute.xlu0 0
      %5889 = vperm.xlu0 %5888, %v4607
      %v5890 = vpop.permute.xlu0 %5889
      %5893 = vset.pattern.permute.xlu0 0
      %5894 = vperm.xlu0 %5893, %v4608
      %v5895 = vpop.permute.xlu0 %5894
      %5898 = vset.pattern.permute.xlu0 0
      %5899 = vperm.xlu0 %5898, %v4609
      %v5900 = vpop.permute.xlu0 %5899
      %5903 = vset.pattern.permute.xlu0 0
      %5904 = vperm.xlu0 %5903, %v4610
      %v5905 = vpop.permute.xlu0 %5904
      %5908 = vset.pattern.permute.xlu0 0
      %5909 = vperm.xlu0 %5908, %v4611
      %v5910 = vpop.permute.xlu0 %5909
      %5913 = vset.pattern.permute.xlu0 0
      %5914 = vperm.xlu0 %5913, %v4612
      %v5915 = vpop.permute.xlu0 %5914
      %5918 = vset.pattern.permute.xlu0 0
      %5919 = vperm.xlu0 %5918, %v4613
      %v5920 = vpop.permute.xlu0 %5919
      %5923 = vset.pattern.permute.xlu0 0
      %5924 = vperm.xlu0 %5923, %v4614
      %v5925 = vpop.permute.xlu0 %5924
      %5928 = vset.pattern.permute.xlu0 0
      %5929 = vperm.xlu0 %5928, %v4615
      %v5930 = vpop.permute.xlu0 %5929
      %5933 = vset.pattern.permute.xlu0 0
      %5934 = vperm.xlu0 %5933, %v4616
      %v5935 = vpop.permute.xlu0 %5934
      %5938 = vset.pattern.permute.xlu0 0
      %5939 = vperm.xlu0 %5938, %v4617
      %v5940 = vpop.permute.xlu0 %5939
      %5943 = vset.pattern.permute.xlu0 0
      %5944 = vperm.xlu0 %5943, %v4618
      %v5945 = vpop.permute.xlu0 %5944
      %5948 = vset.pattern.permute.xlu0 0
      %5949 = vperm.xlu0 %5948, %v4619
      %v5950 = vpop.permute.xlu0 %5949
      %5953 = vset.pattern.permute.xlu0 0
      %5954 = vperm.xlu0 %5953, %v4620
      %v5955 = vpop.permute.xlu0 %5954
      %5958 = vset.pattern.permute.xlu0 0
      %5959 = vperm.xlu0 %5958, %v4621
      %v5960 = vpop.permute.xlu0 %5959
      %5963 = vset.pattern.permute.xlu0 0
      %5964 = vperm.xlu0 %5963, %v4622
      %v5965 = vpop.permute.xlu0 %5964
      %5968 = vset.pattern.permute.xlu0 0
      %5969 = vperm.xlu0 %5968, %v4623
      %v5970 = vpop.permute.xlu0 %5969
      %5973 = vset.pattern.permute.xlu0 0
      %5974 = vperm.xlu0 %5973, %v4624
      %v5975 = vpop.permute.xlu0 %5974
      %5978 = vset.pattern.permute.xlu0 0
      %5979 = vperm.xlu0 %5978, %v4625
      %v5980 = vpop.permute.xlu0 %5979
      %5983 = vset.pattern.permute.xlu0 0
      %5984 = vperm.xlu0 %5983, %v4626
      %v5985 = vpop.permute.xlu0 %5984
      %5988 = vset.pattern.permute.xlu0 0
      %5989 = vperm.xlu0 %5988, %v4627
      %v5990 = vpop.permute.xlu0 %5989
      %5993 = vset.pattern.permute.xlu0 0
      %5994 = vperm.xlu0 %5993, %v4628
      %v5995 = vpop.permute.xlu0 %5994
      %5998 = vset.pattern.permute.xlu0 0
      %5999 = vperm.xlu0 %5998, %v4629
      %v6000 = vpop.permute.xlu0 %5999
      %6003 = vset.pattern.permute.xlu0 0
      %6004 = vperm.xlu0 %6003, %v4630
      %v6005 = vpop.permute.xlu0 %6004
      %6008 = vset.pattern.permute.xlu0 0
      %6009 = vperm.xlu0 %6008, %v4631
      %v6010 = vpop.permute.xlu0 %6009
      %6013 = vset.pattern.permute.xlu0 0
      %6014 = vperm.xlu0 %6013, %v4632
      %v6015 = vpop.permute.xlu0 %6014
      %6018 = vset.pattern.permute.xlu0 0
      %6019 = vperm.xlu0 %6018, %v4633
      %v6020 = vpop.permute.xlu0 %6019
      %6023 = vset.pattern.permute.xlu0 0
      %6024 = vperm.xlu0 %6023, %v4634
      %v6025 = vpop.permute.xlu0 %6024
      %6028 = vset.pattern.permute.xlu0 0
      %6029 = vperm.xlu0 %6028, %v4635
      %v6030 = vpop.permute.xlu0 %6029
      %6033 = vset.pattern.permute.xlu0 0
      %6034 = vperm.xlu0 %6033, %v4636
      %v6035 = vpop.permute.xlu0 %6034
      %6038 = vset.pattern.permute.xlu0 0
      %6039 = vperm.xlu0 %6038, %v4637
      %v6040 = vpop.permute.xlu0 %6039
      %6043 = vset.pattern.permute.xlu0 0
      %6044 = vperm.xlu0 %6043, %v4638
      %v6045 = vpop.permute.xlu0 %6044
      %6048 = vset.pattern.permute.xlu0 0
      %6049 = vperm.xlu0 %6048, %v4639
      %v6050 = vpop.permute.xlu0 %6049
      %6053 = vset.pattern.permute.xlu0 0
      %6054 = vperm.xlu0 %6053, %v4640
      %v6055 = vpop.permute.xlu0 %6054
      %6058 = vset.pattern.permute.xlu0 0
      %6059 = vperm.xlu0 %6058, %v4641
      %v6060 = vpop.permute.xlu0 %6059
      %6063 = vset.pattern.permute.xlu0 0
      %6064 = vperm.xlu0 %6063, %v4642
      %v6065 = vpop.permute.xlu0 %6064
      %6068 = vset.pattern.permute.xlu0 0
      %6069 = vperm.xlu0 %6068, %v4643
      %v6070 = vpop.permute.xlu0 %6069
      %6073 = vset.pattern.permute.xlu0 0
      %6074 = vperm.xlu0 %6073, %v4644
      %v6075 = vpop.permute.xlu0 %6074
      %6078 = vset.pattern.permute.xlu0 0
      %6079 = vperm.xlu0 %6078, %v4645
      %v6080 = vpop.permute.xlu0 %6079
      %6083 = vset.pattern.permute.xlu0 0
      %6084 = vperm.xlu0 %6083, %v4646
      %v6085 = vpop.permute.xlu0 %6084
      %6088 = vset.pattern.permute.xlu0 0
      %6089 = vperm.xlu0 %6088, %v4647
      %v6090 = vpop.permute.xlu0 %6089
      %6093 = vset.pattern.permute.xlu0 0
      %6094 = vperm.xlu0 %6093, %v4648
      %v6095 = vpop.permute.xlu0 %6094
      %6098 = vset.pattern.permute.xlu0 0
      %6099 = vperm.xlu0 %6098, %v4649
      %v6100 = vpop.permute.xlu0 %6099
      %6103 = vset.pattern.permute.xlu0 0
      %6104 = vperm.xlu0 %6103, %v4650
      %v6105 = vpop.permute.xlu0 %6104
      %6108 = vset.pattern.permute.xlu0 0
      %6109 = vperm.xlu0 %6108, %v4651
      %v6110 = vpop.permute.xlu0 %6109
      %6113 = vset.pattern.permute.xlu0 0
      %6114 = vperm.xlu0 %6113, %v4652
      %v6115 = vpop.permute.xlu0 %6114
      %6118 = vset.pattern.permute.xlu0 0
      %6119 = vperm.xlu0 %6118, %v4653
      %v6120 = vpop.permute.xlu0 %6119
      %6123 = vset.pattern.permute.xlu0 0
      %6124 = vperm.xlu0 %6123, %v4654
      %v6125 = vpop.permute.xlu0 %6124
      %6128 = vset.pattern.permute.xlu0 0
      %6129 = vperm.xlu0 %6128, %v4655
      %v6130 = vpop.permute.xlu0 %6129
      %6133 = vset.pattern.permute.xlu0 0
      %6134 = vperm.xlu0 %6133, %v4656
      %v6135 = vpop.permute.xlu0 %6134
      %6138 = vset.pattern.permute.xlu0 0
      %6139 = vperm.xlu0 %6138, %v4657
      %v6140 = vpop.permute.xlu0 %6139
      %6143 = vset.pattern.permute.xlu0 0
      %6144 = vperm.xlu0 %6143, %v4658
      %v6145 = vpop.permute.xlu0 %6144
      %6148 = vset.pattern.permute.xlu0 0
      %6149 = vperm.xlu0 %6148, %v4659
      %v6150 = vpop.permute.xlu0 %6149
      %6153 = vset.pattern.permute.xlu0 0
      %6154 = vperm.xlu0 %6153, %v4660
      %v6155 = vpop.permute.xlu0 %6154
      %6158 = vset.pattern.permute.xlu0 0
      %6159 = vperm.xlu0 %6158, %v4661
      %v6160 = vpop.permute.xlu0 %6159
      %6163 = vset.pattern.permute.xlu0 0
      %6164 = vperm.xlu0 %6163, %v4662
      %v6165 = vpop.permute.xlu0 %6164
      %6168 = vset.pattern.permute.xlu0 0
      %6169 = vperm.xlu0 %6168, %v4663
      %v6170 = vpop.permute.xlu0 %6169
      %6173 = vset.pattern.permute.xlu0 0
      %6174 = vperm.xlu0 %6173, %v4664
      %v6175 = vpop.permute.xlu0 %6174
      %6178 = vset.pattern.permute.xlu0 0
      %6179 = vperm.xlu0 %6178, %v4665
      %v6180 = vpop.permute.xlu0 %6179
      %6183 = vset.pattern.permute.xlu0 0
      %6184 = vperm.xlu0 %6183, %v4666
      %v6185 = vpop.permute.xlu0 %6184
      %6188 = vset.pattern.permute.xlu0 0
      %6189 = vperm.xlu0 %6188, %v4667
      %v6190 = vpop.permute.xlu0 %6189
      %6193 = vset.pattern.permute.xlu0 0
      %6194 = vperm.xlu0 %6193, %v4668
      %v6195 = vpop.permute.xlu0 %6194
      %6198 = vset.pattern.permute.xlu0 0
      %6199 = vperm.xlu0 %6198, %v4669
      %v6200 = vpop.permute.xlu0 %6199
      %6203 = vset.pattern.permute.xlu0 0
      %6204 = vperm.xlu0 %6203, %v4670
      %v6205 = vpop.permute.xlu0 %6204
      %6208 = vset.pattern.permute.xlu0 0
      %6209 = vperm.xlu0 %6208, %v4671
      %v6210 = vpop.permute.xlu0 %6209
      %6213 = vset.pattern.permute.xlu0 0
      %6214 = vperm.xlu0 %6213, %v4672
      %v6215 = vpop.permute.xlu0 %6214
      %6218 = vset.pattern.permute.xlu0 0
      %6219 = vperm.xlu0 %6218, %v4673
      %v6220 = vpop.permute.xlu0 %6219
      %6223 = vset.pattern.permute.xlu0 0
      %6224 = vperm.xlu0 %6223, %v4674
      %v6225 = vpop.permute.xlu0 %6224
      %6228 = vset.pattern.permute.xlu0 0
      %6229 = vperm.xlu0 %6228, %v4675
      %v6230 = vpop.permute.xlu0 %6229
      %6233 = vset.pattern.permute.xlu0 0
      %6234 = vperm.xlu0 %6233, %v4676
      %v6235 = vpop.permute.xlu0 %6234
      %6238 = vset.pattern.permute.xlu0 0
      %6239 = vperm.xlu0 %6238, %v4677
      %v6240 = vpop.permute.xlu0 %6239
      %6243 = vset.pattern.permute.xlu0 0
      %6244 = vperm.xlu0 %6243, %v4678
      %v6245 = vpop.permute.xlu0 %6244
      %6248 = vset.pattern.permute.xlu0 0
      %6249 = vperm.xlu0 %6248, %v4679
      %v6250 = vpop.permute.xlu0 %6249
      %6253 = vset.pattern.permute.xlu0 0
      %6254 = vperm.xlu0 %6253, %v4680
      %v6255 = vpop.permute.xlu0 %6254
      %6258 = vset.pattern.permute.xlu0 0
      %6259 = vperm.xlu0 %6258, %v4681
      %v6260 = vpop.permute.xlu0 %6259
      %6263 = vset.pattern.permute.xlu0 0
      %6264 = vperm.xlu0 %6263, %v4682
      %v6265 = vpop.permute.xlu0 %6264
      %v6267 = vadd.f32 %v5403, %v5550
      %v6268 = vadd.f32 %v5404, %v5555
      %v6269 = vadd.f32 %v5405, %v5560
      %v6270 = vadd.f32 %v5406, %v5565
      %v6271 = vadd.f32 %v5407, %v5570
      %v6272 = vadd.f32 %v5408, %v5575
      %v6273 = vadd.f32 %v5409, %v5580
      %v6274 = vadd.f32 %v5410, %v5585
      %v6275 = vadd.f32 %v5411, %v5590
      %v6276 = vadd.f32 %v5412, %v5595
      %v6277 = vadd.f32 %v5413, %v5600
      %v6278 = vadd.f32 %v5414, %v5605
      %v6279 = vadd.f32 %v5415, %v5610
      %v6280 = vadd.f32 %v5416, %v5615
      %v6281 = vadd.f32 %v5417, %v5620
      %v6282 = vadd.f32 %v5418, %v5625
      %v6283 = vadd.f32 %v5419, %v5630
      %v6284 = vadd.f32 %v5420, %v5635
      %v6285 = vadd.f32 %v5421, %v5640
      %v6286 = vadd.f32 %v5422, %v5645
      %v6287 = vadd.f32 %v5423, %v5650
      %v6288 = vadd.f32 %v5424, %v5655
      %v6289 = vadd.f32 %v5425, %v5660
      %v6290 = vadd.f32 %v5426, %v5665
      %v6291 = vadd.f32 %v5427, %v5670
      %v6292 = vadd.f32 %v5428, %v5675
      %v6293 = vadd.f32 %v5429, %v5680
      %v6294 = vadd.f32 %v5430, %v5685
      %v6295 = vadd.f32 %v5431, %v5690
      %v6296 = vadd.f32 %v5432, %v5695
      %v6297 = vadd.f32 %v5433, %v5700
      %v6298 = vadd.f32 %v5434, %v5705
      %v6299 = vadd.f32 %v5435, %v5710
      %v6300 = vadd.f32 %v5436, %v5715
      %v6301 = vadd.f32 %v5437, %v5720
      %v6302 = vadd.f32 %v5438, %v5725
      %v6303 = vadd.f32 %v5439, %v5730
      %v6304 = vadd.f32 %v5440, %v5735
      %v6305 = vadd.f32 %v5441, %v5740
      %v6306 = vadd.f32 %v5442, %v5745
      %v6307 = vadd.f32 %v5443, %v5750
      %v6308 = vadd.f32 %v5444, %v5755
      %v6309 = vadd.f32 %v5445, %v5760
      %v6310 = vadd.f32 %v5446, %v5765
      %v6311 = vadd.f32 %v5447, %v5770
      %v6312 = vadd.f32 %v5448, %v5775
      %v6313 = vadd.f32 %v5449, %v5780
      %v6314 = vadd.f32 %v5450, %v5785
      %v6315 = vadd.f32 %v5451, %v5790
      %v6316 = vadd.f32 %v5452, %v5795
      %v6317 = vadd.f32 %v5453, %v5800
      %v6318 = vadd.f32 %v5454, %v5805
      %v6319 = vadd.f32 %v5455, %v5810
      %v6320 = vadd.f32 %v5456, %v5815
      %v6321 = vadd.f32 %v5457, %v5820
      %v6322 = vadd.f32 %v5458, %v5825
      %v6323 = vadd.f32 %v5459, %v5830
      %v6324 = vadd.f32 %v5460, %v5835
      %v6325 = vadd.f32 %v5461, %v5840
      %v6326 = vadd.f32 %v5462, %v5845
      %v6327 = vadd.f32 %v5463, %v5850
      %v6328 = vadd.f32 %v5464, %v5855
      %v6329 = vadd.f32 %v5465, %v5860
      %v6330 = vadd.f32 %v5466, %v5865
      %v6331 = vadd.f32 %v5467, %v5870
      %v6332 = vadd.f32 %v5468, %v5875
      %v6333 = vadd.f32 %v5469, %v5880
      %v6334 = vadd.f32 %v5470, %v5885
      %v6335 = vadd.f32 %v5471, %v5890
      %v6336 = vadd.f32 %v5472, %v5895
      %v6337 = vadd.f32 %v5473, %v5900
      %v6338 = vadd.f32 %v5474, %v5905
      %v6339 = vadd.f32 %v5475, %v5910
      %v6340 = vadd.f32 %v5476, %v5915
      %v6341 = vadd.f32 %v5477, %v5920
      %v6342 = vadd.f32 %v5478, %v5925
      %v6343 = vadd.f32 %v5479, %v5930
      %v6344 = vadd.f32 %v5480, %v5935
      %v6345 = vadd.f32 %v5481, %v5940
      %v6346 = vadd.f32 %v5482, %v5945
      %v6347 = vadd.f32 %v5483, %v5950
      %v6348 = vadd.f32 %v5484, %v5955
      %v6349 = vadd.f32 %v5485, %v5960
      %v6350 = vadd.f32 %v5486, %v5965
      %v6351 = vadd.f32 %v5487, %v5970
      %v6352 = vadd.f32 %v5488, %v5975
      %v6353 = vadd.f32 %v5489, %v5980
      %v6354 = vadd.f32 %v5490, %v5985
      %v6355 = vadd.f32 %v5491, %v5990
      %v6356 = vadd.f32 %v5492, %v5995
      %v6357 = vadd.f32 %v5493, %v6000
      %v6358 = vadd.f32 %v5494, %v6005
      %v6359 = vadd.f32 %v5495, %v6010
      %v6360 = vadd.f32 %v5496, %v6015
      %v6361 = vadd.f32 %v5497, %v6020
      %v6362 = vadd.f32 %v5498, %v6025
      %v6363 = vadd.f32 %v5499, %v6030
      %v6364 = vadd.f32 %v5500, %v6035
      %v6365 = vadd.f32 %v5501, %v6040
      %v6366 = vadd.f32 %v5502, %v6045
      %v6367 = vadd.f32 %v5503, %v6050
      %v6368 = vadd.f32 %v5504, %v6055
      %v6369 = vadd.f32 %v5505, %v6060
      %v6370 = vadd.f32 %v5506, %v6065
      %v6371 = vadd.f32 %v5507, %v6070
      %v6372 = vadd.f32 %v5508, %v6075
      %v6373 = vadd.f32 %v5509, %v6080
      %v6374 = vadd.f32 %v5510, %v6085
      %v6375 = vadd.f32 %v5511, %v6090
      %v6376 = vadd.f32 %v5512, %v6095
      %v6377 = vadd.f32 %v5513, %v6100
      %v6378 = vadd.f32 %v5514, %v6105
      %v6379 = vadd.f32 %v5515, %v6110
      %v6380 = vadd.f32 %v5516, %v6115
      %v6381 = vadd.f32 %v5517, %v6120
      %v6382 = vadd.f32 %v5518, %v6125
      %v6383 = vadd.f32 %v5519, %v6130
      %v6384 = vadd.f32 %v5520, %v6135
      %v6385 = vadd.f32 %v5521, %v6140
      %v6386 = vadd.f32 %v5522, %v6145
      %v6387 = vadd.f32 %v5523, %v6150
      %v6388 = vadd.f32 %v5524, %v6155
      %v6389 = vadd.f32 %v5525, %v6160
      %v6390 = vadd.f32 %v5526, %v6165
      %v6391 = vadd.f32 %v5527, %v6170
      %v6392 = vadd.f32 %v5528, %v6175
      %v6393 = vadd.f32 %v5529, %v6180
      %v6394 = vadd.f32 %v5530, %v6185
      %v6395 = vadd.f32 %v5531, %v6190
      %v6396 = vadd.f32 %v5532, %v6195
      %v6397 = vadd.f32 %v5533, %v6200
      %v6398 = vadd.f32 %v5534, %v6205
      %v6399 = vadd.f32 %v5535, %v6210
      %v6400 = vadd.f32 %v5536, %v6215
      %v6401 = vadd.f32 %v5537, %v6220
      %v6402 = vadd.f32 %v5538, %v6225
      %v6403 = vadd.f32 %v5539, %v6230
      %v6404 = vadd.f32 %v5540, %v6235
      %v6405 = vadd.f32 %v5541, %v6240
      %v6406 = vadd.f32 %v5542, %v6245
      %v6407 = vadd.f32 %v5543, %v6250
      %v6408 = vadd.f32 %v5544, %v6255
      %v6409 = vadd.f32 %v5545, %v6260
      %v6410 = vadd.f32 %v5546, %v6265
      %6411 = vst.msk [vmem:[%s216] sm:$0xff] %vm362, %v6267
      %6412 = vst.msk [vmem:[%s216 + $0x8] sm:$0xff] %vm362, %v6268
      %6413 = vst.msk [vmem:[%s216 + $0x10] sm:$0xff] %vm362, %v6269
      %6414 = vst.msk [vmem:[%s216 + $0x18] sm:$0xff] %vm362, %v6270
      %6415 = vst.msk [vmem:[%s216 + $0x20] sm:$0xff] %vm362, %v6271
      %6416 = vst.msk [vmem:[%s216 + $0x28] sm:$0xff] %vm362, %v6272
      %6417 = vst.msk [vmem:[%s216 + $0x30] sm:$0xff] %vm362, %v6273
      %6418 = vst.msk [vmem:[%s216 + $0x38] sm:$0xff] %vm362, %v6274
      %6419 = vst.msk [vmem:[%s216 + $0x40] sm:$0xff] %vm362, %v6275
      %6420 = vst.msk [vmem:[%s216 + $0x48] sm:$0xff] %vm362, %v6276
      %6421 = vst.msk [vmem:[%s216 + $0x50] sm:$0xff] %vm362, %v6277
      %6422 = vst.msk [vmem:[%s216 + $0x58] sm:$0xff] %vm362, %v6278
      %6423 = vst.msk [vmem:[%s216 + $0x60] sm:$0xff] %vm362, %v6279
      %6424 = vst.msk [vmem:[%s216 + $0x68] sm:$0xff] %vm362, %v6280
      %6425 = vst.msk [vmem:[%s216 + $0x70] sm:$0xff] %vm362, %v6281
      %6426 = vst.msk [vmem:[%s216 + $0x78] sm:$0xff] %vm362, %v6282
      %6427 = vst.msk [vmem:[%s216 + $0x80] sm:$0xff] %vm362, %v6283
      %6428 = vst.msk [vmem:[%s216 + $0x88] sm:$0xff] %vm362, %v6284
      %6429 = vst.msk [vmem:[%s216 + $0x90] sm:$0xff] %vm362, %v6285
      %6430 = vst.msk [vmem:[%s216 + $0x98] sm:$0xff] %vm362, %v6286
      %6431 = vst.msk [vmem:[%s216 + $0xa0] sm:$0xff] %vm362, %v6287
      %6432 = vst.msk [vmem:[%s216 + $0xa8] sm:$0xff] %vm362, %v6288
      %6433 = vst.msk [vmem:[%s216 + $0xb0] sm:$0xff] %vm362, %v6289
      %6434 = vst.msk [vmem:[%s216 + $0xb8] sm:$0xff] %vm362, %v6290
      %6435 = vst.msk [vmem:[%s216 + $0xc0] sm:$0xff] %vm362, %v6291
      %6436 = vst.msk [vmem:[%s216 + $0xc8] sm:$0xff] %vm362, %v6292
      %6437 = vst.msk [vmem:[%s216 + $0xd0] sm:$0xff] %vm362, %v6293
      %6438 = vst.msk [vmem:[%s216 + $0xd8] sm:$0xff] %vm362, %v6294
      %6439 = vst.msk [vmem:[%s216 + $0xe0] sm:$0xff] %vm362, %v6295
      %6440 = vst.msk [vmem:[%s216 + $0xe8] sm:$0xff] %vm362, %v6296
      %6441 = vst.msk [vmem:[%s216 + $0xf0] sm:$0xff] %vm362, %v6297
      %6442 = vst.msk [vmem:[%s216 + $0xf8] sm:$0xff] %vm362, %v6298
      %6443 = vst.msk [vmem:[%s216 + $0x100] sm:$0xff] %vm362, %v6299
      %6444 = vst.msk [vmem:[%s216 + $0x108] sm:$0xff] %vm362, %v6300
      %6445 = vst.msk [vmem:[%s216 + $0x110] sm:$0xff] %vm362, %v6301
      %6446 = vst.msk [vmem:[%s216 + $0x118] sm:$0xff] %vm362, %v6302
      %6447 = vst.msk [vmem:[%s216 + $0x120] sm:$0xff] %vm362, %v6303
      %6448 = vst.msk [vmem:[%s216 + $0x128] sm:$0xff] %vm362, %v6304
      %6449 = vst.msk [vmem:[%s216 + $0x130] sm:$0xff] %vm362, %v6305
      %6450 = vst.msk [vmem:[%s216 + $0x138] sm:$0xff] %vm362, %v6306
      %6451 = vst.msk [vmem:[%s216 + $0x140] sm:$0xff] %vm362, %v6307
      %6452 = vst.msk [vmem:[%s216 + $0x148] sm:$0xff] %vm362, %v6308
      %6453 = vst.msk [vmem:[%s216 + $0x150] sm:$0xff] %vm362, %v6309
      %6454 = vst.msk [vmem:[%s216 + $0x158] sm:$0xff] %vm362, %v6310
      %6455 = vst.msk [vmem:[%s216 + $0x160] sm:$0xff] %vm362, %v6311
      %6456 = vst.msk [vmem:[%s216 + $0x168] sm:$0xff] %vm362, %v6312
      %6457 = vst.msk [vmem:[%s216 + $0x170] sm:$0xff] %vm362, %v6313
      %6458 = vst.msk [vmem:[%s216 + $0x178] sm:$0xff] %vm362, %v6314
      %6459 = vst.msk [vmem:[%s216 + $0x180] sm:$0xff] %vm362, %v6315
      %6460 = vst.msk [vmem:[%s216 + $0x188] sm:$0xff] %vm362, %v6316
      %6461 = vst.msk [vmem:[%s216 + $0x190] sm:$0xff] %vm362, %v6317
      %6462 = vst.msk [vmem:[%s216 + $0x198] sm:$0xff] %vm362, %v6318
      %6463 = vst.msk [vmem:[%s216 + $0x1a0] sm:$0xff] %vm362, %v6319
      %6464 = vst.msk [vmem:[%s216 + $0x1a8] sm:$0xff] %vm362, %v6320
      %6465 = vst.msk [vmem:[%s216 + $0x1b0] sm:$0xff] %vm362, %v6321
      %6466 = vst.msk [vmem:[%s216 + $0x1b8] sm:$0xff] %vm362, %v6322
      %6467 = vst.msk [vmem:[%s216 + $0x1c0] sm:$0xff] %vm362, %v6323
      %6468 = vst.msk [vmem:[%s216 + $0x1c8] sm:$0xff] %vm362, %v6324
      %6469 = vst.msk [vmem:[%s216 + $0x1d0] sm:$0xff] %vm362, %v6325
      %6470 = vst.msk [vmem:[%s216 + $0x1d8] sm:$0xff] %vm362, %v6326
      %6471 = vst.msk [vmem:[%s216 + $0x1e0] sm:$0xff] %vm362, %v6327
      %6472 = vst.msk [vmem:[%s216 + $0x1e8] sm:$0xff] %vm362, %v6328
      %6473 = vst.msk [vmem:[%s216 + $0x1f0] sm:$0xff] %vm362, %v6329
      %6474 = vst.msk [vmem:[%s216 + $0x1f8] sm:$0xff] %vm362, %v6330
      %6475 = vst.msk [vmem:[%s216 + $0x200] sm:$0xff] %vm362, %v6331
      %6476 = vst.msk [vmem:[%s216 + $0x208] sm:$0xff] %vm362, %v6332
      %6477 = vst.msk [vmem:[%s216 + $0x210] sm:$0xff] %vm362, %v6333
      %6478 = vst.msk [vmem:[%s216 + $0x218] sm:$0xff] %vm362, %v6334
      %6479 = vst.msk [vmem:[%s216 + $0x220] sm:$0xff] %vm362, %v6335
      %6480 = vst.msk [vmem:[%s216 + $0x228] sm:$0xff] %vm362, %v6336
      %6481 = vst.msk [vmem:[%s216 + $0x230] sm:$0xff] %vm362, %v6337
      %6482 = vst.msk [vmem:[%s216 + $0x238] sm:$0xff] %vm362, %v6338
      %6483 = vst.msk [vmem:[%s216 + $0x240] sm:$0xff] %vm362, %v6339
      %6484 = vst.msk [vmem:[%s216 + $0x248] sm:$0xff] %vm362, %v6340
      %6485 = vst.msk [vmem:[%s216 + $0x250] sm:$0xff] %vm362, %v6341
      %6486 = vst.msk [vmem:[%s216 + $0x258] sm:$0xff] %vm362, %v6342
      %6487 = vst.msk [vmem:[%s216 + $0x260] sm:$0xff] %vm362, %v6343
      %6488 = vst.msk [vmem:[%s216 + $0x268] sm:$0xff] %vm362, %v6344
      %6489 = vst.msk [vmem:[%s216 + $0x270] sm:$0xff] %vm362, %v6345
      %6490 = vst.msk [vmem:[%s216 + $0x278] sm:$0xff] %vm362, %v6346
      %6491 = vst.msk [vmem:[%s216 + $0x280] sm:$0xff] %vm362, %v6347
      %6492 = vst.msk [vmem:[%s216 + $0x288] sm:$0xff] %vm362, %v6348
      %6493 = vst.msk [vmem:[%s216 + $0x290] sm:$0xff] %vm362, %v6349
      %6494 = vst.msk [vmem:[%s216 + $0x298] sm:$0xff] %vm362, %v6350
      %6495 = vst.msk [vmem:[%s216 + $0x2a0] sm:$0xff] %vm362, %v6351
      %6496 = vst.msk [vmem:[%s216 + $0x2a8] sm:$0xff] %vm362, %v6352
      %6497 = vst.msk [vmem:[%s216 + $0x2b0] sm:$0xff] %vm362, %v6353
      %6498 = vst.msk [vmem:[%s216 + $0x2b8] sm:$0xff] %vm362, %v6354
      %6499 = vst.msk [vmem:[%s216 + $0x2c0] sm:$0xff] %vm362, %v6355
      %6500 = vst.msk [vmem:[%s216 + $0x2c8] sm:$0xff] %vm362, %v6356
      %6501 = vst.msk [vmem:[%s216 + $0x2d0] sm:$0xff] %vm362, %v6357
      %6502 = vst.msk [vmem:[%s216 + $0x2d8] sm:$0xff] %vm362, %v6358
      %6503 = vst.msk [vmem:[%s216 + $0x2e0] sm:$0xff] %vm362, %v6359
      %6504 = vst.msk [vmem:[%s216 + $0x2e8] sm:$0xff] %vm362, %v6360
      %6505 = vst.msk [vmem:[%s216 + $0x2f0] sm:$0xff] %vm362, %v6361
      %6506 = vst.msk [vmem:[%s216 + $0x2f8] sm:$0xff] %vm362, %v6362
      %6507 = vst.msk [vmem:[%s216 + $0x300] sm:$0xff] %vm362, %v6363
      %6508 = vst.msk [vmem:[%s216 + $0x308] sm:$0xff] %vm362, %v6364
      %6509 = vst.msk [vmem:[%s216 + $0x310] sm:$0xff] %vm362, %v6365
      %6510 = vst.msk [vmem:[%s216 + $0x318] sm:$0xff] %vm362, %v6366
      %6511 = vst.msk [vmem:[%s216 + $0x320] sm:$0xff] %vm362, %v6367
      %6512 = vst.msk [vmem:[%s216 + $0x328] sm:$0xff] %vm362, %v6368
      %6513 = vst.msk [vmem:[%s216 + $0x330] sm:$0xff] %vm362, %v6369
      %6514 = vst.msk [vmem:[%s216 + $0x338] sm:$0xff] %vm362, %v6370
      %6515 = vst.msk [vmem:[%s216 + $0x340] sm:$0xff] %vm362, %v6371
      %6516 = vst.msk [vmem:[%s216 + $0x348] sm:$0xff] %vm362, %v6372
      %6517 = vst.msk [vmem:[%s216 + $0x350] sm:$0xff] %vm362, %v6373
      %6518 = vst.msk [vmem:[%s216 + $0x358] sm:$0xff] %vm362, %v6374
      %6519 = vst.msk [vmem:[%s216 + $0x360] sm:$0xff] %vm362, %v6375
      %6520 = vst.msk [vmem:[%s216 + $0x368] sm:$0xff] %vm362, %v6376
      %6521 = vst.msk [vmem:[%s216 + $0x370] sm:$0xff] %vm362, %v6377
      %6522 = vst.msk [vmem:[%s216 + $0x378] sm:$0xff] %vm362, %v6378
      %6523 = vst.msk [vmem:[%s216 + $0x380] sm:$0xff] %vm362, %v6379
      %6524 = vst.msk [vmem:[%s216 + $0x388] sm:$0xff] %vm362, %v6380
      %6525 = vst.msk [vmem:[%s216 + $0x390] sm:$0xff] %vm362, %v6381
      %6526 = vst.msk [vmem:[%s216 + $0x398] sm:$0xff] %vm362, %v6382
      %6527 = vst.msk [vmem:[%s216 + $0x3a0] sm:$0xff] %vm362, %v6383
      %6528 = vst.msk [vmem:[%s216 + $0x3a8] sm:$0xff] %vm362, %v6384
      %6529 = vst.msk [vmem:[%s216 + $0x3b0] sm:$0xff] %vm362, %v6385
      %6530 = vst.msk [vmem:[%s216 + $0x3b8] sm:$0xff] %vm362, %v6386
      %6531 = vst.msk [vmem:[%s216 + $0x3c0] sm:$0xff] %vm362, %v6387
      %6532 = vst.msk [vmem:[%s216 + $0x3c8] sm:$0xff] %vm362, %v6388
      %6533 = vst.msk [vmem:[%s216 + $0x3d0] sm:$0xff] %vm362, %v6389
      %6534 = vst.msk [vmem:[%s216 + $0x3d8] sm:$0xff] %vm362, %v6390
      %6535 = vst.msk [vmem:[%s216 + $0x3e0] sm:$0xff] %vm362, %v6391
      %6536 = vst.msk [vmem:[%s216 + $0x3e8] sm:$0xff] %vm362, %v6392
      %6537 = vst.msk [vmem:[%s216 + $0x3f0] sm:$0xff] %vm362, %v6393
      %6538 = vst.msk [vmem:[%s216 + $0x3f8] sm:$0xff] %vm362, %v6394
      %6539 = vst.msk [vmem:[%s216 + $0x400] sm:$0xff] %vm362, %v6395
      %6540 = vst.msk [vmem:[%s216 + $0x408] sm:$0xff] %vm362, %v6396
      %6541 = vst.msk [vmem:[%s216 + $0x410] sm:$0xff] %vm362, %v6397
      %6542 = vst.msk [vmem:[%s216 + $0x418] sm:$0xff] %vm362, %v6398
      %6543 = vst.msk [vmem:[%s216 + $0x420] sm:$0xff] %vm362, %v6399
      %6544 = vst.msk [vmem:[%s216 + $0x428] sm:$0xff] %vm362, %v6400
      %6545 = vst.msk [vmem:[%s216 + $0x430] sm:$0xff] %vm362, %v6401
      %6546 = vst.msk [vmem:[%s216 + $0x438] sm:$0xff] %vm362, %v6402
      %6547 = vst.msk [vmem:[%s216 + $0x440] sm:$0xff] %vm362, %v6403
      %6548 = vst.msk [vmem:[%s216 + $0x448] sm:$0xff] %vm362, %v6404
      %6549 = vst.msk [vmem:[%s216 + $0x450] sm:$0xff] %vm362, %v6405
      %6550 = vst.msk [vmem:[%s216 + $0x458] sm:$0xff] %vm362, %v6406
      %6551 = vst.msk [vmem:[%s216 + $0x460] sm:$0xff] %vm362, %v6407
      %6552 = vst.msk [vmem:[%s216 + $0x468] sm:$0xff] %vm362, %v6408
      %6553 = vst.msk [vmem:[%s216 + $0x470] sm:$0xff] %vm362, %v6409
      %6554 = vst.msk [vmem:[%s216 + $0x478] sm:$0xff] %vm362, %v6410
      %s6555 = smul.u32 144, %s14
      %p6556 = scmp.lt.s32.totalorder %s6555, 287
      %s6557 = scalar_select %p6556, %s6555, 287
      %s6558 = smul.addr %s6557, 8
      %s6559 = scalar_lea.vmem %s3, %s6558
      // Predicated region
      $region33: #{tpu_custom_call.1} parent=31 // pred_check
        %p6560 = pneg %p110
      $region34: #{tpu_custom_call.1} parent=31 // pred_check_branch
        %6562 = sbr.rel (%p6560) target = $region36
      $region35: #{tpu_custom_call.1} parent=31 // pred_region
        %s6563 = smul.u32 144, %s14
      $region36: #{tpu_custom_call.1} parent=31 // pred_fallthru
        _
    $region32: #{tpu_custom_call.1} parent=5 // pred_fallthru
      _
    %p6564 = scmp.le.s32.totalorder 2, %s9
    // Predicated region
    $region37: #{tpu_custom_call.1} parent=5 // pred_check
      %p6565 = pneg %p6564
    $region38: #{tpu_custom_call.1} parent=5 // pred_check_branch
      %6567 = sbr.rel (%p6565) target = $region40
    $region39: #{tpu_custom_call.1} parent=5 // pred_region
      %s6568 = ssub.s32 %s9, 2
      // Predicated region
      $region41: #{tpu_custom_call.1} parent=39 // pred_check
        %p6569 = pneg %p116
      $region42: #{tpu_custom_call.1} parent=39 // pred_check_branch
        %6571 = sbr.rel (%p6569) target = $region44
      $region43: #{tpu_custom_call.1} parent=39 // pred_region
        %s6572 = smul.u32 144, %s15
        %p6573 = scmp.lt.s32.totalorder %s6572, 287
        %s6574 = scalar_select %p6573, %s6572, 287
        %s6575 = smul.addr %s6574, 8
        %s6576 = scalar_lea.vmem %s3, %s6575
      $region44: #{tpu_custom_call.1} parent=39 // pred_fallthru
        _
    $region40: #{tpu_custom_call.1} parent=5 // pred_fallthru
      _
  $region6: #{tpu_custom_call.1} parent=0 // loop_footer
    %s13 = sadd.s32 1, %s9
  $region7: #{tpu_custom_call.1} parent=0 // loop_footer_branch
    %8 = sbr.rel target = $region3
  $region8: #{tpu_custom_call.1} parent=0 // loop_exit
    _

</llo_original>
